<compile_context>
chip_gen: v7x
topology: tpu7x:2x2x1
jax: 0.10.0
libtpu: 0.0.40
codegen_flags: <defaults>
</compile_context>

<pallas_src>
import functools

import jax
import jax.numpy as jnp
from jax import lax
from jax.experimental import pallas as pl
from jax.experimental.pallas import tpu as pltpu

ALPHA = 0.2            # LeakyReLU negative slope
BN_EPS = 1e-5          # nn.BatchNorm2d default eps
KSIZE = 4              # all convs use kernel_size=4, padding=1
LANE = 128
VMEM_LIMIT = 48 * 1024 * 1024   # <= physical VMEM on v5e/v6e/v7x (64 MiB/TC on v7x)


def _round_up(x, m):
    return (x + m - 1) // m * m


# ----------------------------- Pallas kernels ------------------------------ #

def _conv_bias_kernel(p_ref, w_ref, b_ref, o_ref, *, apply_lrelu):
    """o = patches @ w + b [optionally LeakyReLU]; full-K dot, weight VMEM-resident."""
    y = jnp.dot(p_ref[...], w_ref[...], preferred_element_type=jnp.float32)
    y = y + b_ref[...]
    if apply_lrelu:
        y = jnp.where(y >= 0, y, ALPHA * y)
    o_ref[...] = y.astype(o_ref.dtype)


def _conv_stats_kernel(p_ref, w_ref, o_ref, s_ref):
    """o = patches @ w (bias-free, BN follows); also emit per-tile per-channel
    [sum, sum_sq] computed from the f32 accumulator (fused BN statistics pass)."""
    y = jnp.dot(p_ref[...], w_ref[...], preferred_element_type=jnp.float32)
    o_ref[...] = y.astype(o_ref.dtype)
    s = jnp.sum(y, axis=0, keepdims=True)        # (1, Cp)
    sq = jnp.sum(y * y, axis=0, keepdims=True)   # (1, Cp)
    s_ref[...] = jnp.concatenate([s, sq], axis=0)[None]   # (1, 2, Cp)


def _bn_apply_kernel(x_ref, sc_ref, sh_ref, o_ref):
    """Elementwise y = lrelu(x * scale + shift), tiled over M with full-channel blocks."""
    y = x_ref[...].astype(jnp.float32) * sc_ref[...] + sh_ref[...]
    y = jnp.where(y >= 0, y, ALPHA * y)
    o_ref[...] = y.astype(o_ref.dtype)


# ------------------------------ kernel wrappers ----------------------------- #

def im2col(x_nhwc, k, stride, pad):
    """x:(N,H,W,C) -> patches:(N*Ho*Wo, k*k*C), feature order (kh, kw, cin)."""
    N, H, W, C = x_nhwc.shape
    xp = jnp.pad(x_nhwc, ((0, 0), (pad, pad), (pad, pad), (0, 0)))
    Ho = (H + 2 * pad - k) // stride + 1
    Wo = (W + 2 * pad - k) // stride + 1
    cols = []
    for di in range(k):
        for dj in range(k):
            cols.append(
                xp[:, di:di + stride * Ho:stride, dj:dj + stride * Wo:stride, :])
    patches = jnp.concatenate(cols, axis=-1)                # (N, Ho, Wo, k*k*C)
    return patches.reshape(N * Ho * Wo, k * k * C), N, Ho, Wo


def conv_matmul(x_nhwc, w_hwio, bias, *, stride, lrelu, with_stats, out_dtype):
    """Conv as a single-pass tiled Pallas matmul.

    grid = (Mp // tm,) — one M tile per step, full K contracted in one jnp.dot,
    weight block is the whole (K, Cp) matrix (VMEM-resident, fetched once).
    If `with_stats`, also returns per-tile per-channel [sum, sum_sq] (f32).
    """
    # TODO(synk): replace im2col with in-kernel tap folding (see header).
    patches, N, Ho, Wo = im2col(x_nhwc.astype(jnp.bfloat16), KSIZE, stride, 1)
    M, K = patches.shape
    Cout = w_hwio.shape[-1]
    Cp = _round_up(Cout, LANE)                      # lane-dense output columns

    tm = min(512, _round_up(M, 16))                 # multiple of 16 (bf16 sublanes)
    Mp = _round_up(M, tm)
    nm = Mp // tm

    if Mp != M:                                     # padded rows are exactly zero
        patches = jnp.pad(patches, ((0, Mp - M), (0, 0)))

    w2d = w_hwio.reshape(-1, Cout)
    w = jnp.pad(w2d, ((0, 0), (0, Cp - Cout))).astype(jnp.bfloat16)

    cparams = pltpu.CompilerParams(
        dimension_semantics=("parallel",), vmem_limit_bytes=VMEM_LIMIT)
    out_bytes = jnp.dtype(out_dtype).itemsize
    cost = pl.CostEstimate(
        flops=2 * Mp * K * Cp, transcendentals=0,
        bytes_accessed=2 * Mp * K + 2 * K * Cp + out_bytes * Mp * Cp)

    p_spec = pl.BlockSpec((tm, K), lambda i: (i, 0))
    w_spec = pl.BlockSpec((K, Cp), lambda i: (0, 0))    # constant -> fetched once
    y_spec = pl.BlockSpec((tm, Cp), lambda i: (i, 0))

    meta = dict(M=M, Cout=Cout, N=N, Ho=Ho, Wo=Wo, tm=tm, Cp=Cp, nm=nm)

    if with_stats:
        y, stats = pl.pallas_call(
            _conv_stats_kernel,
            out_shape=(jax.ShapeDtypeStruct((Mp, Cp), out_dtype),
                       jax.ShapeDtypeStruct((nm, 2, Cp), jnp.float32)),
            grid=(nm,),
            in_specs=[p_spec, w_spec],
            out_specs=(y_spec, pl.BlockSpec((1, 2, Cp), lambda i: (i, 0, 0))),
            compiler_params=cparams,
            cost_estimate=cost,
        )(patches, w)
        return y, stats, meta

    b = jnp.pad(bias, (0, Cp - Cout)).astype(jnp.float32).reshape(1, Cp)
    y = pl.pallas_call(
        functools.partial(_conv_bias_kernel, apply_lrelu=lrelu),
        out_shape=jax.ShapeDtypeStruct((Mp, Cp), out_dtype),
        grid=(nm,),
        in_specs=[p_spec, w_spec, pl.BlockSpec((1, Cp), lambda i: (0, 0))],
        out_specs=y_spec,
        compiler_params=cparams,
        cost_estimate=cost,
    )(patches, w, b)
    return y, None, meta


def bn_lrelu(y, stats, gamma, beta, meta):
    """Training-mode BatchNorm (global batch stats) + LeakyReLU.

    Statistics come from the fused f32 per-tile sums emitted by the conv kernel
    (no extra HBM pass over y).  Padded rows of y are exactly zero (the BN-path
    conv is bias-free), so dividing by the true M keeps statistics exact; padded
    channels are neutralized by zero gamma/beta.
    """
    Mp, Cp = y.shape
    M, Cout, tm, nm = meta["M"], meta["Cout"], meta["tm"], meta["nm"]

    # Tiny O(nm*C) glue: reduce per-tile partials, fold BN + affine into scale/shift.
    tot = jnp.sum(stats, axis=0)                       # (2, Cp), f32
    inv_m = 1.0 / M
    mean = tot[0] * inv_m
    var = jnp.maximum(tot[1] * inv_m - mean * mean, 0.0)
    gamma_p = jnp.pad(gamma, (0, Cp - Cout))
    beta_p = jnp.pad(beta, (0, Cp - Cout))
    rstd = lax.rsqrt(var + BN_EPS)
    scale = (gamma_p * rstd).reshape(1, Cp)
    shift = (beta_p - mean * gamma_p * rstd).reshape(1, Cp)

    out = pl.pallas_call(
        _bn_apply_kernel,
        out_shape=jax.ShapeDtypeStruct((Mp, Cp), jnp.bfloat16),
        grid=(nm,),
        in_specs=[pl.BlockSpec((tm, Cp), lambda i: (i, 0)),
                  pl.BlockSpec((1, Cp), lambda i: (0, 0)),
                  pl.BlockSpec((1, Cp), lambda i: (0, 0))],
        out_specs=pl.BlockSpec((tm, Cp), lambda i: (i, 0)),
        compiler_params=pltpu.CompilerParams(
            dimension_semantics=("parallel",), vmem_limit_bytes=VMEM_LIMIT),
        cost_estimate=pl.CostEstimate(
            flops=3 * Mp * Cp, transcendentals=0,
            bytes_accessed=Mp * Cp * 4 + 2 * Cp * 4),
    )(y, scale, shift)
    return out


def _unpad_reshape(y2d, meta):
    M, Cout, N, Ho, Wo = (meta[k] for k in ("M", "Cout", "N", "Ho", "Wo"))
    return y2d[:M, :Cout].reshape(N, Ho, Wo, Cout)


# --------------------------- model definition / glue ------------------------ #

def build_discriminator_params(key, num_channels_input=3, num_filters_last_conv=64,
                               num_conv_layers_disc=3):
    """Mirrors NLayerDiscriminator.__init__ layer structure (synthetic weights)."""
    nf = num_filters_last_conv
    keys = jax.random.split(key, 4 * (num_conv_layers_disc + 3))
    ki = iter(range(len(keys)))

    def conv_w(k_, cin, cout):
        # stored HWIO: (kh, kw, cin, cout); matmul uses reshape(k*k*cin, cout)
        return jax.random.normal(keys[k_], (KSIZE, KSIZE, cin, cout), jnp.float32) * 0.02

    params = []
    # Conv(cin, nf, k4 s2 p1) + LeakyReLU
    params.append(dict(kind="conv_lrelu",
                       w=conv_w(next(ki), num_channels_input, nf),
                       b=jax.random.normal(keys[next(ki)], (nf,), jnp.float32) * 0.02,
                       stride=2))
    mult = 1
    for n in range(1, num_conv_layers_disc):
        mult_prev = mult
        mult = min(2 ** n, 8)
        params.append(dict(kind="conv_bn_lrelu",
                           w=conv_w(next(ki), nf * mult_prev, nf * mult),
                           gamma=jnp.ones((nf * mult,), jnp.float32),
                           beta=jnp.zeros((nf * mult,), jnp.float32),
                           stride=2))
    mult_prev = mult
    params.append(dict(kind="conv_bn_lrelu",
                       w=conv_w(next(ki), nf * mult_prev, nf * mult),
                       gamma=jnp.ones((nf * mult,), jnp.float32),
                       beta=jnp.zeros((nf * mult,), jnp.float32),
                       stride=1))
    params.append(dict(kind="conv_bias",
                       w=conv_w(next(ki), nf * mult, 1),
                       b=jax.random.normal(keys[next(ki)], (1,), jnp.float32) * 0.02,
                       stride=1))
    return params


def discriminator_forward(x_nchw, params):
    # NCHW at the boundary (PyTorch convention); NHWC + bf16 internally.
    x = jnp.transpose(x_nchw, (0, 2, 3, 1)).astype(jnp.bfloat16)
    for layer in params:
        if layer["kind"] == "conv_lrelu":
            y, _, meta = conv_matmul(x, layer["w"], layer["b"],
                                     stride=layer["stride"], lrelu=True,
                                     with_stats=False, out_dtype=jnp.bfloat16)
        elif layer["kind"] == "conv_bias":
            # Final Cout=1 conv: padded to 128 lanes for a lane-dense store; the
            # padded columns are sliced off immediately (never re-read downstream).
            y, _, meta = conv_matmul(x, layer["w"], layer["b"],
                                     stride=layer["stride"], lrelu=False,
                                     with_stats=False, out_dtype=jnp.float32)
        else:  # conv_bn_lrelu: bias-free conv with fused f32 BN statistics
            y, stats, meta = conv_matmul(x, layer["w"], None,
                                         stride=layer["stride"], lrelu=False,
                                         with_stats=True, out_dtype=jnp.bfloat16)
            y = bn_lrelu(y, stats, layer["gamma"], layer["beta"], meta)
        x = _unpad_reshape(y, meta)
    return jnp.transpose(x, (0, 3, 1, 2)).astype(jnp.float32)


# ----------------------- pure-JAX reference (sanity) ------------------------ #
# Mirrors the kernel's precision policy (bf16 operands / activations, f32 matmul
# accumulation, BN statistics from the f32 conv output, normalization applied to the
# bf16-rounded activations), so the check validates kernel correctness, not dtype
# policy.

def reference_forward(x_nchw, params):
    x = jnp.transpose(x_nchw, (0, 2, 3, 1)).astype(jnp.bfloat16)
    for layer in params:
        s = layer["stride"]
        y = lax.conv_general_dilated(
            x.astype(jnp.bfloat16), layer["w"].astype(jnp.bfloat16),
            (s, s), ((1, 1), (1, 1)),
            dimension_numbers=("NHWC", "HWIO", "NHWC"),
            preferred_element_type=jnp.float32)
        if layer["kind"] == "conv_lrelu":
            y = y + layer["b"]
            y = jnp.where(y >= 0, y, ALPHA * y)
            x = y.astype(jnp.bfloat16)
        elif layer["kind"] == "conv_bias":
            x = y + layer["b"]          # final layer, stays f32
        else:
            # BN stats from the f32 conv output (mirrors the fused f32 accumulator
            # statistics); normalization applied to bf16-rounded activations
            # (mirrors the bf16 HBM round-trip between the two kernel passes).
            mean = jnp.mean(y, axis=(0, 1, 2))
            var = jnp.maximum(jnp.mean(y * y, axis=(0, 1, 2)) - mean * mean, 0.0)
            yq = y.astype(jnp.bfloat16).astype(jnp.float32)
            z = (yq - mean) * lax.rsqrt(var + BN_EPS) * layer["gamma"] + layer["beta"]
            z = jnp.where(z >= 0, z, ALPHA * z)
            x = z.astype(jnp.bfloat16)
    return jnp.transpose(x, (0, 3, 1, 2)).astype(jnp.float32)


if __name__ == "__main__":
    key = jax.random.PRNGKey(0)
    kx, kp = jax.random.split(key)

    # Small shapes: batch=2, channels=3, spatial=32 (smallest spatial keeping the
    # default 5-conv stack valid: 32->16->8->4->3->2).
    N, C, H, W = 2, 3, 32, 32
    x = jax.random.normal(kx, (N, C, H, W), jnp.float32)

    params = build_discriminator_params(
        kp, num_channels_input=C, num_filters_last_conv=8, num_conv_layers_disc=3)

    fwd = jax.jit(lambda xx: discriminator_forward(xx, params))
    out = jax.block_until_ready(fwd(x))

    assert out.shape == (N, 1, 2, 2), out.shape
    ref = reference_forward(x, params)
    assert bool(jnp.allclose(out, ref, atol=1e-2, rtol=1e-2)), \
        "Pallas output mismatch vs reference"

    print("KERNEL_OK")
</pallas_src>

<mosaic_0001>
module attributes {stable_mosaic.version = 11 : i64} {
  func.func @_conv_bias_kernel(%arg0: i32, %arg1: memref<512x48xbf16, #tpu.memory_space<vmem>>, %arg2: memref<48x128xbf16, #tpu.memory_space<vmem>>, %arg3: memref<1x128xf32, #tpu.memory_space<vmem>>, %arg4: memref<512x128xbf16, #tpu.memory_space<vmem>>) attributes {dimension_semantics = [#tpu.dimension_semantics<parallel>], iteration_bounds = array<i64: 1>, scalar_prefetch = 0 : i64, scratch_operands = 0 : i64, tpu.core_type = #tpu.core_type<tc>, window_params = [{transform_indices = @transform_0, window_bounds = array<i64: 512, 48>}, {pipeline_mode = #tpu.pipeline_mode<synchronous>, transform_indices = @transform_1, window_bounds = array<i64: 48, 128>}, {pipeline_mode = #tpu.pipeline_mode<synchronous>, transform_indices = @transform_2, window_bounds = array<i64: 1, 128>}, {transform_indices = @transform_3, window_bounds = array<i64: 512, 128>}]} {
    %c0 = arith.constant 0 : index
    %c0_0 = arith.constant 0 : index
    %0 = vector.load %arg1[%c0, %c0_0] : memref<512x48xbf16, #tpu.memory_space<vmem>>, vector<512x48xbf16>
    %c0_1 = arith.constant 0 : index
    %c0_2 = arith.constant 0 : index
    %1 = vector.load %arg2[%c0_1, %c0_2] : memref<48x128xbf16, #tpu.memory_space<vmem>>, vector<48x128xbf16>
    %cst = arith.constant dense<0.000000e+00> : vector<512x128xf32>
    %2 = tpu.matmul %0, %1, %cst {dimension_numbers = #tpu.dot_dimension_numbers<[1], [0], [0], [1], [0, 0, 1, 1], [], []>} : vector<512x48xbf16>, vector<48x128xbf16>, vector<512x128xf32> -> vector<512x128xf32>
    %c0_3 = arith.constant 0 : index
    %c0_4 = arith.constant 0 : index
    %3 = vector.load %arg3[%c0_3, %c0_4] : memref<1x128xf32, #tpu.memory_space<vmem>>, vector<1x128xf32>
    %4 = vector.broadcast %3 : vector<1x128xf32> to vector<512x128xf32>
    %5 = arith.addf %2, %4 : vector<512x128xf32>
    %cst_5 = arith.constant 0.000000e+00 : f32
    %6 = vector.broadcast %cst_5 : f32 to vector<512x128xf32>
    %7 = arith.cmpf oge, %5, %6 : vector<512x128xf32>
    %cst_6 = arith.constant 2.000000e-01 : f32
    %8 = vector.broadcast %cst_6 : f32 to vector<512x128xf32>
    %9 = arith.mulf %8, %5 : vector<512x128xf32>
    %10 = arith.select %7, %5, %9 : vector<512x128xi1>, vector<512x128xf32>
    %11 = arith.truncf %10 : vector<512x128xf32> to vector<512x128xbf16>
    %c0_7 = arith.constant 0 : index
    %c0_8 = arith.constant 0 : index
    %12 = vector.load %arg4[%c0_7, %c0_8] : memref<512x128xbf16, #tpu.memory_space<vmem>>, vector<512x128xbf16>
    tpu.vector_store %arg4[%c0_7, %c0_8], %11 {strides = array<i32>} : memref<512x128xbf16, #tpu.memory_space<vmem>>, vector<512x128xbf16>,
    return
  }
  func.func @transform_0(%arg0: i32) -> (i32, i32) {
    %c0_i32 = arith.constant 0 : i32
    %c0_i32_0 = arith.constant 0 : i32
    return %arg0, %c0_i32 : i32, i32
  }
  func.func @transform_1(%arg0: i32) -> (i32, i32) {
    %c0_i32 = arith.constant 0 : i32
    %c0_i32_0 = arith.constant 0 : i32
    %c0_i32_1 = arith.constant 0 : i32
    return %c0_i32, %c0_i32_0 : i32, i32
  }
  func.func @transform_2(%arg0: i32) -> (i32, i32) {
    %c0_i32 = arith.constant 0 : i32
    %c0_i32_0 = arith.constant 0 : i32
    %c0_i32_1 = arith.constant 0 : i32
    return %c0_i32, %c0_i32_0 : i32, i32
  }
  func.func @transform_3(%arg0: i32) -> (i32, i32) {
    %c0_i32 = arith.constant 0 : i32
    %c0_i32_0 = arith.constant 0 : i32
    return %arg0, %c0_i32 : i32, i32
  }
}

module attributes {stable_mosaic.version = 11 : i64} {
  func.func @_conv_stats_kernel(%arg0: i32, %arg1: memref<128x128xbf16, #tpu.memory_space<vmem>>, %arg2: memref<128x128xbf16, #tpu.memory_space<vmem>>, %arg3: memref<128x128xbf16, #tpu.memory_space<vmem>>, %arg4: memref<1x2x128xf32, #tpu.memory_space<vmem>>) attributes {dimension_semantics = [#tpu.dimension_semantics<parallel>], iteration_bounds = array<i64: 1>, scalar_prefetch = 0 : i64, scratch_operands = 0 : i64, tpu.core_type = #tpu.core_type<tc>, window_params = [{transform_indices = @transform_0, window_bounds = array<i64: 128, 128>}, {pipeline_mode = #tpu.pipeline_mode<synchronous>, transform_indices = @transform_1, window_bounds = array<i64: 128, 128>}, {transform_indices = @transform_2, window_bounds = array<i64: 128, 128>}, {transform_indices = @transform_3, window_bounds = array<i64: 1, 2, 128>}]} {
    %c0 = arith.constant 0 : index
    %c0_0 = arith.constant 0 : index
    %0 = vector.load %arg1[%c0, %c0_0] : memref<128x128xbf16, #tpu.memory_space<vmem>>, vector<128x128xbf16>
    %c0_1 = arith.constant 0 : index
    %c0_2 = arith.constant 0 : index
    %1 = vector.load %arg2[%c0_1, %c0_2] : memref<128x128xbf16, #tpu.memory_space<vmem>>, vector<128x128xbf16>
    %cst = arith.constant dense<0.000000e+00> : vector<128x128xf32>
    %2 = tpu.matmul %0, %1, %cst {dimension_numbers = #tpu.dot_dimension_numbers<[1], [0], [0], [1], [0, 0, 1, 1], [], []>} : vector<128x128xbf16>, vector<128x128xbf16>, vector<128x128xf32> -> vector<128x128xf32>
    %3 = arith.truncf %2 : vector<128x128xf32> to vector<128x128xbf16>
    %c0_3 = arith.constant 0 : index
    %c0_4 = arith.constant 0 : index
    %4 = vector.load %arg3[%c0_3, %c0_4] : memref<128x128xbf16, #tpu.memory_space<vmem>>, vector<128x128xbf16>
    tpu.vector_store %arg3[%c0_3, %c0_4], %3 {strides = array<i32>} : memref<128x128xbf16, #tpu.memory_space<vmem>>, vector<128x128xbf16>,
    %cst_5 = arith.constant dense<0.000000e+00> : vector<128xf32>
    %5 = vector.multi_reduction <add>, %2, %cst_5 [0] : vector<128x128xf32> to vector<128xf32>
    %6 = vector.shape_cast %5 : vector<128xf32> to vector<1x128xf32>
    %7 = arith.mulf %2, %2 : vector<128x128xf32>
    %cst_6 = arith.constant dense<0.000000e+00> : vector<128xf32>
    %8 = vector.multi_reduction <add>, %7, %cst_6 [0] : vector<128x128xf32> to vector<128xf32>
    %9 = vector.shape_cast %8 : vector<128xf32> to vector<1x128xf32>
    %10 = tpu.concatenate %6, %9 in 0 : vector<1x128xf32>, vector<1x128xf32> -> vector<2x128xf32>
    %11 = vector.shape_cast %10 : vector<2x128xf32> to vector<1x2x128xf32>
    %c0_7 = arith.constant 0 : index
    %c0_8 = arith.constant 0 : index
    %c0_9 = arith.constant 0 : index
    %12 = vector.load %arg4[%c0_7, %c0_8, %c0_9] : memref<1x2x128xf32, #tpu.memory_space<vmem>>, vector<1x2x128xf32>
    tpu.vector_store %arg4[%c0_7, %c0_8, %c0_9], %11 {strides = array<i32>} : memref<1x2x128xf32, #tpu.memory_space<vmem>>, vector<1x2x128xf32>,
    return
  }
  func.func @transform_0(%arg0: i32) -> (i32, i32) {
    %c0_i32 = arith.constant 0 : i32
    %c0_i32_0 = arith.constant 0 : i32
    return %arg0, %c0_i32 : i32, i32
  }
  func.func @transform_1(%arg0: i32) -> (i32, i32) {
    %c0_i32 = arith.constant 0 : i32
    %c0_i32_0 = arith.constant 0 : i32
    %c0_i32_1 = arith.constant 0 : i32
    return %c0_i32, %c0_i32_0 : i32, i32
  }
  func.func @transform_2(%arg0: i32) -> (i32, i32) {
    %c0_i32 = arith.constant 0 : i32
    %c0_i32_0 = arith.constant 0 : i32
    return %arg0, %c0_i32 : i32, i32
  }
  func.func @transform_3(%arg0: i32) -> (i32, i32, i32) {
    %c0_i32 = arith.constant 0 : i32
    %c0_i32_0 = arith.constant 0 : i32
    %c0_i32_1 = arith.constant 0 : i32
    return %arg0, %c0_i32, %c0_i32_0 : i32, i32, i32
  }
}

module attributes {stable_mosaic.version = 11 : i64} {
  func.func @_bn_apply_kernel(%arg0: i32, %arg1: memref<128x128xbf16, #tpu.memory_space<vmem>>, %arg2: memref<1x128xf32, #tpu.memory_space<vmem>>, %arg3: memref<1x128xf32, #tpu.memory_space<vmem>>, %arg4: memref<128x128xbf16, #tpu.memory_space<vmem>>) attributes {dimension_semantics = [#tpu.dimension_semantics<parallel>], iteration_bounds = array<i64: 1>, scalar_prefetch = 0 : i64, scratch_operands = 0 : i64, tpu.core_type = #tpu.core_type<tc>, window_params = [{transform_indices = @transform_0, window_bounds = array<i64: 128, 128>}, {pipeline_mode = #tpu.pipeline_mode<synchronous>, transform_indices = @transform_1, window_bounds = array<i64: 1, 128>}, {pipeline_mode = #tpu.pipeline_mode<synchronous>, transform_indices = @transform_2, window_bounds = array<i64: 1, 128>}, {transform_indices = @transform_3, window_bounds = array<i64: 128, 128>}]} {
    %c0 = arith.constant 0 : index
    %c0_0 = arith.constant 0 : index
    %0 = vector.load %arg1[%c0, %c0_0] : memref<128x128xbf16, #tpu.memory_space<vmem>>, vector<128x128xbf16>
    %1 = arith.extf %0 : vector<128x128xbf16> to vector<128x128xf32>
    %c0_1 = arith.constant 0 : index
    %c0_2 = arith.constant 0 : index
    %2 = vector.load %arg2[%c0_1, %c0_2] : memref<1x128xf32, #tpu.memory_space<vmem>>, vector<1x128xf32>
    %3 = vector.broadcast %2 : vector<1x128xf32> to vector<128x128xf32>
    %4 = arith.mulf %1, %3 : vector<128x128xf32>
    %c0_3 = arith.constant 0 : index
    %c0_4 = arith.constant 0 : index
    %5 = vector.load %arg3[%c0_3, %c0_4] : memref<1x128xf32, #tpu.memory_space<vmem>>, vector<1x128xf32>
    %6 = vector.broadcast %5 : vector<1x128xf32> to vector<128x128xf32>
    %7 = arith.addf %4, %6 : vector<128x128xf32>
    %cst = arith.constant 0.000000e+00 : f32
    %8 = vector.broadcast %cst : f32 to vector<128x128xf32>
    %9 = arith.cmpf oge, %7, %8 : vector<128x128xf32>
    %cst_5 = arith.constant 2.000000e-01 : f32
    %10 = vector.broadcast %cst_5 : f32 to vector<128x128xf32>
    %11 = arith.mulf %10, %7 : vector<128x128xf32>
    %12 = arith.select %9, %7, %11 : vector<128x128xi1>, vector<128x128xf32>
    %13 = arith.truncf %12 : vector<128x128xf32> to vector<128x128xbf16>
    %c0_6 = arith.constant 0 : index
    %c0_7 = arith.constant 0 : index
    %14 = vector.load %arg4[%c0_6, %c0_7] : memref<128x128xbf16, #tpu.memory_space<vmem>>, vector<128x128xbf16>
    tpu.vector_store %arg4[%c0_6, %c0_7], %13 {strides = array<i32>} : memref<128x128xbf16, #tpu.memory_space<vmem>>, vector<128x128xbf16>,
    return
  }
  func.func @transform_0(%arg0: i32) -> (i32, i32) {
    %c0_i32 = arith.constant 0 : i32
    %c0_i32_0 = arith.constant 0 : i32
    return %arg0, %c0_i32 : i32, i32
  }
  func.func @transform_1(%arg0: i32) -> (i32, i32) {
    %c0_i32 = arith.constant 0 : i32
    %c0_i32_0 = arith.constant 0 : i32
    %c0_i32_1 = arith.constant 0 : i32
    return %c0_i32, %c0_i32_0 : i32, i32
  }
  func.func @transform_2(%arg0: i32) -> (i32, i32) {
    %c0_i32 = arith.constant 0 : i32
    %c0_i32_0 = arith.constant 0 : i32
    %c0_i32_1 = arith.constant 0 : i32
    return %c0_i32, %c0_i32_0 : i32, i32
  }
  func.func @transform_3(%arg0: i32) -> (i32, i32) {
    %c0_i32 = arith.constant 0 : i32
    %c0_i32_0 = arith.constant 0 : i32
    return %arg0, %c0_i32 : i32, i32
  }
}

module attributes {stable_mosaic.version = 11 : i64} {
  func.func @_bn_apply_kernel(%arg0: i32, %arg1: memref<32x128xbf16, #tpu.memory_space<vmem>>, %arg2: memref<1x128xf32, #tpu.memory_space<vmem>>, %arg3: memref<1x128xf32, #tpu.memory_space<vmem>>, %arg4: memref<32x128xbf16, #tpu.memory_space<vmem>>) attributes {dimension_semantics = [#tpu.dimension_semantics<parallel>], iteration_bounds = array<i64: 1>, scalar_prefetch = 0 : i64, scratch_operands = 0 : i64, tpu.core_type = #tpu.core_type<tc>, window_params = [{transform_indices = @transform_0, window_bounds = array<i64: 32, 128>}, {pipeline_mode = #tpu.pipeline_mode<synchronous>, transform_indices = @transform_1, window_bounds = array<i64: 1, 128>}, {pipeline_mode = #tpu.pipeline_mode<synchronous>, transform_indices = @transform_2, window_bounds = array<i64: 1, 128>}, {transform_indices = @transform_3, window_bounds = array<i64: 32, 128>}]} {
    %c0 = arith.constant 0 : index
    %c0_0 = arith.constant 0 : index
    %0 = vector.load %arg1[%c0, %c0_0] : memref<32x128xbf16, #tpu.memory_space<vmem>>, vector<32x128xbf16>
    %1 = arith.extf %0 : vector<32x128xbf16> to vector<32x128xf32>
    %c0_1 = arith.constant 0 : index
    %c0_2 = arith.constant 0 : index
    %2 = vector.load %arg2[%c0_1, %c0_2] : memref<1x128xf32, #tpu.memory_space<vmem>>, vector<1x128xf32>
    %3 = vector.broadcast %2 : vector<1x128xf32> to vector<32x128xf32>
    %4 = arith.mulf %1, %3 : vector<32x128xf32>
    %c0_3 = arith.constant 0 : index
    %c0_4 = arith.constant 0 : index
    %5 = vector.load %arg3[%c0_3, %c0_4] : memref<1x128xf32, #tpu.memory_space<vmem>>, vector<1x128xf32>
    %6 = vector.broadcast %5 : vector<1x128xf32> to vector<32x128xf32>
    %7 = arith.addf %4, %6 : vector<32x128xf32>
    %cst = arith.constant 0.000000e+00 : f32
    %8 = vector.broadcast %cst : f32 to vector<32x128xf32>
    %9 = arith.cmpf oge, %7, %8 : vector<32x128xf32>
    %cst_5 = arith.constant 2.000000e-01 : f32
    %10 = vector.broadcast %cst_5 : f32 to vector<32x128xf32>
    %11 = arith.mulf %10, %7 : vector<32x128xf32>
    %12 = arith.select %9, %7, %11 : vector<32x128xi1>, vector<32x128xf32>
    %13 = arith.truncf %12 : vector<32x128xf32> to vector<32x128xbf16>
    %c0_6 = arith.constant 0 : index
    %c0_7 = arith.constant 0 : index
    %14 = vector.load %arg4[%c0_6, %c0_7] : memref<32x128xbf16, #tpu.memory_space<vmem>>, vector<32x128xbf16>
    tpu.vector_store %arg4[%c0_6, %c0_7], %13 {strides = array<i32>} : memref<32x128xbf16, #tpu.memory_space<vmem>>, vector<32x128xbf16>,
    return
  }
  func.func @transform_0(%arg0: i32) -> (i32, i32) {
    %c0_i32 = arith.constant 0 : i32
    %c0_i32_0 = arith.constant 0 : i32
    return %arg0, %c0_i32 : i32, i32
  }
  func.func @transform_1(%arg0: i32) -> (i32, i32) {
    %c0_i32 = arith.constant 0 : i32
    %c0_i32_0 = arith.constant 0 : i32
    %c0_i32_1 = arith.constant 0 : i32
    return %c0_i32, %c0_i32_0 : i32, i32
  }
  func.func @transform_2(%arg0: i32) -> (i32, i32) {
    %c0_i32 = arith.constant 0 : i32
    %c0_i32_0 = arith.constant 0 : i32
    %c0_i32_1 = arith.constant 0 : i32
    return %c0_i32, %c0_i32_0 : i32, i32
  }
  func.func @transform_3(%arg0: i32) -> (i32, i32) {
    %c0_i32 = arith.constant 0 : i32
    %c0_i32_0 = arith.constant 0 : i32
    return %arg0, %c0_i32 : i32, i32
  }
}

module attributes {stable_mosaic.version = 11 : i64} {
  func.func @_conv_stats_kernel(%arg0: i32, %arg1: memref<32x256xbf16, #tpu.memory_space<vmem>>, %arg2: memref<256x128xbf16, #tpu.memory_space<vmem>>, %arg3: memref<32x128xbf16, #tpu.memory_space<vmem>>, %arg4: memref<1x2x128xf32, #tpu.memory_space<vmem>>) attributes {dimension_semantics = [#tpu.dimension_semantics<parallel>], iteration_bounds = array<i64: 1>, scalar_prefetch = 0 : i64, scratch_operands = 0 : i64, tpu.core_type = #tpu.core_type<tc>, window_params = [{transform_indices = @transform_0, window_bounds = array<i64: 32, 256>}, {pipeline_mode = #tpu.pipeline_mode<synchronous>, transform_indices = @transform_1, window_bounds = array<i64: 256, 128>}, {transform_indices = @transform_2, window_bounds = array<i64: 32, 128>}, {transform_indices = @transform_3, window_bounds = array<i64: 1, 2, 128>}]} {
    %c0 = arith.constant 0 : index
    %c0_0 = arith.constant 0 : index
    %0 = vector.load %arg1[%c0, %c0_0] : memref<32x256xbf16, #tpu.memory_space<vmem>>, vector<32x256xbf16>
    %c0_1 = arith.constant 0 : index
    %c0_2 = arith.constant 0 : index
    %1 = vector.load %arg2[%c0_1, %c0_2] : memref<256x128xbf16, #tpu.memory_space<vmem>>, vector<256x128xbf16>
    %cst = arith.constant dense<0.000000e+00> : vector<32x128xf32>
    %2 = tpu.matmul %0, %1, %cst {dimension_numbers = #tpu.dot_dimension_numbers<[1], [0], [0], [1], [0, 0, 1, 1], [], []>} : vector<32x256xbf16>, vector<256x128xbf16>, vector<32x128xf32> -> vector<32x128xf32>
    %3 = arith.truncf %2 : vector<32x128xf32> to vector<32x128xbf16>
    %c0_3 = arith.constant 0 : index
    %c0_4 = arith.constant 0 : index
    %4 = vector.load %arg3[%c0_3, %c0_4] : memref<32x128xbf16, #tpu.memory_space<vmem>>, vector<32x128xbf16>
    tpu.vector_store %arg3[%c0_3, %c0_4], %3 {strides = array<i32>} : memref<32x128xbf16, #tpu.memory_space<vmem>>, vector<32x128xbf16>,
    %cst_5 = arith.constant dense<0.000000e+00> : vector<128xf32>
    %5 = vector.multi_reduction <add>, %2, %cst_5 [0] : vector<32x128xf32> to vector<128xf32>
    %6 = vector.shape_cast %5 : vector<128xf32> to vector<1x128xf32>
    %7 = arith.mulf %2, %2 : vector<32x128xf32>
    %cst_6 = arith.constant dense<0.000000e+00> : vector<128xf32>
    %8 = vector.multi_reduction <add>, %7, %cst_6 [0] : vector<32x128xf32> to vector<128xf32>
    %9 = vector.shape_cast %8 : vector<128xf32> to vector<1x128xf32>
    %10 = tpu.concatenate %6, %9 in 0 : vector<1x128xf32>, vector<1x128xf32> -> vector<2x128xf32>
    %11 = vector.shape_cast %10 : vector<2x128xf32> to vector<1x2x128xf32>
    %c0_7 = arith.constant 0 : index
    %c0_8 = arith.constant 0 : index
    %c0_9 = arith.constant 0 : index
    %12 = vector.load %arg4[%c0_7, %c0_8, %c0_9] : memref<1x2x128xf32, #tpu.memory_space<vmem>>, vector<1x2x128xf32>
    tpu.vector_store %arg4[%c0_7, %c0_8, %c0_9], %11 {strides = array<i32>} : memref<1x2x128xf32, #tpu.memory_space<vmem>>, vector<1x2x128xf32>,
    return
  }
  func.func @transform_0(%arg0: i32) -> (i32, i32) {
    %c0_i32 = arith.constant 0 : i32
    %c0_i32_0 = arith.constant 0 : i32
    return %arg0, %c0_i32 : i32, i32
  }
  func.func @transform_1(%arg0: i32) -> (i32, i32) {
    %c0_i32 = arith.constant 0 : i32
    %c0_i32_0 = arith.constant 0 : i32
    %c0_i32_1 = arith.constant 0 : i32
    return %c0_i32, %c0_i32_0 : i32, i32
  }
  func.func @transform_2(%arg0: i32) -> (i32, i32) {
    %c0_i32 = arith.constant 0 : i32
    %c0_i32_0 = arith.constant 0 : i32
    return %arg0, %c0_i32 : i32, i32
  }
  func.func @transform_3(%arg0: i32) -> (i32, i32, i32) {
    %c0_i32 = arith.constant 0 : i32
    %c0_i32_0 = arith.constant 0 : i32
    %c0_i32_1 = arith.constant 0 : i32
    return %arg0, %c0_i32, %c0_i32_0 : i32, i32, i32
  }
}

module attributes {stable_mosaic.version = 11 : i64} {
  func.func @_conv_stats_kernel(%arg0: i32, %arg1: memref<32x512xbf16, #tpu.memory_space<vmem>>, %arg2: memref<512x128xbf16, #tpu.memory_space<vmem>>, %arg3: memref<32x128xbf16, #tpu.memory_space<vmem>>, %arg4: memref<1x2x128xf32, #tpu.memory_space<vmem>>) attributes {dimension_semantics = [#tpu.dimension_semantics<parallel>], iteration_bounds = array<i64: 1>, scalar_prefetch = 0 : i64, scratch_operands = 0 : i64, tpu.core_type = #tpu.core_type<tc>, window_params = [{transform_indices = @transform_0, window_bounds = array<i64: 32, 512>}, {pipeline_mode = #tpu.pipeline_mode<synchronous>, transform_indices = @transform_1, window_bounds = array<i64: 512, 128>}, {transform_indices = @transform_2, window_bounds = array<i64: 32, 128>}, {transform_indices = @transform_3, window_bounds = array<i64: 1, 2, 128>}]} {
    %c0 = arith.constant 0 : index
    %c0_0 = arith.constant 0 : index
    %0 = vector.load %arg1[%c0, %c0_0] : memref<32x512xbf16, #tpu.memory_space<vmem>>, vector<32x512xbf16>
    %c0_1 = arith.constant 0 : index
    %c0_2 = arith.constant 0 : index
    %1 = vector.load %arg2[%c0_1, %c0_2] : memref<512x128xbf16, #tpu.memory_space<vmem>>, vector<512x128xbf16>
    %cst = arith.constant dense<0.000000e+00> : vector<32x128xf32>
    %2 = tpu.matmul %0, %1, %cst {dimension_numbers = #tpu.dot_dimension_numbers<[1], [0], [0], [1], [0, 0, 1, 1], [], []>} : vector<32x512xbf16>, vector<512x128xbf16>, vector<32x128xf32> -> vector<32x128xf32>
    %3 = arith.truncf %2 : vector<32x128xf32> to vector<32x128xbf16>
    %c0_3 = arith.constant 0 : index
    %c0_4 = arith.constant 0 : index
    %4 = vector.load %arg3[%c0_3, %c0_4] : memref<32x128xbf16, #tpu.memory_space<vmem>>, vector<32x128xbf16>
    tpu.vector_store %arg3[%c0_3, %c0_4], %3 {strides = array<i32>} : memref<32x128xbf16, #tpu.memory_space<vmem>>, vector<32x128xbf16>,
    %cst_5 = arith.constant dense<0.000000e+00> : vector<128xf32>
    %5 = vector.multi_reduction <add>, %2, %cst_5 [0] : vector<32x128xf32> to vector<128xf32>
    %6 = vector.shape_cast %5 : vector<128xf32> to vector<1x128xf32>
    %7 = arith.mulf %2, %2 : vector<32x128xf32>
    %cst_6 = arith.constant dense<0.000000e+00> : vector<128xf32>
    %8 = vector.multi_reduction <add>, %7, %cst_6 [0] : vector<32x128xf32> to vector<128xf32>
    %9 = vector.shape_cast %8 : vector<128xf32> to vector<1x128xf32>
    %10 = tpu.concatenate %6, %9 in 0 : vector<1x128xf32>, vector<1x128xf32> -> vector<2x128xf32>
    %11 = vector.shape_cast %10 : vector<2x128xf32> to vector<1x2x128xf32>
    %c0_7 = arith.constant 0 : index
    %c0_8 = arith.constant 0 : index
    %c0_9 = arith.constant 0 : index
    %12 = vector.load %arg4[%c0_7, %c0_8, %c0_9] : memref<1x2x128xf32, #tpu.memory_space<vmem>>, vector<1x2x128xf32>
    tpu.vector_store %arg4[%c0_7, %c0_8, %c0_9], %11 {strides = array<i32>} : memref<1x2x128xf32, #tpu.memory_space<vmem>>, vector<1x2x128xf32>,
    return
  }
  func.func @transform_0(%arg0: i32) -> (i32, i32) {
    %c0_i32 = arith.constant 0 : i32
    %c0_i32_0 = arith.constant 0 : i32
    return %arg0, %c0_i32 : i32, i32
  }
  func.func @transform_1(%arg0: i32) -> (i32, i32) {
    %c0_i32 = arith.constant 0 : i32
    %c0_i32_0 = arith.constant 0 : i32
    %c0_i32_1 = arith.constant 0 : i32
    return %c0_i32, %c0_i32_0 : i32, i32
  }
  func.func @transform_2(%arg0: i32) -> (i32, i32) {
    %c0_i32 = arith.constant 0 : i32
    %c0_i32_0 = arith.constant 0 : i32
    return %arg0, %c0_i32 : i32, i32
  }
  func.func @transform_3(%arg0: i32) -> (i32, i32, i32) {
    %c0_i32 = arith.constant 0 : i32
    %c0_i32_0 = arith.constant 0 : i32
    %c0_i32_1 = arith.constant 0 : i32
    return %arg0, %c0_i32, %c0_i32_0 : i32, i32, i32
  }
}

module attributes {stable_mosaic.version = 11 : i64} {
  func.func @_conv_bias_kernel(%arg0: i32, %arg1: memref<16x512xbf16, #tpu.memory_space<vmem>>, %arg2: memref<512x128xbf16, #tpu.memory_space<vmem>>, %arg3: memref<1x128xf32, #tpu.memory_space<vmem>>, %arg4: memref<16x128xf32, #tpu.memory_space<vmem>>) attributes {dimension_semantics = [#tpu.dimension_semantics<parallel>], iteration_bounds = array<i64: 1>, scalar_prefetch = 0 : i64, scratch_operands = 0 : i64, tpu.core_type = #tpu.core_type<tc>, window_params = [{transform_indices = @transform_0, window_bounds = array<i64: 16, 512>}, {pipeline_mode = #tpu.pipeline_mode<synchronous>, transform_indices = @transform_1, window_bounds = array<i64: 512, 128>}, {pipeline_mode = #tpu.pipeline_mode<synchronous>, transform_indices = @transform_2, window_bounds = array<i64: 1, 128>}, {transform_indices = @transform_3, window_bounds = array<i64: 16, 128>}]} {
    %c0 = arith.constant 0 : index
    %c0_0 = arith.constant 0 : index
    %0 = vector.load %arg1[%c0, %c0_0] : memref<16x512xbf16, #tpu.memory_space<vmem>>, vector<16x512xbf16>
    %c0_1 = arith.constant 0 : index
    %c0_2 = arith.constant 0 : index
    %1 = vector.load %arg2[%c0_1, %c0_2] : memref<512x128xbf16, #tpu.memory_space<vmem>>, vector<512x128xbf16>
    %cst = arith.constant dense<0.000000e+00> : vector<16x128xf32>
    %2 = tpu.matmul %0, %1, %cst {dimension_numbers = #tpu.dot_dimension_numbers<[1], [0], [0], [1], [0, 0, 1, 1], [], []>} : vector<16x512xbf16>, vector<512x128xbf16>, vector<16x128xf32> -> vector<16x128xf32>
    %c0_3 = arith.constant 0 : index
    %c0_4 = arith.constant 0 : index
    %3 = vector.load %arg3[%c0_3, %c0_4] : memref<1x128xf32, #tpu.memory_space<vmem>>, vector<1x128xf32>
    %4 = vector.broadcast %3 : vector<1x128xf32> to vector<16x128xf32>
    %5 = arith.addf %2, %4 : vector<16x128xf32>
    %c0_5 = arith.constant 0 : index
    %c0_6 = arith.constant 0 : index
    %6 = vector.load %arg4[%c0_5, %c0_6] : memref<16x128xf32, #tpu.memory_space<vmem>>, vector<16x128xf32>
    tpu.vector_store %arg4[%c0_5, %c0_6], %5 {strides = array<i32>} : memref<16x128xf32, #tpu.memory_space<vmem>>, vector<16x128xf32>,
    return
  }
  func.func @transform_0(%arg0: i32) -> (i32, i32) {
    %c0_i32 = arith.constant 0 : i32
    %c0_i32_0 = arith.constant 0 : i32
    return %arg0, %c0_i32 : i32, i32
  }
  func.func @transform_1(%arg0: i32) -> (i32, i32) {
    %c0_i32 = arith.constant 0 : i32
    %c0_i32_0 = arith.constant 0 : i32
    %c0_i32_1 = arith.constant 0 : i32
    return %c0_i32, %c0_i32_0 : i32, i32
  }
  func.func @transform_2(%arg0: i32) -> (i32, i32) {
    %c0_i32 = arith.constant 0 : i32
    %c0_i32_0 = arith.constant 0 : i32
    %c0_i32_1 = arith.constant 0 : i32
    return %c0_i32, %c0_i32_0 : i32, i32
  }
  func.func @transform_3(%arg0: i32) -> (i32, i32) {
    %c0_i32 = arith.constant 0 : i32
    %c0_i32_0 = arith.constant 0 : i32
    return %arg0, %c0_i32 : i32, i32
  }
}

</mosaic_0001>

<llo_original>
// kernel: _lambda_.9
$region0: #{_lambda_.9}
  #allocation0 [shape = 'u32[]', space=smem, size = 0x4, offset = 0x4, fixed_abs, tag = 'smem constant byte address 0x4 - core index']
  #allocation1 [shape = 'u32[144,128]{1,0:T(1,128)}', space=vmem, size = 0x12000, scoped, tag = 'internal scratch']
  %s0 = inlined_call_operand.vmem [shape: bf16[128,128], index: 0, kind: input, shape index: {}]
  %s1 = inlined_call_operand.vmem [shape: bf16[128,128], index: 1, kind: input, shape index: {}]
  %s2 = inlined_call_operand.vmem [shape: bf16[128,128], index: 2, kind: output, shape index: {0}]
  %s3 = inlined_call_operand.vmem [shape: f32[1,2,128], index: 3, kind: output, shape index: {1}]
  %4 = xla_tuple %s2, %s3
  %s5 = sld [smem:[#allocation0]]
  $region26: #{_lambda_.9} parent=0
    _
  %s7 = ssub.s32 1, %s5
  %s8 = scalar_select 0, %s7, %s5
  // Predicated region
  $region2: #{_lambda_.9} parent=0 // pred_check
    _
  $region3: #{_lambda_.9} parent=0 // pred_check_branch
    %10 = sbr.rel (0) target = $region5
  $region4: #{_lambda_.9} parent=0 // pred_region
    _
  $region5: #{_lambda_.9} parent=0 // pred_fallthru
    _
  // Predicated region
  $region6: #{_lambda_.9} parent=0 // pred_check
    _
  $region7: #{_lambda_.9} parent=0 // pred_check_branch
    %12 = sbr.rel (0) target = $region9
  $region8: #{_lambda_.9} parent=0 // pred_region
    _
  $region9: #{_lambda_.9} parent=0 // pred_fallthru
    _
  %v14 = vld [vmem:[%s0] sm:$0xf]
  %v15 = vld [vmem:[%s0 + $0x4] sm:$0xf]
  %v16 = vld [vmem:[%s0 + $0x8] sm:$0xf]
  %v17 = vld [vmem:[%s0 + $0xc] sm:$0xf]
  %v18 = vld [vmem:[%s0 + $0x10] sm:$0xf]
  %v19 = vld [vmem:[%s0 + $0x14] sm:$0xf]
  %v20 = vld [vmem:[%s0 + $0x18] sm:$0xf]
  %v21 = vld [vmem:[%s0 + $0x1c] sm:$0xf]
  %v22 = vld [vmem:[%s0 + $0x20] sm:$0xf]
  %v23 = vld [vmem:[%s0 + $0x24] sm:$0xf]
  %v24 = vld [vmem:[%s0 + $0x28] sm:$0xf]
  %v25 = vld [vmem:[%s0 + $0x2c] sm:$0xf]
  %v26 = vld [vmem:[%s0 + $0x30] sm:$0xf]
  %v27 = vld [vmem:[%s0 + $0x34] sm:$0xf]
  %v28 = vld [vmem:[%s0 + $0x38] sm:$0xf]
  %v29 = vld [vmem:[%s0 + $0x3c] sm:$0xf]
  %v30 = vld [vmem:[%s1] sm:$0xf]
  %v31 = vld [vmem:[%s1 + $0x4] sm:$0xf]
  %v32 = vld [vmem:[%s1 + $0x8] sm:$0xf]
  %v33 = vld [vmem:[%s1 + $0xc] sm:$0xf]
  %v34 = vld [vmem:[%s1 + $0x10] sm:$0xf]
  %v35 = vld [vmem:[%s1 + $0x14] sm:$0xf]
  %v36 = vld [vmem:[%s1 + $0x18] sm:$0xf]
  %v37 = vld [vmem:[%s1 + $0x1c] sm:$0xf]
  %v38 = vld [vmem:[%s1 + $0x20] sm:$0xf]
  %v39 = vld [vmem:[%s1 + $0x24] sm:$0xf]
  %v40 = vld [vmem:[%s1 + $0x28] sm:$0xf]
  %v41 = vld [vmem:[%s1 + $0x2c] sm:$0xf]
  %v42 = vld [vmem:[%s1 + $0x30] sm:$0xf]
  %v43 = vld [vmem:[%s1 + $0x34] sm:$0xf]
  %v44 = vld [vmem:[%s1 + $0x38] sm:$0xf]
  %v45 = vld [vmem:[%s1 + $0x3c] sm:$0xf]
  %v62 = vunpack.c.l.b16 %v14
  %v63 = vunpack.c.l.b16 %v15
  %v64 = vunpack.c.l.b16 %v16
  %v65 = vunpack.c.l.b16 %v17
  %v66 = vunpack.c.l.b16 %v18
  %v67 = vunpack.c.l.b16 %v19
  %v68 = vunpack.c.l.b16 %v20
  %v69 = vunpack.c.l.b16 %v21
  %v70 = vunpack.c.l.b16 %v22
  %v71 = vunpack.c.l.b16 %v23
  %v72 = vunpack.c.l.b16 %v24
  %v73 = vunpack.c.l.b16 %v25
  %v74 = vunpack.c.l.b16 %v26
  %v75 = vunpack.c.l.b16 %v27
  %v76 = vunpack.c.l.b16 %v28
  %v77 = vunpack.c.l.b16 %v29
  %v78 = vpack.c.b16 %v63, %v62
  %v79 = vpack.c.b16 %v65, %v64
  %v80 = vpack.c.b16 %v67, %v66
  %v81 = vpack.c.b16 %v69, %v68
  %v82 = vpack.c.b16 %v71, %v70
  %v83 = vpack.c.b16 %v73, %v72
  %v84 = vpack.c.b16 %v75, %v74
  %v85 = vpack.c.b16 %v77, %v76
  %v110 = vunpack.c.l.b16 %v30
  %v111 = vunpack.c.l.b16 %v31
  %v112 = vunpack.c.l.b16 %v32
  %v113 = vunpack.c.l.b16 %v33
  %v114 = vunpack.c.l.b16 %v34
  %v115 = vunpack.c.l.b16 %v35
  %v116 = vunpack.c.l.b16 %v36
  %v117 = vunpack.c.l.b16 %v37
  %v118 = vunpack.c.l.b16 %v38
  %v119 = vunpack.c.l.b16 %v39
  %v120 = vunpack.c.l.b16 %v40
  %v121 = vunpack.c.l.b16 %v41
  %v122 = vunpack.c.l.b16 %v42
  %v123 = vunpack.c.l.b16 %v43
  %v124 = vunpack.c.l.b16 %v44
  %v125 = vunpack.c.l.b16 %v45
  %v126 = vpack.c.b16 %v111, %v110
  %v127 = vpack.c.b16 %v113, %v112
  %v128 = vpack.c.b16 %v115, %v114
  %v129 = vpack.c.b16 %v117, %v116
  %v130 = vpack.c.b16 %v119, %v118
  %v131 = vpack.c.b16 %v121, %v120
  %v132 = vpack.c.b16 %v123, %v122
  %v133 = vpack.c.b16 %v125, %v124
  %142 = vmatprep.subr.bf16.mxu0 0
  %143 = vmatpush1.bf16.msra.mxu0 %v126
  %144 = vmatprep.subr.bf16.mxu0 0
  %145 = vmatpush1.bf16.msra.mxu0 %v127
  %146 = vmatprep.subr.bf16.mxu0 0
  %147 = vmatpush1.bf16.msra.mxu0 %v128
  %148 = vmatprep.subr.bf16.mxu0 0
  %149 = vmatpush1.bf16.msra.mxu0 %v129
  %150 = vmatprep.subr.bf16.mxu0 0
  %151 = vmatpush1.bf16.msra.mxu0 %v130
  %152 = vmatprep.subr.bf16.mxu0 0
  %153 = vmatpush1.bf16.msra.mxu0 %v131
  %154 = vmatprep.subr.bf16.mxu0 0
  %155 = vmatpush1.bf16.msra.mxu0 %v132
  %156 = vmatprep.subr.bf16.mxu0 0
  %157 = vmatpush1.bf16.msra.mxu0 %v133
  %158 = vmatprep.subr.bf16.mxu0 0
  %159 = vmatpush1.bf16.msra.mxu0 0
  %160 = vmatprep.subr.bf16.mxu0 0
  %161 = vmatpush1.bf16.msra.mxu0 0
  %162 = vmatprep.subr.bf16.mxu0 0
  %163 = vmatpush1.bf16.msra.mxu0 0
  %164 = vmatprep.subr.bf16.mxu0 0
  %165 = vmatpush1.bf16.msra.mxu0 0
  %166 = vmatprep.subr.bf16.mxu0 0
  %167 = vmatpush1.bf16.msra.mxu0 0
  %168 = vmatprep.subr.bf16.mxu0 0
  %169 = vmatpush1.bf16.msra.mxu0 0
  %170 = vmatprep.subr.bf16.mxu0 0
  %171 = vmatpush1.bf16.msra.mxu0 0
  %172 = vmatprep.subr.bf16.mxu0 0
  %173 = vmatpush1.bf16.msra.mxu0 0
  %174 = vmatprep.mubr.bf16.mxu0 0
  %175 = vmatmul.mubr.bf16.gmra.mrb[0].mxu0 %v78
  %v176 = vpop.f32.mrb[0].mxu0
  %v177 = vadd.f32 0.0, %v176
  %v178 = vpop.f32.mrb[0].mxu0
  %v179 = vpop.f32.mrb[0].mxu0
  %v180 = vadd.f32 0.0, %v179
  %v181 = vpop.f32.mrb[0].mxu0
  %182 = vmatprep.mubr.bf16.mxu0 0
  %183 = vmatmul.mubr.bf16.gmra.mrb[0].mxu0 %v79
  %v184 = vpop.f32.mrb[0].mxu0
  %v185 = vadd.f32 0.0, %v184
  %v186 = vpop.f32.mrb[0].mxu0
  %v187 = vpop.f32.mrb[0].mxu0
  %v188 = vadd.f32 0.0, %v187
  %v189 = vpop.f32.mrb[0].mxu0
  %190 = vmatprep.mubr.bf16.mxu0 0
  %191 = vmatmul.mubr.bf16.gmra.mrb[0].mxu0 %v80
  %v192 = vpop.f32.mrb[0].mxu0
  %v193 = vadd.f32 0.0, %v192
  %v194 = vpop.f32.mrb[0].mxu0
  %v195 = vpop.f32.mrb[0].mxu0
  %v196 = vadd.f32 0.0, %v195
  %v197 = vpop.f32.mrb[0].mxu0
  %198 = vmatprep.mubr.bf16.mxu0 0
  %199 = vmatmul.mubr.bf16.gmra.mrb[0].mxu0 %v81
  %v200 = vpop.f32.mrb[0].mxu0
  %v201 = vadd.f32 0.0, %v200
  %v202 = vpop.f32.mrb[0].mxu0
  %v203 = vpop.f32.mrb[0].mxu0
  %v204 = vadd.f32 0.0, %v203
  %v205 = vpop.f32.mrb[0].mxu0
  %206 = vmatprep.mubr.bf16.mxu0 0
  %207 = vmatmul.mubr.bf16.gmra.mrb[0].mxu0 %v82
  %v208 = vpop.f32.mrb[0].mxu0
  %v209 = vadd.f32 0.0, %v208
  %v210 = vpop.f32.mrb[0].mxu0
  %v211 = vpop.f32.mrb[0].mxu0
  %v212 = vadd.f32 0.0, %v211
  %v213 = vpop.f32.mrb[0].mxu0
  %214 = vmatprep.mubr.bf16.mxu0 0
  %215 = vmatmul.mubr.bf16.gmra.mrb[0].mxu0 %v83
  %v216 = vpop.f32.mrb[0].mxu0
  %v217 = vadd.f32 0.0, %v216
  %v218 = vpop.f32.mrb[0].mxu0
  %v219 = vpop.f32.mrb[0].mxu0
  %v220 = vadd.f32 0.0, %v219
  %v221 = vpop.f32.mrb[0].mxu0
  %222 = vmatprep.mubr.bf16.mxu0 0
  %223 = vmatmul.mubr.bf16.gmra.mrb[0].mxu0 %v84
  %v224 = vpop.f32.mrb[0].mxu0
  %v225 = vadd.f32 0.0, %v224
  %v226 = vpop.f32.mrb[0].mxu0
  %v227 = vpop.f32.mrb[0].mxu0
  %v228 = vadd.f32 0.0, %v227
  %v229 = vpop.f32.mrb[0].mxu0
  %230 = vmatprep.mubr.bf16.mxu0 0
  %231 = vmatmul.mubr.bf16.gmra.mrb[0].mxu0 %v85
  %v232 = vpop.f32.mrb[0].mxu0
  %v233 = vadd.f32 0.0, %v232
  %v234 = vpop.f32.mrb[0].mxu0
  %v235 = vpop.f32.mrb[0].mxu0
  %v236 = vadd.f32 0.0, %v235
  %v237 = vpop.f32.mrb[0].mxu0
  %238 = vdwg.mxu0
  %v239 = vpack.c.bf16 %v180, %v177
  %v240 = vpack.c.bf16 %v188, %v185
  %v241 = vpack.c.bf16 %v196, %v193
  %v242 = vpack.c.bf16 %v204, %v201
  %v243 = vpack.c.bf16 %v212, %v209
  %v244 = vpack.c.bf16 %v220, %v217
  %v245 = vpack.c.bf16 %v228, %v225
  %v246 = vpack.c.bf16 %v236, %v233
  %v255 = vunpack.c.l.b16 %v239
  %v256 = vunpack.c.h.b16 %v239
  %v257 = vunpack.c.l.b16 %v240
  %v258 = vunpack.c.h.b16 %v240
  %v259 = vunpack.c.l.b16 %v241
  %v260 = vunpack.c.h.b16 %v241
  %v261 = vunpack.c.l.b16 %v242
  %v262 = vunpack.c.h.b16 %v242
  %v263 = vunpack.c.l.b16 %v243
  %v264 = vunpack.c.h.b16 %v243
  %v265 = vunpack.c.l.b16 %v244
  %v266 = vunpack.c.h.b16 %v244
  %v267 = vunpack.c.l.b16 %v245
  %v268 = vunpack.c.h.b16 %v245
  %v269 = vunpack.c.l.b16 %v246
  %v270 = vunpack.c.h.b16 %v246
  %v271 = vpack.c.b16 %v255, %v255
  %v272 = vpack.c.b16 %v256, %v256
  %v273 = vpack.c.b16 %v257, %v257
  %v274 = vpack.c.b16 %v258, %v258
  %v275 = vpack.c.b16 %v259, %v259
  %v276 = vpack.c.b16 %v260, %v260
  %v277 = vpack.c.b16 %v261, %v261
  %v278 = vpack.c.b16 %v262, %v262
  %v279 = vpack.c.b16 %v263, %v263
  %v280 = vpack.c.b16 %v264, %v264
  %v281 = vpack.c.b16 %v265, %v265
  %v282 = vpack.c.b16 %v266, %v266
  %v283 = vpack.c.b16 %v267, %v267
  %v284 = vpack.c.b16 %v268, %v268
  %v285 = vpack.c.b16 %v269, %v269
  %v286 = vpack.c.b16 %v270, %v270
  %303 = vst [vmem:[%s2] sm:$0xf] %v271
  %304 = vst [vmem:[%s2 + $0x4] sm:$0xf] %v272
  %305 = vst [vmem:[%s2 + $0x8] sm:$0xf] %v273
  %306 = vst [vmem:[%s2 + $0xc] sm:$0xf] %v274
  %307 = vst [vmem:[%s2 + $0x10] sm:$0xf] %v275
  %308 = vst [vmem:[%s2 + $0x14] sm:$0xf] %v276
  %309 = vst [vmem:[%s2 + $0x18] sm:$0xf] %v277
  %310 = vst [vmem:[%s2 + $0x1c] sm:$0xf] %v278
  %311 = vst [vmem:[%s2 + $0x20] sm:$0xf] %v279
  %312 = vst [vmem:[%s2 + $0x24] sm:$0xf] %v280
  %313 = vst [vmem:[%s2 + $0x28] sm:$0xf] %v281
  %314 = vst [vmem:[%s2 + $0x2c] sm:$0xf] %v282
  %315 = vst [vmem:[%s2 + $0x30] sm:$0xf] %v283
  %316 = vst [vmem:[%s2 + $0x34] sm:$0xf] %v284
  %317 = vst [vmem:[%s2 + $0x38] sm:$0xf] %v285
  %318 = vst [vmem:[%s2 + $0x3c] sm:$0xf] %v286
  %v319 = vadd.f32 %v177, %v180
  %v320 = vadd.f32 %v319, %v185
  %v321 = vadd.f32 %v320, %v188
  %v322 = vadd.f32 %v321, %v193
  %v323 = vadd.f32 %v322, %v196
  %v324 = vadd.f32 %v323, %v201
  %v325 = vadd.f32 %v324, %v204
  %v326 = vadd.f32 %v325, %v209
  %v327 = vadd.f32 %v326, %v212
  %v328 = vadd.f32 %v327, %v217
  %v329 = vadd.f32 %v328, %v220
  %v330 = vadd.f32 %v329, %v225
  %v331 = vadd.f32 %v330, %v228
  %v332 = vadd.f32 %v331, %v233
  %v333 = vadd.f32 %v332, %v236
  %v334 = vrot.slane %v333, 4
  %v335 = vadd.f32 %v333, %v334
  %v336 = vrot.slane %v335, 2
  %v337 = vadd.f32 %v335, %v336
  %v338 = vrot.slane %v337, 1
  %v339 = vadd.f32 %v337, %v338
  %v340 = vmul.f32 %v177, %v177
  %v341 = vmul.f32 %v180, %v180
  %v342 = vmul.f32 %v185, %v185
  %v343 = vmul.f32 %v188, %v188
  %v344 = vmul.f32 %v193, %v193
  %v345 = vmul.f32 %v196, %v196
  %v346 = vmul.f32 %v201, %v201
  %v347 = vmul.f32 %v204, %v204
  %v348 = vmul.f32 %v209, %v209
  %v349 = vmul.f32 %v212, %v212
  %v350 = vmul.f32 %v217, %v217
  %v351 = vmul.f32 %v220, %v220
  %v352 = vmul.f32 %v225, %v225
  %v353 = vmul.f32 %v228, %v228
  %v354 = vmul.f32 %v233, %v233
  %v355 = vmul.f32 %v236, %v236
  %v356 = vadd.f32 %v340, %v341
  %v357 = vadd.f32 %v356, %v342
  %v358 = vadd.f32 %v357, %v343
  %v359 = vadd.f32 %v358, %v344
  %v360 = vadd.f32 %v359, %v345
  %v361 = vadd.f32 %v360, %v346
  %v362 = vadd.f32 %v361, %v347
  %v363 = vadd.f32 %v362, %v348
  %v364 = vadd.f32 %v363, %v349
  %v365 = vadd.f32 %v364, %v350
  %v366 = vadd.f32 %v365, %v351
  %v367 = vadd.f32 %v366, %v352
  %v368 = vadd.f32 %v367, %v353
  %v369 = vadd.f32 %v368, %v354
  %v370 = vadd.f32 %v369, %v355
  %v371 = vrot.slane %v370, 4
  %v372 = vadd.f32 %v370, %v371
  %v373 = vrot.slane %v372, 2
  %v374 = vadd.f32 %v372, %v373
  %v375 = vrot.slane %v374, 1
  %v376 = vadd.f32 %v374, %v375
  %vm377 = vcmask 1040384
  %v378 = vsel %vm377, %v339, %v376
  %379 = vst [vmem:[%s3] sm:$0x3] %v378
  // Predicated region
  $region10: #{_lambda_.9} parent=0 // pred_check
    _
  $region11: #{_lambda_.9} parent=0 // pred_check_branch
    %381 = sbr.rel (0) target = $region13
  $region12: #{_lambda_.9} parent=0 // pred_region
    _
  $region13: #{_lambda_.9} parent=0 // pred_fallthru
    _
  // Predicated region
  $region14: #{_lambda_.9} parent=0 // pred_check
    _
  $region15: #{_lambda_.9} parent=0 // pred_check_branch
    %383 = sbr.rel (0) target = $region17
  $region16: #{_lambda_.9} parent=0 // pred_region
    _
  $region17: #{_lambda_.9} parent=0 // pred_fallthru
    _
  // Predicated region
  $region18: #{_lambda_.9} parent=0 // pred_check
    _
  $region19: #{_lambda_.9} parent=0 // pred_check_branch
    %385 = sbr.rel (0) target = $region21
  $region20: #{_lambda_.9} parent=0 // pred_region
    _
  $region21: #{_lambda_.9} parent=0 // pred_fallthru
    _
  // Predicated region
  $region22: #{_lambda_.9} parent=0 // pred_check
    _
  $region23: #{_lambda_.9} parent=0 // pred_check_branch
    %387 = sbr.rel (0) target = $region25
  $region24: #{_lambda_.9} parent=0 // pred_region
    _
  $region25: #{_lambda_.9} parent=0 // pred_fallthru
    _

// kernel: _lambda_.8
$region0: #{_lambda_.8}
  #allocation0 [shape = 'u32[]', space=smem, size = 0x4, offset = 0x4, fixed_abs, tag = 'smem constant byte address 0x4 - core index']
  #allocation1 [shape = 'u32[144,128]{1,0:T(1,128)}', space=vmem, size = 0x12000, scoped, tag = 'internal scratch']
  %s0 = inlined_call_operand.vmem [shape: bf16[512,48], index: 0, kind: input, shape index: {}]
  %s1 = inlined_call_operand.vmem [shape: bf16[48,128], index: 1, kind: input, shape index: {}]
  %s2 = inlined_call_operand.vmem [shape: f32[1,128], index: 2, kind: input, shape index: {}]
  %s3 = inlined_call_operand.vmem [shape: bf16[512,128], index: 3, kind: output, shape index: {}]
  %s4 = sld [smem:[#allocation0]]
  $region22: #{_lambda_.8} parent=0
    _
  %s6 = ssub.s32 1, %s4
  %s7 = scalar_select 0, %s6, %s4
  // Predicated region
  $region2: #{_lambda_.8} parent=0 // pred_check
    _
  $region3: #{_lambda_.8} parent=0 // pred_check_branch
    %9 = sbr.rel (0) target = $region5
  $region4: #{_lambda_.8} parent=0 // pred_region
    _
  $region5: #{_lambda_.8} parent=0 // pred_fallthru
    _
  // Predicated region
  $region6: #{_lambda_.8} parent=0 // pred_check
    _
  $region7: #{_lambda_.8} parent=0 // pred_check_branch
    %11 = sbr.rel (0) target = $region9
  $region8: #{_lambda_.8} parent=0 // pred_region
    _
  $region9: #{_lambda_.8} parent=0 // pred_fallthru
    _
  // Predicated region
  $region10: #{_lambda_.8} parent=0 // pred_check
    _
  $region11: #{_lambda_.8} parent=0 // pred_check_branch
    %13 = sbr.rel (0) target = $region13
  $region12: #{_lambda_.8} parent=0 // pred_region
    _
  $region13: #{_lambda_.8} parent=0 // pred_fallthru
    _
  %v15 = vld [vmem:[%s0] sm:$0xf]
  %v16 = vld [vmem:[%s0 + $0x4] sm:$0xf]
  %v17 = vld [vmem:[%s0 + $0x8] sm:$0xf]
  %v18 = vld [vmem:[%s0 + $0xc] sm:$0xf]
  %v19 = vld [vmem:[%s0 + $0x10] sm:$0xf]
  %v20 = vld [vmem:[%s0 + $0x14] sm:$0xf]
  %v21 = vld [vmem:[%s0 + $0x18] sm:$0xf]
  %v22 = vld [vmem:[%s0 + $0x1c] sm:$0xf]
  %v23 = vld [vmem:[%s0 + $0x20] sm:$0xf]
  %v24 = vld [vmem:[%s0 + $0x24] sm:$0xf]
  %v25 = vld [vmem:[%s0 + $0x28] sm:$0xf]
  %v26 = vld [vmem:[%s0 + $0x2c] sm:$0xf]
  %v27 = vld [vmem:[%s0 + $0x30] sm:$0xf]
  %v28 = vld [vmem:[%s0 + $0x34] sm:$0xf]
  %v29 = vld [vmem:[%s0 + $0x38] sm:$0xf]
  %v30 = vld [vmem:[%s0 + $0x3c] sm:$0xf]
  %v31 = vld [vmem:[%s0 + $0x40] sm:$0xf]
  %v32 = vld [vmem:[%s0 + $0x44] sm:$0xf]
  %v33 = vld [vmem:[%s0 + $0x48] sm:$0xf]
  %v34 = vld [vmem:[%s0 + $0x4c] sm:$0xf]
  %v35 = vld [vmem:[%s0 + $0x50] sm:$0xf]
  %v36 = vld [vmem:[%s0 + $0x54] sm:$0xf]
  %v37 = vld [vmem:[%s0 + $0x58] sm:$0xf]
  %v38 = vld [vmem:[%s0 + $0x5c] sm:$0xf]
  %v39 = vld [vmem:[%s0 + $0x60] sm:$0xf]
  %v40 = vld [vmem:[%s0 + $0x64] sm:$0xf]
  %v41 = vld [vmem:[%s0 + $0x68] sm:$0xf]
  %v42 = vld [vmem:[%s0 + $0x6c] sm:$0xf]
  %v43 = vld [vmem:[%s0 + $0x70] sm:$0xf]
  %v44 = vld [vmem:[%s0 + $0x74] sm:$0xf]
  %v45 = vld [vmem:[%s0 + $0x78] sm:$0xf]
  %v46 = vld [vmem:[%s0 + $0x7c] sm:$0xf]
  %v47 = vld [vmem:[%s0 + $0x80] sm:$0xf]
  %v48 = vld [vmem:[%s0 + $0x84] sm:$0xf]
  %v49 = vld [vmem:[%s0 + $0x88] sm:$0xf]
  %v50 = vld [vmem:[%s0 + $0x8c] sm:$0xf]
  %v51 = vld [vmem:[%s0 + $0x90] sm:$0xf]
  %v52 = vld [vmem:[%s0 + $0x94] sm:$0xf]
  %v53 = vld [vmem:[%s0 + $0x98] sm:$0xf]
  %v54 = vld [vmem:[%s0 + $0x9c] sm:$0xf]
  %v55 = vld [vmem:[%s0 + $0xa0] sm:$0xf]
  %v56 = vld [vmem:[%s0 + $0xa4] sm:$0xf]
  %v57 = vld [vmem:[%s0 + $0xa8] sm:$0xf]
  %v58 = vld [vmem:[%s0 + $0xac] sm:$0xf]
  %v59 = vld [vmem:[%s0 + $0xb0] sm:$0xf]
  %v60 = vld [vmem:[%s0 + $0xb4] sm:$0xf]
  %v61 = vld [vmem:[%s0 + $0xb8] sm:$0xf]
  %v62 = vld [vmem:[%s0 + $0xbc] sm:$0xf]
  %v63 = vld [vmem:[%s0 + $0xc0] sm:$0xf]
  %v64 = vld [vmem:[%s0 + $0xc4] sm:$0xf]
  %v65 = vld [vmem:[%s0 + $0xc8] sm:$0xf]
  %v66 = vld [vmem:[%s0 + $0xcc] sm:$0xf]
  %v67 = vld [vmem:[%s0 + $0xd0] sm:$0xf]
  %v68 = vld [vmem:[%s0 + $0xd4] sm:$0xf]
  %v69 = vld [vmem:[%s0 + $0xd8] sm:$0xf]
  %v70 = vld [vmem:[%s0 + $0xdc] sm:$0xf]
  %v71 = vld [vmem:[%s0 + $0xe0] sm:$0xf]
  %v72 = vld [vmem:[%s0 + $0xe4] sm:$0xf]
  %v73 = vld [vmem:[%s0 + $0xe8] sm:$0xf]
  %v74 = vld [vmem:[%s0 + $0xec] sm:$0xf]
  %v75 = vld [vmem:[%s0 + $0xf0] sm:$0xf]
  %v76 = vld [vmem:[%s0 + $0xf4] sm:$0xf]
  %v77 = vld [vmem:[%s0 + $0xf8] sm:$0xf]
  %v78 = vld [vmem:[%s0 + $0xfc] sm:$0xf]
  %v79 = vld [vmem:[%s1] sm:$0xf]
  %v80 = vld [vmem:[%s1 + $0x4] sm:$0xf]
  %v81 = vld [vmem:[%s1 + $0x8] sm:$0xf]
  %v82 = vld [vmem:[%s1 + $0xc] sm:$0xf]
  %v83 = vld [vmem:[%s1 + $0x10] sm:$0xf]
  %v84 = vld [vmem:[%s1 + $0x14] sm:$0xf]
  %v85 = vld [vmem:[%s2] sm:$0x1]
  %v87 = vlaneseq
  %v88 = vshrl.u32 %v87, 7
  %v89 = vsub.s32 0, %v88
  %v90 = vrot.slane %v85, %v89
  %v156 = vunpack.c.l.b16 %v15
  %v157 = vunpack.c.l.b16 %v16
  %v158 = vunpack.c.l.b16 %v17
  %v159 = vunpack.c.l.b16 %v18
  %v160 = vunpack.c.l.b16 %v19
  %v161 = vunpack.c.l.b16 %v20
  %v162 = vunpack.c.l.b16 %v21
  %v163 = vunpack.c.l.b16 %v22
  %v164 = vunpack.c.l.b16 %v23
  %v165 = vunpack.c.l.b16 %v24
  %v166 = vunpack.c.l.b16 %v25
  %v167 = vunpack.c.l.b16 %v26
  %v168 = vunpack.c.l.b16 %v27
  %v169 = vunpack.c.l.b16 %v28
  %v170 = vunpack.c.l.b16 %v29
  %v171 = vunpack.c.l.b16 %v30
  %v172 = vunpack.c.l.b16 %v31
  %v173 = vunpack.c.l.b16 %v32
  %v174 = vunpack.c.l.b16 %v33
  %v175 = vunpack.c.l.b16 %v34
  %v176 = vunpack.c.l.b16 %v35
  %v177 = vunpack.c.l.b16 %v36
  %v178 = vunpack.c.l.b16 %v37
  %v179 = vunpack.c.l.b16 %v38
  %v180 = vunpack.c.l.b16 %v39
  %v181 = vunpack.c.l.b16 %v40
  %v182 = vunpack.c.l.b16 %v41
  %v183 = vunpack.c.l.b16 %v42
  %v184 = vunpack.c.l.b16 %v43
  %v185 = vunpack.c.l.b16 %v44
  %v186 = vunpack.c.l.b16 %v45
  %v187 = vunpack.c.l.b16 %v46
  %v188 = vunpack.c.l.b16 %v47
  %v189 = vunpack.c.l.b16 %v48
  %v190 = vunpack.c.l.b16 %v49
  %v191 = vunpack.c.l.b16 %v50
  %v192 = vunpack.c.l.b16 %v51
  %v193 = vunpack.c.l.b16 %v52
  %v194 = vunpack.c.l.b16 %v53
  %v195 = vunpack.c.l.b16 %v54
  %v196 = vunpack.c.l.b16 %v55
  %v197 = vunpack.c.l.b16 %v56
  %v198 = vunpack.c.l.b16 %v57
  %v199 = vunpack.c.l.b16 %v58
  %v200 = vunpack.c.l.b16 %v59
  %v201 = vunpack.c.l.b16 %v60
  %v202 = vunpack.c.l.b16 %v61
  %v203 = vunpack.c.l.b16 %v62
  %v204 = vunpack.c.l.b16 %v63
  %v205 = vunpack.c.l.b16 %v64
  %v206 = vunpack.c.l.b16 %v65
  %v207 = vunpack.c.l.b16 %v66
  %v208 = vunpack.c.l.b16 %v67
  %v209 = vunpack.c.l.b16 %v68
  %v210 = vunpack.c.l.b16 %v69
  %v211 = vunpack.c.l.b16 %v70
  %v212 = vunpack.c.l.b16 %v71
  %v213 = vunpack.c.l.b16 %v72
  %v214 = vunpack.c.l.b16 %v73
  %v215 = vunpack.c.l.b16 %v74
  %v216 = vunpack.c.l.b16 %v75
  %v217 = vunpack.c.l.b16 %v76
  %v218 = vunpack.c.l.b16 %v77
  %v219 = vunpack.c.l.b16 %v78
  %v220 = vpack.c.b16 %v157, %v156
  %v221 = vpack.c.b16 %v159, %v158
  %v222 = vpack.c.b16 %v161, %v160
  %v223 = vpack.c.b16 %v163, %v162
  %v224 = vpack.c.b16 %v165, %v164
  %v225 = vpack.c.b16 %v167, %v166
  %v226 = vpack.c.b16 %v169, %v168
  %v227 = vpack.c.b16 %v171, %v170
  %v228 = vpack.c.b16 %v173, %v172
  %v229 = vpack.c.b16 %v175, %v174
  %v230 = vpack.c.b16 %v177, %v176
  %v231 = vpack.c.b16 %v179, %v178
  %v232 = vpack.c.b16 %v181, %v180
  %v233 = vpack.c.b16 %v183, %v182
  %v234 = vpack.c.b16 %v185, %v184
  %v235 = vpack.c.b16 %v187, %v186
  %v236 = vpack.c.b16 %v189, %v188
  %v237 = vpack.c.b16 %v191, %v190
  %v238 = vpack.c.b16 %v193, %v192
  %v239 = vpack.c.b16 %v195, %v194
  %v240 = vpack.c.b16 %v197, %v196
  %v241 = vpack.c.b16 %v199, %v198
  %v242 = vpack.c.b16 %v201, %v200
  %v243 = vpack.c.b16 %v203, %v202
  %v244 = vpack.c.b16 %v205, %v204
  %v245 = vpack.c.b16 %v207, %v206
  %v246 = vpack.c.b16 %v209, %v208
  %v247 = vpack.c.b16 %v211, %v210
  %v248 = vpack.c.b16 %v213, %v212
  %v249 = vpack.c.b16 %v215, %v214
  %v250 = vpack.c.b16 %v217, %v216
  %v251 = vpack.c.b16 %v219, %v218
  %v258 = vunpack.c.l.b16 %v79
  %v259 = vunpack.c.l.b16 %v80
  %v260 = vunpack.c.l.b16 %v81
  %v261 = vunpack.c.l.b16 %v82
  %v262 = vunpack.c.l.b16 %v83
  %v263 = vunpack.c.l.b16 %v84
  %v264 = vpack.c.b16 %v259, %v258
  %v265 = vpack.c.b16 %v261, %v260
  %v266 = vpack.c.b16 %v263, %v262
  %vm270 = vcmask 392192
  %v272 = vsel %vm270, %v220, 0
  %v275 = vsel %vm270, %v221, 0
  %v278 = vsel %vm270, %v222, 0
  %v281 = vsel %vm270, %v223, 0
  %v284 = vsel %vm270, %v224, 0
  %v287 = vsel %vm270, %v225, 0
  %v290 = vsel %vm270, %v226, 0
  %v293 = vsel %vm270, %v227, 0
  %v296 = vsel %vm270, %v228, 0
  %v299 = vsel %vm270, %v229, 0
  %v302 = vsel %vm270, %v230, 0
  %v305 = vsel %vm270, %v231, 0
  %v308 = vsel %vm270, %v232, 0
  %v311 = vsel %vm270, %v233, 0
  %v314 = vsel %vm270, %v234, 0
  %v317 = vsel %vm270, %v235, 0
  %v320 = vsel %vm270, %v236, 0
  %v323 = vsel %vm270, %v237, 0
  %v326 = vsel %vm270, %v238, 0
  %v329 = vsel %vm270, %v239, 0
  %v332 = vsel %vm270, %v240, 0
  %v335 = vsel %vm270, %v241, 0
  %v338 = vsel %vm270, %v242, 0
  %v341 = vsel %vm270, %v243, 0
  %v344 = vsel %vm270, %v244, 0
  %v347 = vsel %vm270, %v245, 0
  %v350 = vsel %vm270, %v246, 0
  %v353 = vsel %vm270, %v247, 0
  %v356 = vsel %vm270, %v248, 0
  %v359 = vsel %vm270, %v249, 0
  %v362 = vsel %vm270, %v250, 0
  %v365 = vsel %vm270, %v251, 0
  %367 = vmatprep.subr.bf16.mxu0 0
  %368 = vmatpush1.bf16.msra.mxu0 %v264
  %369 = vmatprep.subr.bf16.mxu0 0
  %370 = vmatpush1.bf16.msra.mxu0 %v265
  %371 = vmatprep.subr.bf16.mxu0 0
  %372 = vmatpush1.bf16.msra.mxu0 %v266
  %373 = vmatprep.subr.bf16.mxu0 0
  %374 = vmatpush1.bf16.msra.mxu0 0
  %375 = vmatprep.subr.bf16.mxu0 0
  %376 = vmatpush1.bf16.msra.mxu0 0
  %377 = vmatprep.subr.bf16.mxu0 0
  %378 = vmatpush1.bf16.msra.mxu0 0
  %379 = vmatprep.subr.bf16.mxu0 0
  %380 = vmatpush1.bf16.msra.mxu0 0
  %381 = vmatprep.subr.bf16.mxu0 0
  %382 = vmatpush1.bf16.msra.mxu0 0
  %383 = vmatprep.subr.bf16.mxu0 0
  %384 = vmatpush1.bf16.msra.mxu0 0
  %385 = vmatprep.subr.bf16.mxu0 0
  %386 = vmatpush1.bf16.msra.mxu0 0
  %387 = vmatprep.subr.bf16.mxu0 0
  %388 = vmatpush1.bf16.msra.mxu0 0
  %389 = vmatprep.subr.bf16.mxu0 0
  %390 = vmatpush1.bf16.msra.mxu0 0
  %391 = vmatprep.subr.bf16.mxu0 0
  %392 = vmatpush1.bf16.msra.mxu0 0
  %393 = vmatprep.subr.bf16.mxu0 0
  %394 = vmatpush1.bf16.msra.mxu0 0
  %395 = vmatprep.subr.bf16.mxu0 0
  %396 = vmatpush1.bf16.msra.mxu0 0
  %397 = vmatprep.subr.bf16.mxu0 0
  %398 = vmatpush1.bf16.msra.mxu0 0
  %399 = vmatprep.mubr.bf16.mxu0 0
  %400 = vmatmul.mubr.bf16.gmra.mrb[0].mxu0 %v272
  %v401 = vpop.f32.mrb[0].mxu0
  %v402 = vadd.f32 %v90, %v401
  %v403 = vpop.f32.mrb[0].mxu0
  %v404 = vpop.f32.mrb[0].mxu0
  %v405 = vadd.f32 %v90, %v404
  %v406 = vpop.f32.mrb[0].mxu0
  %407 = vmatprep.mubr.bf16.mxu0 0
  %408 = vmatmul.mubr.bf16.gmra.mrb[0].mxu0 %v275
  %v409 = vpop.f32.mrb[0].mxu0
  %v410 = vadd.f32 %v90, %v409
  %v411 = vpop.f32.mrb[0].mxu0
  %v412 = vpop.f32.mrb[0].mxu0
  %v413 = vadd.f32 %v90, %v412
  %v414 = vpop.f32.mrb[0].mxu0
  %415 = vmatprep.mubr.bf16.mxu0 0
  %416 = vmatmul.mubr.bf16.gmra.mrb[0].mxu0 %v278
  %v417 = vpop.f32.mrb[0].mxu0
  %v418 = vadd.f32 %v90, %v417
  %v419 = vpop.f32.mrb[0].mxu0
  %v420 = vpop.f32.mrb[0].mxu0
  %v421 = vadd.f32 %v90, %v420
  %v422 = vpop.f32.mrb[0].mxu0
  %423 = vmatprep.mubr.bf16.mxu0 0
  %424 = vmatmul.mubr.bf16.gmra.mrb[0].mxu0 %v281
  %v425 = vpop.f32.mrb[0].mxu0
  %v426 = vadd.f32 %v90, %v425
  %v427 = vpop.f32.mrb[0].mxu0
  %v428 = vpop.f32.mrb[0].mxu0
  %v429 = vadd.f32 %v90, %v428
  %v430 = vpop.f32.mrb[0].mxu0
  %431 = vmatprep.mubr.bf16.mxu0 0
  %432 = vmatmul.mubr.bf16.gmra.mrb[0].mxu0 %v284
  %v433 = vpop.f32.mrb[0].mxu0
  %v434 = vadd.f32 %v90, %v433
  %v435 = vpop.f32.mrb[0].mxu0
  %v436 = vpop.f32.mrb[0].mxu0
  %v437 = vadd.f32 %v90, %v436
  %v438 = vpop.f32.mrb[0].mxu0
  %439 = vmatprep.mubr.bf16.mxu0 0
  %440 = vmatmul.mubr.bf16.gmra.mrb[0].mxu0 %v287
  %v441 = vpop.f32.mrb[0].mxu0
  %v442 = vadd.f32 %v90, %v441
  %v443 = vpop.f32.mrb[0].mxu0
  %v444 = vpop.f32.mrb[0].mxu0
  %v445 = vadd.f32 %v90, %v444
  %v446 = vpop.f32.mrb[0].mxu0
  %447 = vmatprep.mubr.bf16.mxu0 0
  %448 = vmatmul.mubr.bf16.gmra.mrb[0].mxu0 %v290
  %v449 = vpop.f32.mrb[0].mxu0
  %v450 = vadd.f32 %v90, %v449
  %v451 = vpop.f32.mrb[0].mxu0
  %v452 = vpop.f32.mrb[0].mxu0
  %v453 = vadd.f32 %v90, %v452
  %v454 = vpop.f32.mrb[0].mxu0
  %455 = vmatprep.mubr.bf16.mxu0 0
  %456 = vmatmul.mubr.bf16.gmra.mrb[0].mxu0 %v293
  %v457 = vpop.f32.mrb[0].mxu0
  %v458 = vadd.f32 %v90, %v457
  %v459 = vpop.f32.mrb[0].mxu0
  %v460 = vpop.f32.mrb[0].mxu0
  %v461 = vadd.f32 %v90, %v460
  %v462 = vpop.f32.mrb[0].mxu0
  %463 = vmatprep.mubr.bf16.mxu0 0
  %464 = vmatmul.mubr.bf16.gmra.mrb[0].mxu0 %v296
  %v465 = vpop.f32.mrb[0].mxu0
  %v466 = vadd.f32 %v90, %v465
  %v467 = vpop.f32.mrb[0].mxu0
  %v468 = vpop.f32.mrb[0].mxu0
  %v469 = vadd.f32 %v90, %v468
  %v470 = vpop.f32.mrb[0].mxu0
  %471 = vmatprep.mubr.bf16.mxu0 0
  %472 = vmatmul.mubr.bf16.gmra.mrb[0].mxu0 %v299
  %v473 = vpop.f32.mrb[0].mxu0
  %v474 = vadd.f32 %v90, %v473
  %v475 = vpop.f32.mrb[0].mxu0
  %v476 = vpop.f32.mrb[0].mxu0
  %v477 = vadd.f32 %v90, %v476
  %v478 = vpop.f32.mrb[0].mxu0
  %479 = vmatprep.mubr.bf16.mxu0 0
  %480 = vmatmul.mubr.bf16.gmra.mrb[0].mxu0 %v302
  %v481 = vpop.f32.mrb[0].mxu0
  %v482 = vadd.f32 %v90, %v481
  %v483 = vpop.f32.mrb[0].mxu0
  %v484 = vpop.f32.mrb[0].mxu0
  %v485 = vadd.f32 %v90, %v484
  %v486 = vpop.f32.mrb[0].mxu0
  %487 = vmatprep.mubr.bf16.mxu0 0
  %488 = vmatmul.mubr.bf16.gmra.mrb[0].mxu0 %v305
  %v489 = vpop.f32.mrb[0].mxu0
  %v490 = vadd.f32 %v90, %v489
  %v491 = vpop.f32.mrb[0].mxu0
  %v492 = vpop.f32.mrb[0].mxu0
  %v493 = vadd.f32 %v90, %v492
  %v494 = vpop.f32.mrb[0].mxu0
  %495 = vmatprep.mubr.bf16.mxu0 0
  %496 = vmatmul.mubr.bf16.gmra.mrb[0].mxu0 %v308
  %v497 = vpop.f32.mrb[0].mxu0
  %v498 = vadd.f32 %v90, %v497
  %v499 = vpop.f32.mrb[0].mxu0
  %v500 = vpop.f32.mrb[0].mxu0
  %v501 = vadd.f32 %v90, %v500
  %v502 = vpop.f32.mrb[0].mxu0
  %503 = vmatprep.mubr.bf16.mxu0 0
  %504 = vmatmul.mubr.bf16.gmra.mrb[0].mxu0 %v311
  %v505 = vpop.f32.mrb[0].mxu0
  %v506 = vadd.f32 %v90, %v505
  %v507 = vpop.f32.mrb[0].mxu0
  %v508 = vpop.f32.mrb[0].mxu0
  %v509 = vadd.f32 %v90, %v508
  %v510 = vpop.f32.mrb[0].mxu0
  %511 = vmatprep.mubr.bf16.mxu0 0
  %512 = vmatmul.mubr.bf16.gmra.mrb[0].mxu0 %v314
  %v513 = vpop.f32.mrb[0].mxu0
  %v514 = vadd.f32 %v90, %v513
  %v515 = vpop.f32.mrb[0].mxu0
  %v516 = vpop.f32.mrb[0].mxu0
  %v517 = vadd.f32 %v90, %v516
  %v518 = vpop.f32.mrb[0].mxu0
  %519 = vmatprep.mubr.bf16.mxu0 0
  %520 = vmatmul.mubr.bf16.gmra.mrb[0].mxu0 %v317
  %v521 = vpop.f32.mrb[0].mxu0
  %v522 = vadd.f32 %v90, %v521
  %v523 = vpop.f32.mrb[0].mxu0
  %v524 = vpop.f32.mrb[0].mxu0
  %v525 = vadd.f32 %v90, %v524
  %v526 = vpop.f32.mrb[0].mxu0
  %527 = vmatprep.mubr.bf16.mxu0 0
  %528 = vmatmul.mubr.bf16.gmra.mrb[0].mxu0 %v320
  %v529 = vpop.f32.mrb[0].mxu0
  %v530 = vadd.f32 %v90, %v529
  %v531 = vpop.f32.mrb[0].mxu0
  %v532 = vpop.f32.mrb[0].mxu0
  %v533 = vadd.f32 %v90, %v532
  %v534 = vpop.f32.mrb[0].mxu0
  %535 = vmatprep.mubr.bf16.mxu0 0
  %536 = vmatmul.mubr.bf16.gmra.mrb[0].mxu0 %v323
  %v537 = vpop.f32.mrb[0].mxu0
  %v538 = vadd.f32 %v90, %v537
  %v539 = vpop.f32.mrb[0].mxu0
  %v540 = vpop.f32.mrb[0].mxu0
  %v541 = vadd.f32 %v90, %v540
  %v542 = vpop.f32.mrb[0].mxu0
  %543 = vmatprep.mubr.bf16.mxu0 0
  %544 = vmatmul.mubr.bf16.gmra.mrb[0].mxu0 %v326
  %v545 = vpop.f32.mrb[0].mxu0
  %v546 = vadd.f32 %v90, %v545
  %v547 = vpop.f32.mrb[0].mxu0
  %v548 = vpop.f32.mrb[0].mxu0
  %v549 = vadd.f32 %v90, %v548
  %v550 = vpop.f32.mrb[0].mxu0
  %551 = vmatprep.mubr.bf16.mxu0 0
  %552 = vmatmul.mubr.bf16.gmra.mrb[0].mxu0 %v329
  %v553 = vpop.f32.mrb[0].mxu0
  %v554 = vadd.f32 %v90, %v553
  %v555 = vpop.f32.mrb[0].mxu0
  %v556 = vpop.f32.mrb[0].mxu0
  %v557 = vadd.f32 %v90, %v556
  %v558 = vpop.f32.mrb[0].mxu0
  %559 = vmatprep.mubr.bf16.mxu0 0
  %560 = vmatmul.mubr.bf16.gmra.mrb[0].mxu0 %v332
  %v561 = vpop.f32.mrb[0].mxu0
  %v562 = vadd.f32 %v90, %v561
  %v563 = vpop.f32.mrb[0].mxu0
  %v564 = vpop.f32.mrb[0].mxu0
  %v565 = vadd.f32 %v90, %v564
  %v566 = vpop.f32.mrb[0].mxu0
  %567 = vmatprep.mubr.bf16.mxu0 0
  %568 = vmatmul.mubr.bf16.gmra.mrb[0].mxu0 %v335
  %v569 = vpop.f32.mrb[0].mxu0
  %v570 = vadd.f32 %v90, %v569
  %v571 = vpop.f32.mrb[0].mxu0
  %v572 = vpop.f32.mrb[0].mxu0
  %v573 = vadd.f32 %v90, %v572
  %v574 = vpop.f32.mrb[0].mxu0
  %575 = vmatprep.mubr.bf16.mxu0 0
  %576 = vmatmul.mubr.bf16.gmra.mrb[0].mxu0 %v338
  %v577 = vpop.f32.mrb[0].mxu0
  %v578 = vadd.f32 %v90, %v577
  %v579 = vpop.f32.mrb[0].mxu0
  %v580 = vpop.f32.mrb[0].mxu0
  %v581 = vadd.f32 %v90, %v580
  %v582 = vpop.f32.mrb[0].mxu0
  %583 = vmatprep.mubr.bf16.mxu0 0
  %584 = vmatmul.mubr.bf16.gmra.mrb[0].mxu0 %v341
  %v585 = vpop.f32.mrb[0].mxu0
  %v586 = vadd.f32 %v90, %v585
  %v587 = vpop.f32.mrb[0].mxu0
  %v588 = vpop.f32.mrb[0].mxu0
  %v589 = vadd.f32 %v90, %v588
  %v590 = vpop.f32.mrb[0].mxu0
  %591 = vmatprep.mubr.bf16.mxu0 0
  %592 = vmatmul.mubr.bf16.gmra.mrb[0].mxu0 %v344
  %v593 = vpop.f32.mrb[0].mxu0
  %v594 = vadd.f32 %v90, %v593
  %v595 = vpop.f32.mrb[0].mxu0
  %v596 = vpop.f32.mrb[0].mxu0
  %v597 = vadd.f32 %v90, %v596
  %v598 = vpop.f32.mrb[0].mxu0
  %599 = vmatprep.mubr.bf16.mxu0 0
  %600 = vmatmul.mubr.bf16.gmra.mrb[0].mxu0 %v347
  %v601 = vpop.f32.mrb[0].mxu0
  %v602 = vadd.f32 %v90, %v601
  %v603 = vpop.f32.mrb[0].mxu0
  %v604 = vpop.f32.mrb[0].mxu0
  %v605 = vadd.f32 %v90, %v604
  %v606 = vpop.f32.mrb[0].mxu0
  %607 = vmatprep.mubr.bf16.mxu0 0
  %608 = vmatmul.mubr.bf16.gmra.mrb[0].mxu0 %v350
  %v609 = vpop.f32.mrb[0].mxu0
  %v610 = vadd.f32 %v90, %v609
  %v611 = vpop.f32.mrb[0].mxu0
  %v612 = vpop.f32.mrb[0].mxu0
  %v613 = vadd.f32 %v90, %v612
  %v614 = vpop.f32.mrb[0].mxu0
  %615 = vmatprep.mubr.bf16.mxu0 0
  %616 = vmatmul.mubr.bf16.gmra.mrb[0].mxu0 %v353
  %v617 = vpop.f32.mrb[0].mxu0
  %v618 = vadd.f32 %v90, %v617
  %v619 = vpop.f32.mrb[0].mxu0
  %v620 = vpop.f32.mrb[0].mxu0
  %v621 = vadd.f32 %v90, %v620
  %v622 = vpop.f32.mrb[0].mxu0
  %623 = vmatprep.mubr.bf16.mxu0 0
  %624 = vmatmul.mubr.bf16.gmra.mrb[0].mxu0 %v356
  %v625 = vpop.f32.mrb[0].mxu0
  %v626 = vadd.f32 %v90, %v625
  %v627 = vpop.f32.mrb[0].mxu0
  %v628 = vpop.f32.mrb[0].mxu0
  %v629 = vadd.f32 %v90, %v628
  %v630 = vpop.f32.mrb[0].mxu0
  %631 = vmatprep.mubr.bf16.mxu0 0
  %632 = vmatmul.mubr.bf16.gmra.mrb[0].mxu0 %v359
  %v633 = vpop.f32.mrb[0].mxu0
  %v634 = vadd.f32 %v90, %v633
  %v635 = vpop.f32.mrb[0].mxu0
  %v636 = vpop.f32.mrb[0].mxu0
  %v637 = vadd.f32 %v90, %v636
  %v638 = vpop.f32.mrb[0].mxu0
  %639 = vmatprep.mubr.bf16.mxu0 0
  %640 = vmatmul.mubr.bf16.gmra.mrb[0].mxu0 %v362
  %v641 = vpop.f32.mrb[0].mxu0
  %v642 = vadd.f32 %v90, %v641
  %v643 = vpop.f32.mrb[0].mxu0
  %v644 = vpop.f32.mrb[0].mxu0
  %v645 = vadd.f32 %v90, %v644
  %v646 = vpop.f32.mrb[0].mxu0
  %647 = vmatprep.mubr.bf16.mxu0 0
  %648 = vmatmul.mubr.bf16.gmra.mrb[0].mxu0 %v365
  %v649 = vpop.f32.mrb[0].mxu0
  %v650 = vadd.f32 %v90, %v649
  %v651 = vpop.f32.mrb[0].mxu0
  %v652 = vpop.f32.mrb[0].mxu0
  %v653 = vadd.f32 %v90, %v652
  %v654 = vpop.f32.mrb[0].mxu0
  %655 = vdwg.mxu0
  %vm656 = vcmp.ge.f32.partialorder %v402, 0.0
  %vm657 = vcmp.ge.f32.partialorder %v405, 0.0
  %vm658 = vcmp.ge.f32.partialorder %v410, 0.0
  %vm659 = vcmp.ge.f32.partialorder %v413, 0.0
  %vm660 = vcmp.ge.f32.partialorder %v418, 0.0
  %vm661 = vcmp.ge.f32.partialorder %v421, 0.0
  %vm662 = vcmp.ge.f32.partialorder %v426, 0.0
  %vm663 = vcmp.ge.f32.partialorder %v429, 0.0
  %vm664 = vcmp.ge.f32.partialorder %v434, 0.0
  %vm665 = vcmp.ge.f32.partialorder %v437, 0.0
  %vm666 = vcmp.ge.f32.partialorder %v442, 0.0
  %vm667 = vcmp.ge.f32.partialorder %v445, 0.0
  %vm668 = vcmp.ge.f32.partialorder %v450, 0.0
  %vm669 = vcmp.ge.f32.partialorder %v453, 0.0
  %vm670 = vcmp.ge.f32.partialorder %v458, 0.0
  %vm671 = vcmp.ge.f32.partialorder %v461, 0.0
  %vm672 = vcmp.ge.f32.partialorder %v466, 0.0
  %vm673 = vcmp.ge.f32.partialorder %v469, 0.0
  %vm674 = vcmp.ge.f32.partialorder %v474, 0.0
  %vm675 = vcmp.ge.f32.partialorder %v477, 0.0
  %vm676 = vcmp.ge.f32.partialorder %v482, 0.0
  %vm677 = vcmp.ge.f32.partialorder %v485, 0.0
  %vm678 = vcmp.ge.f32.partialorder %v490, 0.0
  %vm679 = vcmp.ge.f32.partialorder %v493, 0.0
  %vm680 = vcmp.ge.f32.partialorder %v498, 0.0
  %vm681 = vcmp.ge.f32.partialorder %v501, 0.0
  %vm682 = vcmp.ge.f32.partialorder %v506, 0.0
  %vm683 = vcmp.ge.f32.partialorder %v509, 0.0
  %vm684 = vcmp.ge.f32.partialorder %v514, 0.0
  %vm685 = vcmp.ge.f32.partialorder %v517, 0.0
  %vm686 = vcmp.ge.f32.partialorder %v522, 0.0
  %vm687 = vcmp.ge.f32.partialorder %v525, 0.0
  %vm688 = vcmp.ge.f32.partialorder %v530, 0.0
  %vm689 = vcmp.ge.f32.partialorder %v533, 0.0
  %vm690 = vcmp.ge.f32.partialorder %v538, 0.0
  %vm691 = vcmp.ge.f32.partialorder %v541, 0.0
  %vm692 = vcmp.ge.f32.partialorder %v546, 0.0
  %vm693 = vcmp.ge.f32.partialorder %v549, 0.0
  %vm694 = vcmp.ge.f32.partialorder %v554, 0.0
  %vm695 = vcmp.ge.f32.partialorder %v557, 0.0
  %vm696 = vcmp.ge.f32.partialorder %v562, 0.0
  %vm697 = vcmp.ge.f32.partialorder %v565, 0.0
  %vm698 = vcmp.ge.f32.partialorder %v570, 0.0
  %vm699 = vcmp.ge.f32.partialorder %v573, 0.0
  %vm700 = vcmp.ge.f32.partialorder %v578, 0.0
  %vm701 = vcmp.ge.f32.partialorder %v581, 0.0
  %vm702 = vcmp.ge.f32.partialorder %v586, 0.0
  %vm703 = vcmp.ge.f32.partialorder %v589, 0.0
  %vm704 = vcmp.ge.f32.partialorder %v594, 0.0
  %vm705 = vcmp.ge.f32.partialorder %v597, 0.0
  %vm706 = vcmp.ge.f32.partialorder %v602, 0.0
  %vm707 = vcmp.ge.f32.partialorder %v605, 0.0
  %vm708 = vcmp.ge.f32.partialorder %v610, 0.0
  %vm709 = vcmp.ge.f32.partialorder %v613, 0.0
  %vm710 = vcmp.ge.f32.partialorder %v618, 0.0
  %vm711 = vcmp.ge.f32.partialorder %v621, 0.0
  %vm712 = vcmp.ge.f32.partialorder %v626, 0.0
  %vm713 = vcmp.ge.f32.partialorder %v629, 0.0
  %vm714 = vcmp.ge.f32.partialorder %v634, 0.0
  %vm715 = vcmp.ge.f32.partialorder %v637, 0.0
  %vm716 = vcmp.ge.f32.partialorder %v642, 0.0
  %vm717 = vcmp.ge.f32.partialorder %v645, 0.0
  %vm718 = vcmp.ge.f32.partialorder %v650, 0.0
  %vm719 = vcmp.ge.f32.partialorder %v653, 0.0
  %v720 = vmul.f32 %v402, 0.2
  %v721 = vmul.f32 %v405, 0.2
  %v722 = vmul.f32 %v410, 0.2
  %v723 = vmul.f32 %v413, 0.2
  %v724 = vmul.f32 %v418, 0.2
  %v725 = vmul.f32 %v421, 0.2
  %v726 = vmul.f32 %v426, 0.2
  %v727 = vmul.f32 %v429, 0.2
  %v728 = vmul.f32 %v434, 0.2
  %v729 = vmul.f32 %v437, 0.2
  %v730 = vmul.f32 %v442, 0.2
  %v731 = vmul.f32 %v445, 0.2
  %v732 = vmul.f32 %v450, 0.2
  %v733 = vmul.f32 %v453, 0.2
  %v734 = vmul.f32 %v458, 0.2
  %v735 = vmul.f32 %v461, 0.2
  %v736 = vmul.f32 %v466, 0.2
  %v737 = vmul.f32 %v469, 0.2
  %v738 = vmul.f32 %v474, 0.2
  %v739 = vmul.f32 %v477, 0.2
  %v740 = vmul.f32 %v482, 0.2
  %v741 = vmul.f32 %v485, 0.2
  %v742 = vmul.f32 %v490, 0.2
  %v743 = vmul.f32 %v493, 0.2
  %v744 = vmul.f32 %v498, 0.2
  %v745 = vmul.f32 %v501, 0.2
  %v746 = vmul.f32 %v506, 0.2
  %v747 = vmul.f32 %v509, 0.2
  %v748 = vmul.f32 %v514, 0.2
  %v749 = vmul.f32 %v517, 0.2
  %v750 = vmul.f32 %v522, 0.2
  %v751 = vmul.f32 %v525, 0.2
  %v752 = vmul.f32 %v530, 0.2
  %v753 = vmul.f32 %v533, 0.2
  %v754 = vmul.f32 %v538, 0.2
  %v755 = vmul.f32 %v541, 0.2
  %v756 = vmul.f32 %v546, 0.2
  %v757 = vmul.f32 %v549, 0.2
  %v758 = vmul.f32 %v554, 0.2
  %v759 = vmul.f32 %v557, 0.2
  %v760 = vmul.f32 %v562, 0.2
  %v761 = vmul.f32 %v565, 0.2
  %v762 = vmul.f32 %v570, 0.2
  %v763 = vmul.f32 %v573, 0.2
  %v764 = vmul.f32 %v578, 0.2
  %v765 = vmul.f32 %v581, 0.2
  %v766 = vmul.f32 %v586, 0.2
  %v767 = vmul.f32 %v589, 0.2
  %v768 = vmul.f32 %v594, 0.2
  %v769 = vmul.f32 %v597, 0.2
  %v770 = vmul.f32 %v602, 0.2
  %v771 = vmul.f32 %v605, 0.2
  %v772 = vmul.f32 %v610, 0.2
  %v773 = vmul.f32 %v613, 0.2
  %v774 = vmul.f32 %v618, 0.2
  %v775 = vmul.f32 %v621, 0.2
  %v776 = vmul.f32 %v626, 0.2
  %v777 = vmul.f32 %v629, 0.2
  %v778 = vmul.f32 %v634, 0.2
  %v779 = vmul.f32 %v637, 0.2
  %v780 = vmul.f32 %v642, 0.2
  %v781 = vmul.f32 %v645, 0.2
  %v782 = vmul.f32 %v650, 0.2
  %v783 = vmul.f32 %v653, 0.2
  %v784 = vsel %vm656, %v402, %v720
  %v785 = vsel %vm657, %v405, %v721
  %v786 = vsel %vm658, %v410, %v722
  %v787 = vsel %vm659, %v413, %v723
  %v788 = vsel %vm660, %v418, %v724
  %v789 = vsel %vm661, %v421, %v725
  %v790 = vsel %vm662, %v426, %v726
  %v791 = vsel %vm663, %v429, %v727
  %v792 = vsel %vm664, %v434, %v728
  %v793 = vsel %vm665, %v437, %v729
  %v794 = vsel %vm666, %v442, %v730
  %v795 = vsel %vm667, %v445, %v731
  %v796 = vsel %vm668, %v450, %v732
  %v797 = vsel %vm669, %v453, %v733
  %v798 = vsel %vm670, %v458, %v734
  %v799 = vsel %vm671, %v461, %v735
  %v800 = vsel %vm672, %v466, %v736
  %v801 = vsel %vm673, %v469, %v737
  %v802 = vsel %vm674, %v474, %v738
  %v803 = vsel %vm675, %v477, %v739
  %v804 = vsel %vm676, %v482, %v740
  %v805 = vsel %vm677, %v485, %v741
  %v806 = vsel %vm678, %v490, %v742
  %v807 = vsel %vm679, %v493, %v743
  %v808 = vsel %vm680, %v498, %v744
  %v809 = vsel %vm681, %v501, %v745
  %v810 = vsel %vm682, %v506, %v746
  %v811 = vsel %vm683, %v509, %v747
  %v812 = vsel %vm684, %v514, %v748
  %v813 = vsel %vm685, %v517, %v749
  %v814 = vsel %vm686, %v522, %v750
  %v815 = vsel %vm687, %v525, %v751
  %v816 = vsel %vm688, %v530, %v752
  %v817 = vsel %vm689, %v533, %v753
  %v818 = vsel %vm690, %v538, %v754
  %v819 = vsel %vm691, %v541, %v755
  %v820 = vsel %vm692, %v546, %v756
  %v821 = vsel %vm693, %v549, %v757
  %v822 = vsel %vm694, %v554, %v758
  %v823 = vsel %vm695, %v557, %v759
  %v824 = vsel %vm696, %v562, %v760
  %v825 = vsel %vm697, %v565, %v761
  %v826 = vsel %vm698, %v570, %v762
  %v827 = vsel %vm699, %v573, %v763
  %v828 = vsel %vm700, %v578, %v764
  %v829 = vsel %vm701, %v581, %v765
  %v830 = vsel %vm702, %v586, %v766
  %v831 = vsel %vm703, %v589, %v767
  %v832 = vsel %vm704, %v594, %v768
  %v833 = vsel %vm705, %v597, %v769
  %v834 = vsel %vm706, %v602, %v770
  %v835 = vsel %vm707, %v605, %v771
  %v836 = vsel %vm708, %v610, %v772
  %v837 = vsel %vm709, %v613, %v773
  %v838 = vsel %vm710, %v618, %v774
  %v839 = vsel %vm711, %v621, %v775
  %v840 = vsel %vm712, %v626, %v776
  %v841 = vsel %vm713, %v629, %v777
  %v842 = vsel %vm714, %v634, %v778
  %v843 = vsel %vm715, %v637, %v779
  %v844 = vsel %vm716, %v642, %v780
  %v845 = vsel %vm717, %v645, %v781
  %v846 = vsel %vm718, %v650, %v782
  %v847 = vsel %vm719, %v653, %v783
  %v848 = vpack.c.bf16 %v785, %v784
  %v849 = vpack.c.bf16 %v787, %v786
  %v850 = vpack.c.bf16 %v789, %v788
  %v851 = vpack.c.bf16 %v791, %v790
  %v852 = vpack.c.bf16 %v793, %v792
  %v853 = vpack.c.bf16 %v795, %v794
  %v854 = vpack.c.bf16 %v797, %v796
  %v855 = vpack.c.bf16 %v799, %v798
  %v856 = vpack.c.bf16 %v801, %v800
  %v857 = vpack.c.bf16 %v803, %v802
  %v858 = vpack.c.bf16 %v805, %v804
  %v859 = vpack.c.bf16 %v807, %v806
  %v860 = vpack.c.bf16 %v809, %v808
  %v861 = vpack.c.bf16 %v811, %v810
  %v862 = vpack.c.bf16 %v813, %v812
  %v863 = vpack.c.bf16 %v815, %v814
  %v864 = vpack.c.bf16 %v817, %v816
  %v865 = vpack.c.bf16 %v819, %v818
  %v866 = vpack.c.bf16 %v821, %v820
  %v867 = vpack.c.bf16 %v823, %v822
  %v868 = vpack.c.bf16 %v825, %v824
  %v869 = vpack.c.bf16 %v827, %v826
  %v870 = vpack.c.bf16 %v829, %v828
  %v871 = vpack.c.bf16 %v831, %v830
  %v872 = vpack.c.bf16 %v833, %v832
  %v873 = vpack.c.bf16 %v835, %v834
  %v874 = vpack.c.bf16 %v837, %v836
  %v875 = vpack.c.bf16 %v839, %v838
  %v876 = vpack.c.bf16 %v841, %v840
  %v877 = vpack.c.bf16 %v843, %v842
  %v878 = vpack.c.bf16 %v845, %v844
  %v879 = vpack.c.bf16 %v847, %v846
  %v912 = vunpack.c.l.b16 %v848
  %v913 = vunpack.c.h.b16 %v848
  %v914 = vunpack.c.l.b16 %v849
  %v915 = vunpack.c.h.b16 %v849
  %v916 = vunpack.c.l.b16 %v850
  %v917 = vunpack.c.h.b16 %v850
  %v918 = vunpack.c.l.b16 %v851
  %v919 = vunpack.c.h.b16 %v851
  %v920 = vunpack.c.l.b16 %v852
  %v921 = vunpack.c.h.b16 %v852
  %v922 = vunpack.c.l.b16 %v853
  %v923 = vunpack.c.h.b16 %v853
  %v924 = vunpack.c.l.b16 %v854
  %v925 = vunpack.c.h.b16 %v854
  %v926 = vunpack.c.l.b16 %v855
  %v927 = vunpack.c.h.b16 %v855
  %v928 = vunpack.c.l.b16 %v856
  %v929 = vunpack.c.h.b16 %v856
  %v930 = vunpack.c.l.b16 %v857
  %v931 = vunpack.c.h.b16 %v857
  %v932 = vunpack.c.l.b16 %v858
  %v933 = vunpack.c.h.b16 %v858
  %v934 = vunpack.c.l.b16 %v859
  %v935 = vunpack.c.h.b16 %v859
  %v936 = vunpack.c.l.b16 %v860
  %v937 = vunpack.c.h.b16 %v860
  %v938 = vunpack.c.l.b16 %v861
  %v939 = vunpack.c.h.b16 %v861
  %v940 = vunpack.c.l.b16 %v862
  %v941 = vunpack.c.h.b16 %v862
  %v942 = vunpack.c.l.b16 %v863
  %v943 = vunpack.c.h.b16 %v863
  %v944 = vunpack.c.l.b16 %v864
  %v945 = vunpack.c.h.b16 %v864
  %v946 = vunpack.c.l.b16 %v865
  %v947 = vunpack.c.h.b16 %v865
  %v948 = vunpack.c.l.b16 %v866
  %v949 = vunpack.c.h.b16 %v866
  %v950 = vunpack.c.l.b16 %v867
  %v951 = vunpack.c.h.b16 %v867
  %v952 = vunpack.c.l.b16 %v868
  %v953 = vunpack.c.h.b16 %v868
  %v954 = vunpack.c.l.b16 %v869
  %v955 = vunpack.c.h.b16 %v869
  %v956 = vunpack.c.l.b16 %v870
  %v957 = vunpack.c.h.b16 %v870
  %v958 = vunpack.c.l.b16 %v871
  %v959 = vunpack.c.h.b16 %v871
  %v960 = vunpack.c.l.b16 %v872
  %v961 = vunpack.c.h.b16 %v872
  %v962 = vunpack.c.l.b16 %v873
  %v963 = vunpack.c.h.b16 %v873
  %v964 = vunpack.c.l.b16 %v874
  %v965 = vunpack.c.h.b16 %v874
  %v966 = vunpack.c.l.b16 %v875
  %v967 = vunpack.c.h.b16 %v875
  %v968 = vunpack.c.l.b16 %v876
  %v969 = vunpack.c.h.b16 %v876
  %v970 = vunpack.c.l.b16 %v877
  %v971 = vunpack.c.h.b16 %v877
  %v972 = vunpack.c.l.b16 %v878
  %v973 = vunpack.c.h.b16 %v878
  %v974 = vunpack.c.l.b16 %v879
  %v975 = vunpack.c.h.b16 %v879
  %v976 = vpack.c.b16 %v912, %v912
  %v977 = vpack.c.b16 %v913, %v913
  %v978 = vpack.c.b16 %v914, %v914
  %v979 = vpack.c.b16 %v915, %v915
  %v980 = vpack.c.b16 %v916, %v916
  %v981 = vpack.c.b16 %v917, %v917
  %v982 = vpack.c.b16 %v918, %v918
  %v983 = vpack.c.b16 %v919, %v919
  %v984 = vpack.c.b16 %v920, %v920
  %v985 = vpack.c.b16 %v921, %v921
  %v986 = vpack.c.b16 %v922, %v922
  %v987 = vpack.c.b16 %v923, %v923
  %v988 = vpack.c.b16 %v924, %v924
  %v989 = vpack.c.b16 %v925, %v925
  %v990 = vpack.c.b16 %v926, %v926
  %v991 = vpack.c.b16 %v927, %v927
  %v992 = vpack.c.b16 %v928, %v928
  %v993 = vpack.c.b16 %v929, %v929
  %v994 = vpack.c.b16 %v930, %v930
  %v995 = vpack.c.b16 %v931, %v931
  %v996 = vpack.c.b16 %v932, %v932
  %v997 = vpack.c.b16 %v933, %v933
  %v998 = vpack.c.b16 %v934, %v934
  %v999 = vpack.c.b16 %v935, %v935
  %v1000 = vpack.c.b16 %v936, %v936
  %v1001 = vpack.c.b16 %v937, %v937
  %v1002 = vpack.c.b16 %v938, %v938
  %v1003 = vpack.c.b16 %v939, %v939
  %v1004 = vpack.c.b16 %v940, %v940
  %v1005 = vpack.c.b16 %v941, %v941
  %v1006 = vpack.c.b16 %v942, %v942
  %v1007 = vpack.c.b16 %v943, %v943
  %v1008 = vpack.c.b16 %v944, %v944
  %v1009 = vpack.c.b16 %v945, %v945
  %v1010 = vpack.c.b16 %v946, %v946
  %v1011 = vpack.c.b16 %v947, %v947
  %v1012 = vpack.c.b16 %v948, %v948
  %v1013 = vpack.c.b16 %v949, %v949
  %v1014 = vpack.c.b16 %v950, %v950
  %v1015 = vpack.c.b16 %v951, %v951
  %v1016 = vpack.c.b16 %v952, %v952
  %v1017 = vpack.c.b16 %v953, %v953
  %v1018 = vpack.c.b16 %v954, %v954
  %v1019 = vpack.c.b16 %v955, %v955
  %v1020 = vpack.c.b16 %v956, %v956
  %v1021 = vpack.c.b16 %v957, %v957
  %v1022 = vpack.c.b16 %v958, %v958
  %v1023 = vpack.c.b16 %v959, %v959
  %v1024 = vpack.c.b16 %v960, %v960
  %v1025 = vpack.c.b16 %v961, %v961
  %v1026 = vpack.c.b16 %v962, %v962
  %v1027 = vpack.c.b16 %v963, %v963
  %v1028 = vpack.c.b16 %v964, %v964
  %v1029 = vpack.c.b16 %v965, %v965
  %v1030 = vpack.c.b16 %v966, %v966
  %v1031 = vpack.c.b16 %v967, %v967
  %v1032 = vpack.c.b16 %v968, %v968
  %v1033 = vpack.c.b16 %v969, %v969
  %v1034 = vpack.c.b16 %v970, %v970
  %v1035 = vpack.c.b16 %v971, %v971
  %v1036 = vpack.c.b16 %v972, %v972
  %v1037 = vpack.c.b16 %v973, %v973
  %v1038 = vpack.c.b16 %v974, %v974
  %v1039 = vpack.c.b16 %v975, %v975
  %1104 = vst [vmem:[%s3] sm:$0xf] %v976
  %1105 = vst [vmem:[%s3 + $0x4] sm:$0xf] %v977
  %1106 = vst [vmem:[%s3 + $0x8] sm:$0xf] %v978
  %1107 = vst [vmem:[%s3 + $0xc] sm:$0xf] %v979
  %1108 = vst [vmem:[%s3 + $0x10] sm:$0xf] %v980
  %1109 = vst [vmem:[%s3 + $0x14] sm:$0xf] %v981
  %1110 = vst [vmem:[%s3 + $0x18] sm:$0xf] %v982
  %1111 = vst [vmem:[%s3 + $0x1c] sm:$0xf] %v983
  %1112 = vst [vmem:[%s3 + $0x20] sm:$0xf] %v984
  %1113 = vst [vmem:[%s3 + $0x24] sm:$0xf] %v985
  %1114 = vst [vmem:[%s3 + $0x28] sm:$0xf] %v986
  %1115 = vst [vmem:[%s3 + $0x2c] sm:$0xf] %v987
  %1116 = vst [vmem:[%s3 + $0x30] sm:$0xf] %v988
  %1117 = vst [vmem:[%s3 + $0x34] sm:$0xf] %v989
  %1118 = vst [vmem:[%s3 + $0x38] sm:$0xf] %v990
  %1119 = vst [vmem:[%s3 + $0x3c] sm:$0xf] %v991
  %1120 = vst [vmem:[%s3 + $0x40] sm:$0xf] %v992
  %1121 = vst [vmem:[%s3 + $0x44] sm:$0xf] %v993
  %1122 = vst [vmem:[%s3 + $0x48] sm:$0xf] %v994
  %1123 = vst [vmem:[%s3 + $0x4c] sm:$0xf] %v995
  %1124 = vst [vmem:[%s3 + $0x50] sm:$0xf] %v996
  %1125 = vst [vmem:[%s3 + $0x54] sm:$0xf] %v997
  %1126 = vst [vmem:[%s3 + $0x58] sm:$0xf] %v998
  %1127 = vst [vmem:[%s3 + $0x5c] sm:$0xf] %v999
  %1128 = vst [vmem:[%s3 + $0x60] sm:$0xf] %v1000
  %1129 = vst [vmem:[%s3 + $0x64] sm:$0xf] %v1001
  %1130 = vst [vmem:[%s3 + $0x68] sm:$0xf] %v1002
  %1131 = vst [vmem:[%s3 + $0x6c] sm:$0xf] %v1003
  %1132 = vst [vmem:[%s3 + $0x70] sm:$0xf] %v1004
  %1133 = vst [vmem:[%s3 + $0x74] sm:$0xf] %v1005
  %1134 = vst [vmem:[%s3 + $0x78] sm:$0xf] %v1006
  %1135 = vst [vmem:[%s3 + $0x7c] sm:$0xf] %v1007
  %1136 = vst [vmem:[%s3 + $0x80] sm:$0xf] %v1008
  %1137 = vst [vmem:[%s3 + $0x84] sm:$0xf] %v1009
  %1138 = vst [vmem:[%s3 + $0x88] sm:$0xf] %v1010
  %1139 = vst [vmem:[%s3 + $0x8c] sm:$0xf] %v1011
  %1140 = vst [vmem:[%s3 + $0x90] sm:$0xf] %v1012
  %1141 = vst [vmem:[%s3 + $0x94] sm:$0xf] %v1013
  %1142 = vst [vmem:[%s3 + $0x98] sm:$0xf] %v1014
  %1143 = vst [vmem:[%s3 + $0x9c] sm:$0xf] %v1015
  %1144 = vst [vmem:[%s3 + $0xa0] sm:$0xf] %v1016
  %1145 = vst [vmem:[%s3 + $0xa4] sm:$0xf] %v1017
  %1146 = vst [vmem:[%s3 + $0xa8] sm:$0xf] %v1018
  %1147 = vst [vmem:[%s3 + $0xac] sm:$0xf] %v1019
  %1148 = vst [vmem:[%s3 + $0xb0] sm:$0xf] %v1020
  %1149 = vst [vmem:[%s3 + $0xb4] sm:$0xf] %v1021
  %1150 = vst [vmem:[%s3 + $0xb8] sm:$0xf] %v1022
  %1151 = vst [vmem:[%s3 + $0xbc] sm:$0xf] %v1023
  %1152 = vst [vmem:[%s3 + $0xc0] sm:$0xf] %v1024
  %1153 = vst [vmem:[%s3 + $0xc4] sm:$0xf] %v1025
  %1154 = vst [vmem:[%s3 + $0xc8] sm:$0xf] %v1026
  %1155 = vst [vmem:[%s3 + $0xcc] sm:$0xf] %v1027
  %1156 = vst [vmem:[%s3 + $0xd0] sm:$0xf] %v1028
  %1157 = vst [vmem:[%s3 + $0xd4] sm:$0xf] %v1029
  %1158 = vst [vmem:[%s3 + $0xd8] sm:$0xf] %v1030
  %1159 = vst [vmem:[%s3 + $0xdc] sm:$0xf] %v1031
  %1160 = vst [vmem:[%s3 + $0xe0] sm:$0xf] %v1032
  %1161 = vst [vmem:[%s3 + $0xe4] sm:$0xf] %v1033
  %1162 = vst [vmem:[%s3 + $0xe8] sm:$0xf] %v1034
  %1163 = vst [vmem:[%s3 + $0xec] sm:$0xf] %v1035
  %1164 = vst [vmem:[%s3 + $0xf0] sm:$0xf] %v1036
  %1165 = vst [vmem:[%s3 + $0xf4] sm:$0xf] %v1037
  %1166 = vst [vmem:[%s3 + $0xf8] sm:$0xf] %v1038
  %1167 = vst [vmem:[%s3 + $0xfc] sm:$0xf] %v1039
  // Predicated region
  $region14: #{_lambda_.8} parent=0 // pred_check
    _
  $region15: #{_lambda_.8} parent=0 // pred_check_branch
    %1169 = sbr.rel (0) target = $region17
  $region16: #{_lambda_.8} parent=0 // pred_region
    _
  $region17: #{_lambda_.8} parent=0 // pred_fallthru
    _
  // Predicated region
  $region18: #{_lambda_.8} parent=0 // pred_check
    _
  $region19: #{_lambda_.8} parent=0 // pred_check_branch
    %1171 = sbr.rel (0) target = $region21
  $region20: #{_lambda_.8} parent=0 // pred_region
    _
  $region21: #{_lambda_.8} parent=0 // pred_fallthru
    _

// kernel: _lambda_.10
$region0: #{_lambda_.10}
  #allocation0 [shape = 'u32[]', space=smem, size = 0x4, offset = 0x4, fixed_abs, tag = 'smem constant byte address 0x4 - core index']
  #allocation1 [shape = 'u32[144,128]{1,0:T(1,128)}', space=vmem, size = 0x12000, scoped, tag = 'internal scratch']
  %s0 = inlined_call_operand.vmem [shape: bf16[128,128], index: 0, kind: input, shape index: {}]
  %s1 = inlined_call_operand.vmem [shape: f32[1,128], index: 1, kind: input, shape index: {}]
  %s2 = inlined_call_operand.vmem [shape: f32[1,128], index: 2, kind: input, shape index: {}]
  %s3 = inlined_call_operand.vmem [shape: bf16[128,128], index: 3, kind: output, shape index: {}]
  %s4 = sld [smem:[#allocation0]]
  $region22: #{_lambda_.10} parent=0
    _
  %s6 = ssub.s32 1, %s4
  %s7 = scalar_select 0, %s6, %s4
  // Predicated region
  $region2: #{_lambda_.10} parent=0 // pred_check
    _
  $region3: #{_lambda_.10} parent=0 // pred_check_branch
    %9 = sbr.rel (0) target = $region5
  $region4: #{_lambda_.10} parent=0 // pred_region
    _
  $region5: #{_lambda_.10} parent=0 // pred_fallthru
    _
  // Predicated region
  $region6: #{_lambda_.10} parent=0 // pred_check
    _
  $region7: #{_lambda_.10} parent=0 // pred_check_branch
    %11 = sbr.rel (0) target = $region9
  $region8: #{_lambda_.10} parent=0 // pred_region
    _
  $region9: #{_lambda_.10} parent=0 // pred_fallthru
    _
  // Predicated region
  $region10: #{_lambda_.10} parent=0 // pred_check
    _
  $region11: #{_lambda_.10} parent=0 // pred_check_branch
    %13 = sbr.rel (0) target = $region13
  $region12: #{_lambda_.10} parent=0 // pred_region
    _
  $region13: #{_lambda_.10} parent=0 // pred_fallthru
    _
  %v14 = vld [vmem:[%s0] sm:$0xf]
  %v15 = vld [vmem:[%s0 + $0x4] sm:$0xf]
  %v16 = vld [vmem:[%s0 + $0x8] sm:$0xf]
  %v17 = vld [vmem:[%s0 + $0xc] sm:$0xf]
  %v18 = vld [vmem:[%s0 + $0x10] sm:$0xf]
  %v19 = vld [vmem:[%s0 + $0x14] sm:$0xf]
  %v20 = vld [vmem:[%s0 + $0x18] sm:$0xf]
  %v21 = vld [vmem:[%s0 + $0x1c] sm:$0xf]
  %v22 = vld [vmem:[%s0 + $0x20] sm:$0xf]
  %v23 = vld [vmem:[%s0 + $0x24] sm:$0xf]
  %v24 = vld [vmem:[%s0 + $0x28] sm:$0xf]
  %v25 = vld [vmem:[%s0 + $0x2c] sm:$0xf]
  %v26 = vld [vmem:[%s0 + $0x30] sm:$0xf]
  %v27 = vld [vmem:[%s0 + $0x34] sm:$0xf]
  %v28 = vld [vmem:[%s0 + $0x38] sm:$0xf]
  %v29 = vld [vmem:[%s0 + $0x3c] sm:$0xf]
  %v30 = vunpack.c.l.bf16 %v14
  %v31 = vunpack.c.l.bf16 %v15
  %v32 = vunpack.c.l.bf16 %v16
  %v33 = vunpack.c.l.bf16 %v17
  %v34 = vunpack.c.l.bf16 %v18
  %v35 = vunpack.c.l.bf16 %v19
  %v36 = vunpack.c.l.bf16 %v20
  %v37 = vunpack.c.l.bf16 %v21
  %v38 = vunpack.c.l.bf16 %v22
  %v39 = vunpack.c.l.bf16 %v23
  %v40 = vunpack.c.l.bf16 %v24
  %v41 = vunpack.c.l.bf16 %v25
  %v42 = vunpack.c.l.bf16 %v26
  %v43 = vunpack.c.l.bf16 %v27
  %v44 = vunpack.c.l.bf16 %v28
  %v45 = vunpack.c.l.bf16 %v29
  %v46 = vld [vmem:[%s1] sm:$0x1]
  %v48 = vlaneseq
  %v49 = vshrl.u32 %v48, 7
  %v50 = vsub.s32 0, %v49
  %v51 = vrot.slane %v46, %v50
  %v53 = vmul.f32 %v30, %v51
  %v54 = vmul.f32 %v31, %v51
  %v55 = vmul.f32 %v32, %v51
  %v56 = vmul.f32 %v33, %v51
  %v57 = vmul.f32 %v34, %v51
  %v58 = vmul.f32 %v35, %v51
  %v59 = vmul.f32 %v36, %v51
  %v60 = vmul.f32 %v37, %v51
  %v61 = vmul.f32 %v38, %v51
  %v62 = vmul.f32 %v39, %v51
  %v63 = vmul.f32 %v40, %v51
  %v64 = vmul.f32 %v41, %v51
  %v65 = vmul.f32 %v42, %v51
  %v66 = vmul.f32 %v43, %v51
  %v67 = vmul.f32 %v44, %v51
  %v68 = vmul.f32 %v45, %v51
  %v69 = vld [vmem:[%s2] sm:$0x1]
  %v71 = vlaneseq
  %v72 = vshrl.u32 %v71, 7
  %v73 = vsub.s32 0, %v72
  %v74 = vrot.slane %v69, %v73
  %v76 = vadd.f32 %v53, %v74
  %v77 = vadd.f32 %v54, %v74
  %v78 = vadd.f32 %v55, %v74
  %v79 = vadd.f32 %v56, %v74
  %v80 = vadd.f32 %v57, %v74
  %v81 = vadd.f32 %v58, %v74
  %v82 = vadd.f32 %v59, %v74
  %v83 = vadd.f32 %v60, %v74
  %v84 = vadd.f32 %v61, %v74
  %v85 = vadd.f32 %v62, %v74
  %v86 = vadd.f32 %v63, %v74
  %v87 = vadd.f32 %v64, %v74
  %v88 = vadd.f32 %v65, %v74
  %v89 = vadd.f32 %v66, %v74
  %v90 = vadd.f32 %v67, %v74
  %v91 = vadd.f32 %v68, %v74
  %vm92 = vcmp.ge.f32.partialorder %v76, 0.0
  %vm93 = vcmp.ge.f32.partialorder %v77, 0.0
  %vm94 = vcmp.ge.f32.partialorder %v78, 0.0
  %vm95 = vcmp.ge.f32.partialorder %v79, 0.0
  %vm96 = vcmp.ge.f32.partialorder %v80, 0.0
  %vm97 = vcmp.ge.f32.partialorder %v81, 0.0
  %vm98 = vcmp.ge.f32.partialorder %v82, 0.0
  %vm99 = vcmp.ge.f32.partialorder %v83, 0.0
  %vm100 = vcmp.ge.f32.partialorder %v84, 0.0
  %vm101 = vcmp.ge.f32.partialorder %v85, 0.0
  %vm102 = vcmp.ge.f32.partialorder %v86, 0.0
  %vm103 = vcmp.ge.f32.partialorder %v87, 0.0
  %vm104 = vcmp.ge.f32.partialorder %v88, 0.0
  %vm105 = vcmp.ge.f32.partialorder %v89, 0.0
  %vm106 = vcmp.ge.f32.partialorder %v90, 0.0
  %vm107 = vcmp.ge.f32.partialorder %v91, 0.0
  %v108 = vmul.f32 %v76, 0.2
  %v109 = vmul.f32 %v77, 0.2
  %v110 = vmul.f32 %v78, 0.2
  %v111 = vmul.f32 %v79, 0.2
  %v112 = vmul.f32 %v80, 0.2
  %v113 = vmul.f32 %v81, 0.2
  %v114 = vmul.f32 %v82, 0.2
  %v115 = vmul.f32 %v83, 0.2
  %v116 = vmul.f32 %v84, 0.2
  %v117 = vmul.f32 %v85, 0.2
  %v118 = vmul.f32 %v86, 0.2
  %v119 = vmul.f32 %v87, 0.2
  %v120 = vmul.f32 %v88, 0.2
  %v121 = vmul.f32 %v89, 0.2
  %v122 = vmul.f32 %v90, 0.2
  %v123 = vmul.f32 %v91, 0.2
  %v124 = vsel %vm92, %v76, %v108
  %v125 = vsel %vm93, %v77, %v109
  %v126 = vsel %vm94, %v78, %v110
  %v127 = vsel %vm95, %v79, %v111
  %v128 = vsel %vm96, %v80, %v112
  %v129 = vsel %vm97, %v81, %v113
  %v130 = vsel %vm98, %v82, %v114
  %v131 = vsel %vm99, %v83, %v115
  %v132 = vsel %vm100, %v84, %v116
  %v133 = vsel %vm101, %v85, %v117
  %v134 = vsel %vm102, %v86, %v118
  %v135 = vsel %vm103, %v87, %v119
  %v136 = vsel %vm104, %v88, %v120
  %v137 = vsel %vm105, %v89, %v121
  %v138 = vsel %vm106, %v90, %v122
  %v139 = vsel %vm107, %v91, %v123
  %v140 = vpack.c.bf16 %v125, %v124
  %v141 = vpack.c.bf16 %v127, %v126
  %v142 = vpack.c.bf16 %v129, %v128
  %v143 = vpack.c.bf16 %v131, %v130
  %v144 = vpack.c.bf16 %v133, %v132
  %v145 = vpack.c.bf16 %v135, %v134
  %v146 = vpack.c.bf16 %v137, %v136
  %v147 = vpack.c.bf16 %v139, %v138
  %v156 = vunpack.c.l.b16 %v140
  %v157 = vunpack.c.h.b16 %v140
  %v158 = vunpack.c.l.b16 %v141
  %v159 = vunpack.c.h.b16 %v141
  %v160 = vunpack.c.l.b16 %v142
  %v161 = vunpack.c.h.b16 %v142
  %v162 = vunpack.c.l.b16 %v143
  %v163 = vunpack.c.h.b16 %v143
  %v164 = vunpack.c.l.b16 %v144
  %v165 = vunpack.c.h.b16 %v144
  %v166 = vunpack.c.l.b16 %v145
  %v167 = vunpack.c.h.b16 %v145
  %v168 = vunpack.c.l.b16 %v146
  %v169 = vunpack.c.h.b16 %v146
  %v170 = vunpack.c.l.b16 %v147
  %v171 = vunpack.c.h.b16 %v147
  %v172 = vpack.c.b16 %v156, %v156
  %v173 = vpack.c.b16 %v157, %v157
  %v174 = vpack.c.b16 %v158, %v158
  %v175 = vpack.c.b16 %v159, %v159
  %v176 = vpack.c.b16 %v160, %v160
  %v177 = vpack.c.b16 %v161, %v161
  %v178 = vpack.c.b16 %v162, %v162
  %v179 = vpack.c.b16 %v163, %v163
  %v180 = vpack.c.b16 %v164, %v164
  %v181 = vpack.c.b16 %v165, %v165
  %v182 = vpack.c.b16 %v166, %v166
  %v183 = vpack.c.b16 %v167, %v167
  %v184 = vpack.c.b16 %v168, %v168
  %v185 = vpack.c.b16 %v169, %v169
  %v186 = vpack.c.b16 %v170, %v170
  %v187 = vpack.c.b16 %v171, %v171
  %204 = vst [vmem:[%s3] sm:$0xf] %v172
  %205 = vst [vmem:[%s3 + $0x4] sm:$0xf] %v173
  %206 = vst [vmem:[%s3 + $0x8] sm:$0xf] %v174
  %207 = vst [vmem:[%s3 + $0xc] sm:$0xf] %v175
  %208 = vst [vmem:[%s3 + $0x10] sm:$0xf] %v176
  %209 = vst [vmem:[%s3 + $0x14] sm:$0xf] %v177
  %210 = vst [vmem:[%s3 + $0x18] sm:$0xf] %v178
  %211 = vst [vmem:[%s3 + $0x1c] sm:$0xf] %v179
  %212 = vst [vmem:[%s3 + $0x20] sm:$0xf] %v180
  %213 = vst [vmem:[%s3 + $0x24] sm:$0xf] %v181
  %214 = vst [vmem:[%s3 + $0x28] sm:$0xf] %v182
  %215 = vst [vmem:[%s3 + $0x2c] sm:$0xf] %v183
  %216 = vst [vmem:[%s3 + $0x30] sm:$0xf] %v184
  %217 = vst [vmem:[%s3 + $0x34] sm:$0xf] %v185
  %218 = vst [vmem:[%s3 + $0x38] sm:$0xf] %v186
  %219 = vst [vmem:[%s3 + $0x3c] sm:$0xf] %v187
  // Predicated region
  $region14: #{_lambda_.10} parent=0 // pred_check
    _
  $region15: #{_lambda_.10} parent=0 // pred_check_branch
    %221 = sbr.rel (0) target = $region17
  $region16: #{_lambda_.10} parent=0 // pred_region
    _
  $region17: #{_lambda_.10} parent=0 // pred_fallthru
    _
  // Predicated region
  $region18: #{_lambda_.10} parent=0 // pred_check
    _
  $region19: #{_lambda_.10} parent=0 // pred_check_branch
    %223 = sbr.rel (0) target = $region21
  $region20: #{_lambda_.10} parent=0 // pred_region
    _
  $region21: #{_lambda_.10} parent=0 // pred_fallthru
    _

// kernel: _lambda_.12
$region0: #{_lambda_.12}
  #allocation0 [shape = 'u32[]', space=smem, size = 0x4, offset = 0x4, fixed_abs, tag = 'smem constant byte address 0x4 - core index']
  #allocation1 [shape = 'u32[144,128]{1,0:T(1,128)}', space=vmem, size = 0x12000, scoped, tag = 'internal scratch']
  %s0 = inlined_call_operand.vmem [shape: bf16[32,128], index: 0, kind: input, shape index: {}]
  %s1 = inlined_call_operand.vmem [shape: f32[1,128], index: 1, kind: input, shape index: {}]
  %s2 = inlined_call_operand.vmem [shape: f32[1,128], index: 2, kind: input, shape index: {}]
  %s3 = inlined_call_operand.vmem [shape: bf16[32,128], index: 3, kind: output, shape index: {}]
  %s4 = sld [smem:[#allocation0]]
  $region22: #{_lambda_.12} parent=0
    _
  %s6 = ssub.s32 1, %s4
  %s7 = scalar_select 0, %s6, %s4
  // Predicated region
  $region2: #{_lambda_.12} parent=0 // pred_check
    _
  $region3: #{_lambda_.12} parent=0 // pred_check_branch
    %9 = sbr.rel (0) target = $region5
  $region4: #{_lambda_.12} parent=0 // pred_region
    _
  $region5: #{_lambda_.12} parent=0 // pred_fallthru
    _
  // Predicated region
  $region6: #{_lambda_.12} parent=0 // pred_check
    _
  $region7: #{_lambda_.12} parent=0 // pred_check_branch
    %11 = sbr.rel (0) target = $region9
  $region8: #{_lambda_.12} parent=0 // pred_region
    _
  $region9: #{_lambda_.12} parent=0 // pred_fallthru
    _
  // Predicated region
  $region10: #{_lambda_.12} parent=0 // pred_check
    _
  $region11: #{_lambda_.12} parent=0 // pred_check_branch
    %13 = sbr.rel (0) target = $region13
  $region12: #{_lambda_.12} parent=0 // pred_region
    _
  $region13: #{_lambda_.12} parent=0 // pred_fallthru
    _
  %v14 = vld [vmem:[%s0] sm:$0xf]
  %v15 = vld [vmem:[%s0 + $0x4] sm:$0xf]
  %v16 = vld [vmem:[%s0 + $0x8] sm:$0xf]
  %v17 = vld [vmem:[%s0 + $0xc] sm:$0xf]
  %v18 = vunpack.c.l.bf16 %v14
  %v19 = vunpack.c.l.bf16 %v15
  %v20 = vunpack.c.l.bf16 %v16
  %v21 = vunpack.c.l.bf16 %v17
  %v22 = vld [vmem:[%s1] sm:$0x1]
  %v24 = vlaneseq
  %v25 = vshrl.u32 %v24, 7
  %v26 = vsub.s32 0, %v25
  %v27 = vrot.slane %v22, %v26
  %v29 = vmul.f32 %v18, %v27
  %v30 = vmul.f32 %v19, %v27
  %v31 = vmul.f32 %v20, %v27
  %v32 = vmul.f32 %v21, %v27
  %v33 = vld [vmem:[%s2] sm:$0x1]
  %v35 = vlaneseq
  %v36 = vshrl.u32 %v35, 7
  %v37 = vsub.s32 0, %v36
  %v38 = vrot.slane %v33, %v37
  %v40 = vadd.f32 %v29, %v38
  %v41 = vadd.f32 %v30, %v38
  %v42 = vadd.f32 %v31, %v38
  %v43 = vadd.f32 %v32, %v38
  %vm44 = vcmp.ge.f32.partialorder %v40, 0.0
  %vm45 = vcmp.ge.f32.partialorder %v41, 0.0
  %vm46 = vcmp.ge.f32.partialorder %v42, 0.0
  %vm47 = vcmp.ge.f32.partialorder %v43, 0.0
  %v48 = vmul.f32 %v40, 0.2
  %v49 = vmul.f32 %v41, 0.2
  %v50 = vmul.f32 %v42, 0.2
  %v51 = vmul.f32 %v43, 0.2
  %v52 = vsel %vm44, %v40, %v48
  %v53 = vsel %vm45, %v41, %v49
  %v54 = vsel %vm46, %v42, %v50
  %v55 = vsel %vm47, %v43, %v51
  %v56 = vpack.c.bf16 %v53, %v52
  %v57 = vpack.c.bf16 %v55, %v54
  %v60 = vunpack.c.l.b16 %v56
  %v61 = vunpack.c.h.b16 %v56
  %v62 = vunpack.c.l.b16 %v57
  %v63 = vunpack.c.h.b16 %v57
  %v64 = vpack.c.b16 %v60, %v60
  %v65 = vpack.c.b16 %v61, %v61
  %v66 = vpack.c.b16 %v62, %v62
  %v67 = vpack.c.b16 %v63, %v63
  %72 = vst [vmem:[%s3] sm:$0xf] %v64
  %73 = vst [vmem:[%s3 + $0x4] sm:$0xf] %v65
  %74 = vst [vmem:[%s3 + $0x8] sm:$0xf] %v66
  %75 = vst [vmem:[%s3 + $0xc] sm:$0xf] %v67
  // Predicated region
  $region14: #{_lambda_.12} parent=0 // pred_check
    _
  $region15: #{_lambda_.12} parent=0 // pred_check_branch
    %77 = sbr.rel (0) target = $region17
  $region16: #{_lambda_.12} parent=0 // pred_region
    _
  $region17: #{_lambda_.12} parent=0 // pred_fallthru
    _
  // Predicated region
  $region18: #{_lambda_.12} parent=0 // pred_check
    _
  $region19: #{_lambda_.12} parent=0 // pred_check_branch
    %79 = sbr.rel (0) target = $region21
  $region20: #{_lambda_.12} parent=0 // pred_region
    _
  $region21: #{_lambda_.12} parent=0 // pred_fallthru
    _

// kernel: _lambda_.11
$region0: #{_lambda_.11}
  #allocation0 [shape = 'u32[]', space=smem, size = 0x4, offset = 0x4, fixed_abs, tag = 'smem constant byte address 0x4 - core index']
  #allocation1 [shape = 'u32[144,128]{1,0:T(1,128)}', space=vmem, size = 0x12000, scoped, tag = 'internal scratch']
  %s0 = inlined_call_operand.vmem [shape: bf16[32,256], index: 0, kind: input, shape index: {}]
  %s1 = inlined_call_operand.vmem [shape: bf16[256,128], index: 1, kind: input, shape index: {}]
  %s2 = inlined_call_operand.vmem [shape: bf16[32,128], index: 2, kind: output, shape index: {0}]
  %s3 = inlined_call_operand.vmem [shape: f32[1,2,128], index: 3, kind: output, shape index: {1}]
  %4 = xla_tuple %s2, %s3
  %s5 = sld [smem:[#allocation0]]
  $region26: #{_lambda_.11} parent=0
    _
  %s7 = ssub.s32 1, %s5
  %s8 = scalar_select 0, %s7, %s5
  // Predicated region
  $region2: #{_lambda_.11} parent=0 // pred_check
    _
  $region3: #{_lambda_.11} parent=0 // pred_check_branch
    %10 = sbr.rel (0) target = $region5
  $region4: #{_lambda_.11} parent=0 // pred_region
    _
  $region5: #{_lambda_.11} parent=0 // pred_fallthru
    _
  // Predicated region
  $region6: #{_lambda_.11} parent=0 // pred_check
    _
  $region7: #{_lambda_.11} parent=0 // pred_check_branch
    %12 = sbr.rel (0) target = $region9
  $region8: #{_lambda_.11} parent=0 // pred_region
    _
  $region9: #{_lambda_.11} parent=0 // pred_fallthru
    _
  %v14 = vld [vmem:[%s0] sm:$0xff]
  %v15 = vld [vmem:[%s0 + $0x8] sm:$0xff]
  %v16 = vld [vmem:[%s0 + $0x10] sm:$0xff]
  %v17 = vld [vmem:[%s0 + $0x18] sm:$0xff]
  %v18 = vld [vmem:[%s1] sm:$0xf]
  %v19 = vld [vmem:[%s1 + $0x4] sm:$0xf]
  %v20 = vld [vmem:[%s1 + $0x8] sm:$0xf]
  %v21 = vld [vmem:[%s1 + $0xc] sm:$0xf]
  %v22 = vld [vmem:[%s1 + $0x10] sm:$0xf]
  %v23 = vld [vmem:[%s1 + $0x14] sm:$0xf]
  %v24 = vld [vmem:[%s1 + $0x18] sm:$0xf]
  %v25 = vld [vmem:[%s1 + $0x1c] sm:$0xf]
  %v26 = vld [vmem:[%s1 + $0x20] sm:$0xf]
  %v27 = vld [vmem:[%s1 + $0x24] sm:$0xf]
  %v28 = vld [vmem:[%s1 + $0x28] sm:$0xf]
  %v29 = vld [vmem:[%s1 + $0x2c] sm:$0xf]
  %v30 = vld [vmem:[%s1 + $0x30] sm:$0xf]
  %v31 = vld [vmem:[%s1 + $0x34] sm:$0xf]
  %v32 = vld [vmem:[%s1 + $0x38] sm:$0xf]
  %v33 = vld [vmem:[%s1 + $0x3c] sm:$0xf]
  %v34 = vld [vmem:[%s1 + $0x40] sm:$0xf]
  %v35 = vld [vmem:[%s1 + $0x44] sm:$0xf]
  %v36 = vld [vmem:[%s1 + $0x48] sm:$0xf]
  %v37 = vld [vmem:[%s1 + $0x4c] sm:$0xf]
  %v38 = vld [vmem:[%s1 + $0x50] sm:$0xf]
  %v39 = vld [vmem:[%s1 + $0x54] sm:$0xf]
  %v40 = vld [vmem:[%s1 + $0x58] sm:$0xf]
  %v41 = vld [vmem:[%s1 + $0x5c] sm:$0xf]
  %v42 = vld [vmem:[%s1 + $0x60] sm:$0xf]
  %v43 = vld [vmem:[%s1 + $0x64] sm:$0xf]
  %v44 = vld [vmem:[%s1 + $0x68] sm:$0xf]
  %v45 = vld [vmem:[%s1 + $0x6c] sm:$0xf]
  %v46 = vld [vmem:[%s1 + $0x70] sm:$0xf]
  %v47 = vld [vmem:[%s1 + $0x74] sm:$0xf]
  %v48 = vld [vmem:[%s1 + $0x78] sm:$0xf]
  %v49 = vld [vmem:[%s1 + $0x7c] sm:$0xf]
  %v54 = vunpack.c.l.b16 %v14
  %v55 = vunpack.c.h.b16 %v14
  %v56 = vunpack.c.l.b16 %v15
  %v57 = vunpack.c.h.b16 %v15
  %v58 = vunpack.c.l.b16 %v16
  %v59 = vunpack.c.h.b16 %v16
  %v60 = vunpack.c.l.b16 %v17
  %v61 = vunpack.c.h.b16 %v17
  %v62 = vpack.c.b16 %v56, %v54
  %v63 = vpack.c.b16 %v57, %v55
  %v64 = vpack.c.b16 %v60, %v58
  %v65 = vpack.c.b16 %v61, %v59
  %v102 = vunpack.c.l.b16 %v18
  %v103 = vunpack.c.l.b16 %v19
  %v104 = vunpack.c.l.b16 %v20
  %v105 = vunpack.c.l.b16 %v21
  %v106 = vunpack.c.l.b16 %v22
  %v107 = vunpack.c.l.b16 %v23
  %v108 = vunpack.c.l.b16 %v24
  %v109 = vunpack.c.l.b16 %v25
  %v110 = vunpack.c.l.b16 %v26
  %v111 = vunpack.c.l.b16 %v27
  %v112 = vunpack.c.l.b16 %v28
  %v113 = vunpack.c.l.b16 %v29
  %v114 = vunpack.c.l.b16 %v30
  %v115 = vunpack.c.l.b16 %v31
  %v116 = vunpack.c.l.b16 %v32
  %v117 = vunpack.c.l.b16 %v33
  %v118 = vunpack.c.l.b16 %v34
  %v119 = vunpack.c.l.b16 %v35
  %v120 = vunpack.c.l.b16 %v36
  %v121 = vunpack.c.l.b16 %v37
  %v122 = vunpack.c.l.b16 %v38
  %v123 = vunpack.c.l.b16 %v39
  %v124 = vunpack.c.l.b16 %v40
  %v125 = vunpack.c.l.b16 %v41
  %v126 = vunpack.c.l.b16 %v42
  %v127 = vunpack.c.l.b16 %v43
  %v128 = vunpack.c.l.b16 %v44
  %v129 = vunpack.c.l.b16 %v45
  %v130 = vunpack.c.l.b16 %v46
  %v131 = vunpack.c.l.b16 %v47
  %v132 = vunpack.c.l.b16 %v48
  %v133 = vunpack.c.l.b16 %v49
  %v134 = vpack.c.b16 %v103, %v102
  %v135 = vpack.c.b16 %v105, %v104
  %v136 = vpack.c.b16 %v107, %v106
  %v137 = vpack.c.b16 %v109, %v108
  %v138 = vpack.c.b16 %v111, %v110
  %v139 = vpack.c.b16 %v113, %v112
  %v140 = vpack.c.b16 %v115, %v114
  %v141 = vpack.c.b16 %v117, %v116
  %v142 = vpack.c.b16 %v119, %v118
  %v143 = vpack.c.b16 %v121, %v120
  %v144 = vpack.c.b16 %v123, %v122
  %v145 = vpack.c.b16 %v125, %v124
  %v146 = vpack.c.b16 %v127, %v126
  %v147 = vpack.c.b16 %v129, %v128
  %v148 = vpack.c.b16 %v131, %v130
  %v149 = vpack.c.b16 %v133, %v132
  %166 = vmatprep.subr.bf16.mxu0 0
  %167 = vmatpush1.bf16.msra.mxu0 %v134
  %168 = vmatprep.subr.bf16.mxu0 0
  %169 = vmatpush1.bf16.msra.mxu0 %v135
  %170 = vmatprep.subr.bf16.mxu0 0
  %171 = vmatpush1.bf16.msra.mxu0 %v136
  %172 = vmatprep.subr.bf16.mxu0 0
  %173 = vmatpush1.bf16.msra.mxu0 %v137
  %174 = vmatprep.subr.bf16.mxu0 0
  %175 = vmatpush1.bf16.msra.mxu0 %v138
  %176 = vmatprep.subr.bf16.mxu0 0
  %177 = vmatpush1.bf16.msra.mxu0 %v139
  %178 = vmatprep.subr.bf16.mxu0 0
  %179 = vmatpush1.bf16.msra.mxu0 %v140
  %180 = vmatprep.subr.bf16.mxu0 0
  %181 = vmatpush1.bf16.msra.mxu0 %v141
  %182 = vmatprep.subr.bf16.mxu0 0
  %183 = vmatpush1.bf16.msra.mxu0 %v142
  %184 = vmatprep.subr.bf16.mxu0 0
  %185 = vmatpush1.bf16.msra.mxu0 %v143
  %186 = vmatprep.subr.bf16.mxu0 0
  %187 = vmatpush1.bf16.msra.mxu0 %v144
  %188 = vmatprep.subr.bf16.mxu0 0
  %189 = vmatpush1.bf16.msra.mxu0 %v145
  %190 = vmatprep.subr.bf16.mxu0 0
  %191 = vmatpush1.bf16.msra.mxu0 %v146
  %192 = vmatprep.subr.bf16.mxu0 0
  %193 = vmatpush1.bf16.msra.mxu0 %v147
  %194 = vmatprep.subr.bf16.mxu0 0
  %195 = vmatpush1.bf16.msra.mxu0 %v148
  %196 = vmatprep.subr.bf16.mxu0 0
  %197 = vmatpush1.bf16.msra.mxu0 %v149
  %198 = vmatprep.mubr.bf16.mxu0 %v63
  %199 = vmatmul.mubr.bf16.gmra.mrb[0].mxu0 %v62
  %v200 = vpop.f32.mrb[0].mxu0
  %v201 = vadd.f32 0.0, %v200
  %v202 = vpop.f32.mrb[0].mxu0
  %v203 = vpop.f32.mrb[0].mxu0
  %v204 = vadd.f32 0.0, %v203
  %v205 = vpop.f32.mrb[0].mxu0
  %206 = vmatprep.mubr.bf16.mxu0 %v65
  %207 = vmatmul.mubr.bf16.gmra.mrb[0].mxu0 %v64
  %v208 = vpop.f32.mrb[0].mxu0
  %v209 = vadd.f32 0.0, %v208
  %v210 = vpop.f32.mrb[0].mxu0
  %v211 = vpop.f32.mrb[0].mxu0
  %v212 = vadd.f32 0.0, %v211
  %v213 = vpop.f32.mrb[0].mxu0
  %214 = vdwg.mxu0
  %v215 = vpack.c.bf16 %v204, %v201
  %v216 = vpack.c.bf16 %v212, %v209
  %v219 = vunpack.c.l.b16 %v215
  %v220 = vunpack.c.h.b16 %v215
  %v221 = vunpack.c.l.b16 %v216
  %v222 = vunpack.c.h.b16 %v216
  %v223 = vpack.c.b16 %v219, %v219
  %v224 = vpack.c.b16 %v220, %v220
  %v225 = vpack.c.b16 %v221, %v221
  %v226 = vpack.c.b16 %v222, %v222
  %231 = vst [vmem:[%s2] sm:$0xf] %v223
  %232 = vst [vmem:[%s2 + $0x4] sm:$0xf] %v224
  %233 = vst [vmem:[%s2 + $0x8] sm:$0xf] %v225
  %234 = vst [vmem:[%s2 + $0xc] sm:$0xf] %v226
  %v235 = vadd.f32 %v201, %v204
  %v236 = vadd.f32 %v235, %v209
  %v237 = vadd.f32 %v236, %v212
  %v238 = vrot.slane %v237, 4
  %v239 = vadd.f32 %v237, %v238
  %v240 = vrot.slane %v239, 2
  %v241 = vadd.f32 %v239, %v240
  %v242 = vrot.slane %v241, 1
  %v243 = vadd.f32 %v241, %v242
  %v244 = vmul.f32 %v201, %v201
  %v245 = vmul.f32 %v204, %v204
  %v246 = vmul.f32 %v209, %v209
  %v247 = vmul.f32 %v212, %v212
  %v248 = vadd.f32 %v244, %v245
  %v249 = vadd.f32 %v248, %v246
  %v250 = vadd.f32 %v249, %v247
  %v251 = vrot.slane %v250, 4
  %v252 = vadd.f32 %v250, %v251
  %v253 = vrot.slane %v252, 2
  %v254 = vadd.f32 %v252, %v253
  %v255 = vrot.slane %v254, 1
  %v256 = vadd.f32 %v254, %v255
  %vm257 = vcmask 1040384
  %v258 = vsel %vm257, %v243, %v256
  %259 = vst [vmem:[%s3] sm:$0x3] %v258
  // Predicated region
  $region10: #{_lambda_.11} parent=0 // pred_check
    _
  $region11: #{_lambda_.11} parent=0 // pred_check_branch
    %261 = sbr.rel (0) target = $region13
  $region12: #{_lambda_.11} parent=0 // pred_region
    _
  $region13: #{_lambda_.11} parent=0 // pred_fallthru
    _
  // Predicated region
  $region14: #{_lambda_.11} parent=0 // pred_check
    _
  $region15: #{_lambda_.11} parent=0 // pred_check_branch
    %263 = sbr.rel (0) target = $region17
  $region16: #{_lambda_.11} parent=0 // pred_region
    _
  $region17: #{_lambda_.11} parent=0 // pred_fallthru
    _
  // Predicated region
  $region18: #{_lambda_.11} parent=0 // pred_check
    _
  $region19: #{_lambda_.11} parent=0 // pred_check_branch
    %265 = sbr.rel (0) target = $region21
  $region20: #{_lambda_.11} parent=0 // pred_region
    _
  $region21: #{_lambda_.11} parent=0 // pred_fallthru
    _
  // Predicated region
  $region22: #{_lambda_.11} parent=0 // pred_check
    _
  $region23: #{_lambda_.11} parent=0 // pred_check_branch
    %267 = sbr.rel (0) target = $region25
  $region24: #{_lambda_.11} parent=0 // pred_region
    _
  $region25: #{_lambda_.11} parent=0 // pred_fallthru
    _

// kernel: _lambda_.13
$region0: #{_lambda_.13}
  #allocation0 [shape = 'u32[]', space=smem, size = 0x4, offset = 0x4, fixed_abs, tag = 'smem constant byte address 0x4 - core index']
  #allocation1 [shape = 'u32[144,128]{1,0:T(1,128)}', space=vmem, size = 0x12000, scoped, tag = 'internal scratch']
  %s0 = inlined_call_operand.vmem [shape: bf16[32,512], index: 0, kind: input, shape index: {}]
  %s1 = inlined_call_operand.vmem [shape: bf16[512,128], index: 1, kind: input, shape index: {}]
  %s2 = inlined_call_operand.vmem [shape: bf16[32,128], index: 2, kind: output, shape index: {0}]
  %s3 = inlined_call_operand.vmem [shape: f32[1,2,128], index: 3, kind: output, shape index: {1}]
  %4 = xla_tuple %s2, %s3
  %s5 = sld [smem:[#allocation0]]
  $region26: #{_lambda_.13} parent=0
    _
  %s7 = ssub.s32 1, %s5
  %s8 = scalar_select 0, %s7, %s5
  // Predicated region
  $region2: #{_lambda_.13} parent=0 // pred_check
    _
  $region3: #{_lambda_.13} parent=0 // pred_check_branch
    %10 = sbr.rel (0) target = $region5
  $region4: #{_lambda_.13} parent=0 // pred_region
    _
  $region5: #{_lambda_.13} parent=0 // pred_fallthru
    _
  // Predicated region
  $region6: #{_lambda_.13} parent=0 // pred_check
    _
  $region7: #{_lambda_.13} parent=0 // pred_check_branch
    %12 = sbr.rel (0) target = $region9
  $region8: #{_lambda_.13} parent=0 // pred_region
    _
  $region9: #{_lambda_.13} parent=0 // pred_fallthru
    _
  %v14 = vld [vmem:[%s0] sm:$0xff]
  %v15 = vld [vmem:[%s0 + $0x8] sm:$0xff]
  %v16 = vld [vmem:[%s0 + $0x10] sm:$0xff]
  %v17 = vld [vmem:[%s0 + $0x18] sm:$0xff]
  %v18 = vld [vmem:[%s0 + $0x20] sm:$0xff]
  %v19 = vld [vmem:[%s0 + $0x28] sm:$0xff]
  %v20 = vld [vmem:[%s0 + $0x30] sm:$0xff]
  %v21 = vld [vmem:[%s0 + $0x38] sm:$0xff]
  %v22 = vld [vmem:[%s1] sm:$0xf]
  %v23 = vld [vmem:[%s1 + $0x4] sm:$0xf]
  %v24 = vld [vmem:[%s1 + $0x8] sm:$0xf]
  %v25 = vld [vmem:[%s1 + $0xc] sm:$0xf]
  %v26 = vld [vmem:[%s1 + $0x10] sm:$0xf]
  %v27 = vld [vmem:[%s1 + $0x14] sm:$0xf]
  %v28 = vld [vmem:[%s1 + $0x18] sm:$0xf]
  %v29 = vld [vmem:[%s1 + $0x1c] sm:$0xf]
  %v30 = vld [vmem:[%s1 + $0x20] sm:$0xf]
  %v31 = vld [vmem:[%s1 + $0x24] sm:$0xf]
  %v32 = vld [vmem:[%s1 + $0x28] sm:$0xf]
  %v33 = vld [vmem:[%s1 + $0x2c] sm:$0xf]
  %v34 = vld [vmem:[%s1 + $0x30] sm:$0xf]
  %v35 = vld [vmem:[%s1 + $0x34] sm:$0xf]
  %v36 = vld [vmem:[%s1 + $0x38] sm:$0xf]
  %v37 = vld [vmem:[%s1 + $0x3c] sm:$0xf]
  %v38 = vld [vmem:[%s1 + $0x40] sm:$0xf]
  %v39 = vld [vmem:[%s1 + $0x44] sm:$0xf]
  %v40 = vld [vmem:[%s1 + $0x48] sm:$0xf]
  %v41 = vld [vmem:[%s1 + $0x4c] sm:$0xf]
  %v42 = vld [vmem:[%s1 + $0x50] sm:$0xf]
  %v43 = vld [vmem:[%s1 + $0x54] sm:$0xf]
  %v44 = vld [vmem:[%s1 + $0x58] sm:$0xf]
  %v45 = vld [vmem:[%s1 + $0x5c] sm:$0xf]
  %v46 = vld [vmem:[%s1 + $0x60] sm:$0xf]
  %v47 = vld [vmem:[%s1 + $0x64] sm:$0xf]
  %v48 = vld [vmem:[%s1 + $0x68] sm:$0xf]
  %v49 = vld [vmem:[%s1 + $0x6c] sm:$0xf]
  %v50 = vld [vmem:[%s1 + $0x70] sm:$0xf]
  %v51 = vld [vmem:[%s1 + $0x74] sm:$0xf]
  %v52 = vld [vmem:[%s1 + $0x78] sm:$0xf]
  %v53 = vld [vmem:[%s1 + $0x7c] sm:$0xf]
  %v54 = vld [vmem:[%s1 + $0x80] sm:$0xf]
  %v55 = vld [vmem:[%s1 + $0x84] sm:$0xf]
  %v56 = vld [vmem:[%s1 + $0x88] sm:$0xf]
  %v57 = vld [vmem:[%s1 + $0x8c] sm:$0xf]
  %v58 = vld [vmem:[%s1 + $0x90] sm:$0xf]
  %v59 = vld [vmem:[%s1 + $0x94] sm:$0xf]
  %v60 = vld [vmem:[%s1 + $0x98] sm:$0xf]
  %v61 = vld [vmem:[%s1 + $0x9c] sm:$0xf]
  %v62 = vld [vmem:[%s1 + $0xa0] sm:$0xf]
  %v63 = vld [vmem:[%s1 + $0xa4] sm:$0xf]
  %v64 = vld [vmem:[%s1 + $0xa8] sm:$0xf]
  %v65 = vld [vmem:[%s1 + $0xac] sm:$0xf]
  %v66 = vld [vmem:[%s1 + $0xb0] sm:$0xf]
  %v67 = vld [vmem:[%s1 + $0xb4] sm:$0xf]
  %v68 = vld [vmem:[%s1 + $0xb8] sm:$0xf]
  %v69 = vld [vmem:[%s1 + $0xbc] sm:$0xf]
  %v70 = vld [vmem:[%s1 + $0xc0] sm:$0xf]
  %v71 = vld [vmem:[%s1 + $0xc4] sm:$0xf]
  %v72 = vld [vmem:[%s1 + $0xc8] sm:$0xf]
  %v73 = vld [vmem:[%s1 + $0xcc] sm:$0xf]
  %v74 = vld [vmem:[%s1 + $0xd0] sm:$0xf]
  %v75 = vld [vmem:[%s1 + $0xd4] sm:$0xf]
  %v76 = vld [vmem:[%s1 + $0xd8] sm:$0xf]
  %v77 = vld [vmem:[%s1 + $0xdc] sm:$0xf]
  %v78 = vld [vmem:[%s1 + $0xe0] sm:$0xf]
  %v79 = vld [vmem:[%s1 + $0xe4] sm:$0xf]
  %v80 = vld [vmem:[%s1 + $0xe8] sm:$0xf]
  %v81 = vld [vmem:[%s1 + $0xec] sm:$0xf]
  %v82 = vld [vmem:[%s1 + $0xf0] sm:$0xf]
  %v83 = vld [vmem:[%s1 + $0xf4] sm:$0xf]
  %v84 = vld [vmem:[%s1 + $0xf8] sm:$0xf]
  %v85 = vld [vmem:[%s1 + $0xfc] sm:$0xf]
  %v94 = vunpack.c.l.b16 %v14
  %v95 = vunpack.c.h.b16 %v14
  %v96 = vunpack.c.l.b16 %v15
  %v97 = vunpack.c.h.b16 %v15
  %v98 = vunpack.c.l.b16 %v16
  %v99 = vunpack.c.h.b16 %v16
  %v100 = vunpack.c.l.b16 %v17
  %v101 = vunpack.c.h.b16 %v17
  %v102 = vunpack.c.l.b16 %v18
  %v103 = vunpack.c.h.b16 %v18
  %v104 = vunpack.c.l.b16 %v19
  %v105 = vunpack.c.h.b16 %v19
  %v106 = vunpack.c.l.b16 %v20
  %v107 = vunpack.c.h.b16 %v20
  %v108 = vunpack.c.l.b16 %v21
  %v109 = vunpack.c.h.b16 %v21
  %v110 = vpack.c.b16 %v98, %v94
  %v111 = vpack.c.b16 %v99, %v95
  %v112 = vpack.c.b16 %v100, %v96
  %v113 = vpack.c.b16 %v101, %v97
  %v114 = vpack.c.b16 %v106, %v102
  %v115 = vpack.c.b16 %v107, %v103
  %v116 = vpack.c.b16 %v108, %v104
  %v117 = vpack.c.b16 %v109, %v105
  %v190 = vunpack.c.l.b16 %v22
  %v191 = vunpack.c.l.b16 %v23
  %v192 = vunpack.c.l.b16 %v24
  %v193 = vunpack.c.l.b16 %v25
  %v194 = vunpack.c.l.b16 %v26
  %v195 = vunpack.c.l.b16 %v27
  %v196 = vunpack.c.l.b16 %v28
  %v197 = vunpack.c.l.b16 %v29
  %v198 = vunpack.c.l.b16 %v30
  %v199 = vunpack.c.l.b16 %v31
  %v200 = vunpack.c.l.b16 %v32
  %v201 = vunpack.c.l.b16 %v33
  %v202 = vunpack.c.l.b16 %v34
  %v203 = vunpack.c.l.b16 %v35
  %v204 = vunpack.c.l.b16 %v36
  %v205 = vunpack.c.l.b16 %v37
  %v206 = vunpack.c.l.b16 %v38
  %v207 = vunpack.c.l.b16 %v39
  %v208 = vunpack.c.l.b16 %v40
  %v209 = vunpack.c.l.b16 %v41
  %v210 = vunpack.c.l.b16 %v42
  %v211 = vunpack.c.l.b16 %v43
  %v212 = vunpack.c.l.b16 %v44
  %v213 = vunpack.c.l.b16 %v45
  %v214 = vunpack.c.l.b16 %v46
  %v215 = vunpack.c.l.b16 %v47
  %v216 = vunpack.c.l.b16 %v48
  %v217 = vunpack.c.l.b16 %v49
  %v218 = vunpack.c.l.b16 %v50
  %v219 = vunpack.c.l.b16 %v51
  %v220 = vunpack.c.l.b16 %v52
  %v221 = vunpack.c.l.b16 %v53
  %v222 = vunpack.c.l.b16 %v54
  %v223 = vunpack.c.l.b16 %v55
  %v224 = vunpack.c.l.b16 %v56
  %v225 = vunpack.c.l.b16 %v57
  %v226 = vunpack.c.l.b16 %v58
  %v227 = vunpack.c.l.b16 %v59
  %v228 = vunpack.c.l.b16 %v60
  %v229 = vunpack.c.l.b16 %v61
  %v230 = vunpack.c.l.b16 %v62
  %v231 = vunpack.c.l.b16 %v63
  %v232 = vunpack.c.l.b16 %v64
  %v233 = vunpack.c.l.b16 %v65
  %v234 = vunpack.c.l.b16 %v66
  %v235 = vunpack.c.l.b16 %v67
  %v236 = vunpack.c.l.b16 %v68
  %v237 = vunpack.c.l.b16 %v69
  %v238 = vunpack.c.l.b16 %v70
  %v239 = vunpack.c.l.b16 %v71
  %v240 = vunpack.c.l.b16 %v72
  %v241 = vunpack.c.l.b16 %v73
  %v242 = vunpack.c.l.b16 %v74
  %v243 = vunpack.c.l.b16 %v75
  %v244 = vunpack.c.l.b16 %v76
  %v245 = vunpack.c.l.b16 %v77
  %v246 = vunpack.c.l.b16 %v78
  %v247 = vunpack.c.l.b16 %v79
  %v248 = vunpack.c.l.b16 %v80
  %v249 = vunpack.c.l.b16 %v81
  %v250 = vunpack.c.l.b16 %v82
  %v251 = vunpack.c.l.b16 %v83
  %v252 = vunpack.c.l.b16 %v84
  %v253 = vunpack.c.l.b16 %v85
  %v254 = vpack.c.b16 %v191, %v190
  %v255 = vpack.c.b16 %v193, %v192
  %v256 = vpack.c.b16 %v195, %v194
  %v257 = vpack.c.b16 %v197, %v196
  %v258 = vpack.c.b16 %v199, %v198
  %v259 = vpack.c.b16 %v201, %v200
  %v260 = vpack.c.b16 %v203, %v202
  %v261 = vpack.c.b16 %v205, %v204
  %v262 = vpack.c.b16 %v207, %v206
  %v263 = vpack.c.b16 %v209, %v208
  %v264 = vpack.c.b16 %v211, %v210
  %v265 = vpack.c.b16 %v213, %v212
  %v266 = vpack.c.b16 %v215, %v214
  %v267 = vpack.c.b16 %v217, %v216
  %v268 = vpack.c.b16 %v219, %v218
  %v269 = vpack.c.b16 %v221, %v220
  %v270 = vpack.c.b16 %v223, %v222
  %v271 = vpack.c.b16 %v225, %v224
  %v272 = vpack.c.b16 %v227, %v226
  %v273 = vpack.c.b16 %v229, %v228
  %v274 = vpack.c.b16 %v231, %v230
  %v275 = vpack.c.b16 %v233, %v232
  %v276 = vpack.c.b16 %v235, %v234
  %v277 = vpack.c.b16 %v237, %v236
  %v278 = vpack.c.b16 %v239, %v238
  %v279 = vpack.c.b16 %v241, %v240
  %v280 = vpack.c.b16 %v243, %v242
  %v281 = vpack.c.b16 %v245, %v244
  %v282 = vpack.c.b16 %v247, %v246
  %v283 = vpack.c.b16 %v249, %v248
  %v284 = vpack.c.b16 %v251, %v250
  %v285 = vpack.c.b16 %v253, %v252
  %318 = vmatprep.subr.bf16.mxu0 0
  %319 = vmatpush1.bf16.msra.mxu0 %v254
  %320 = vmatprep.subr.bf16.mxu0 0
  %321 = vmatpush1.bf16.msra.mxu0 %v255
  %322 = vmatprep.subr.bf16.mxu0 0
  %323 = vmatpush1.bf16.msra.mxu0 %v256
  %324 = vmatprep.subr.bf16.mxu0 0
  %325 = vmatpush1.bf16.msra.mxu0 %v257
  %326 = vmatprep.subr.bf16.mxu0 0
  %327 = vmatpush1.bf16.msra.mxu0 %v258
  %328 = vmatprep.subr.bf16.mxu0 0
  %329 = vmatpush1.bf16.msra.mxu0 %v259
  %330 = vmatprep.subr.bf16.mxu0 0
  %331 = vmatpush1.bf16.msra.mxu0 %v260
  %332 = vmatprep.subr.bf16.mxu0 0
  %333 = vmatpush1.bf16.msra.mxu0 %v261
  %334 = vmatprep.subr.bf16.mxu0 0
  %335 = vmatpush1.bf16.msra.mxu0 %v262
  %336 = vmatprep.subr.bf16.mxu0 0
  %337 = vmatpush1.bf16.msra.mxu0 %v263
  %338 = vmatprep.subr.bf16.mxu0 0
  %339 = vmatpush1.bf16.msra.mxu0 %v264
  %340 = vmatprep.subr.bf16.mxu0 0
  %341 = vmatpush1.bf16.msra.mxu0 %v265
  %342 = vmatprep.subr.bf16.mxu0 0
  %343 = vmatpush1.bf16.msra.mxu0 %v266
  %344 = vmatprep.subr.bf16.mxu0 0
  %345 = vmatpush1.bf16.msra.mxu0 %v267
  %346 = vmatprep.subr.bf16.mxu0 0
  %347 = vmatpush1.bf16.msra.mxu0 %v268
  %348 = vmatprep.subr.bf16.mxu0 0
  %349 = vmatpush1.bf16.msra.mxu0 %v269
  %350 = vmatprep.mubr.bf16.mxu0 %v111
  %351 = vmatmul.mubr.bf16.gmra.mrb[0].mxu0 %v110
  %v352 = vpop.f32.mrb[0].mxu0
  %v353 = vadd.f32 0.0, %v352
  %v354 = vpop.f32.mrb[0].mxu0
  %v355 = vpop.f32.mrb[0].mxu0
  %v356 = vadd.f32 0.0, %v355
  %v357 = vpop.f32.mrb[0].mxu0
  %358 = vmatprep.mubr.bf16.mxu0 %v115
  %359 = vmatmul.mubr.bf16.gmra.mrb[0].mxu0 %v114
  %v360 = vpop.f32.mrb[0].mxu0
  %v361 = vadd.f32 0.0, %v360
  %v362 = vpop.f32.mrb[0].mxu0
  %v363 = vpop.f32.mrb[0].mxu0
  %v364 = vadd.f32 0.0, %v363
  %v365 = vpop.f32.mrb[0].mxu0
  %366 = vdwg.mxu0
  %367 = vmatprep.subr.bf16.mxu0 0
  %368 = vmatpush1.bf16.msra.mxu0 %v270
  %369 = vmatprep.subr.bf16.mxu0 0
  %370 = vmatpush1.bf16.msra.mxu0 %v271
  %371 = vmatprep.subr.bf16.mxu0 0
  %372 = vmatpush1.bf16.msra.mxu0 %v272
  %373 = vmatprep.subr.bf16.mxu0 0
  %374 = vmatpush1.bf16.msra.mxu0 %v273
  %375 = vmatprep.subr.bf16.mxu0 0
  %376 = vmatpush1.bf16.msra.mxu0 %v274
  %377 = vmatprep.subr.bf16.mxu0 0
  %378 = vmatpush1.bf16.msra.mxu0 %v275
  %379 = vmatprep.subr.bf16.mxu0 0
  %380 = vmatpush1.bf16.msra.mxu0 %v276
  %381 = vmatprep.subr.bf16.mxu0 0
  %382 = vmatpush1.bf16.msra.mxu0 %v277
  %383 = vmatprep.subr.bf16.mxu0 0
  %384 = vmatpush1.bf16.msra.mxu0 %v278
  %385 = vmatprep.subr.bf16.mxu0 0
  %386 = vmatpush1.bf16.msra.mxu0 %v279
  %387 = vmatprep.subr.bf16.mxu0 0
  %388 = vmatpush1.bf16.msra.mxu0 %v280
  %389 = vmatprep.subr.bf16.mxu0 0
  %390 = vmatpush1.bf16.msra.mxu0 %v281
  %391 = vmatprep.subr.bf16.mxu0 0
  %392 = vmatpush1.bf16.msra.mxu0 %v282
  %393 = vmatprep.subr.bf16.mxu0 0
  %394 = vmatpush1.bf16.msra.mxu0 %v283
  %395 = vmatprep.subr.bf16.mxu0 0
  %396 = vmatpush1.bf16.msra.mxu0 %v284
  %397 = vmatprep.subr.bf16.mxu0 0
  %398 = vmatpush1.bf16.msra.mxu0 %v285
  %399 = vmatprep.mubr.bf16.mxu0 %v113
  %400 = vmatmul.mubr.bf16.gmra.mrb[0].mxu0 %v112
  %v401 = vpop.f32.mrb[0].mxu0
  %v402 = vadd.f32 %v353, %v401
  %v403 = vpop.f32.mrb[0].mxu0
  %v404 = vpop.f32.mrb[0].mxu0
  %v405 = vadd.f32 %v356, %v404
  %v406 = vpop.f32.mrb[0].mxu0
  %407 = vmatprep.mubr.bf16.mxu0 %v117
  %408 = vmatmul.mubr.bf16.gmra.mrb[0].mxu0 %v116
  %v409 = vpop.f32.mrb[0].mxu0
  %v410 = vadd.f32 %v361, %v409
  %v411 = vpop.f32.mrb[0].mxu0
  %v412 = vpop.f32.mrb[0].mxu0
  %v413 = vadd.f32 %v364, %v412
  %v414 = vpop.f32.mrb[0].mxu0
  %415 = vdwg.mxu0
  %v416 = vpack.c.bf16 %v405, %v402
  %v417 = vpack.c.bf16 %v413, %v410
  %v420 = vunpack.c.l.b16 %v416
  %v421 = vunpack.c.h.b16 %v416
  %v422 = vunpack.c.l.b16 %v417
  %v423 = vunpack.c.h.b16 %v417
  %v424 = vpack.c.b16 %v420, %v420
  %v425 = vpack.c.b16 %v421, %v421
  %v426 = vpack.c.b16 %v422, %v422
  %v427 = vpack.c.b16 %v423, %v423
  %432 = vst [vmem:[%s2] sm:$0xf] %v424
  %433 = vst [vmem:[%s2 + $0x4] sm:$0xf] %v425
  %434 = vst [vmem:[%s2 + $0x8] sm:$0xf] %v426
  %435 = vst [vmem:[%s2 + $0xc] sm:$0xf] %v427
  %v436 = vadd.f32 %v402, %v405
  %v437 = vadd.f32 %v436, %v410
  %v438 = vadd.f32 %v437, %v413
  %v439 = vrot.slane %v438, 4
  %v440 = vadd.f32 %v438, %v439
  %v441 = vrot.slane %v440, 2
  %v442 = vadd.f32 %v440, %v441
  %v443 = vrot.slane %v442, 1
  %v444 = vadd.f32 %v442, %v443
  %v445 = vmul.f32 %v402, %v402
  %v446 = vmul.f32 %v405, %v405
  %v447 = vmul.f32 %v410, %v410
  %v448 = vmul.f32 %v413, %v413
  %v449 = vadd.f32 %v445, %v446
  %v450 = vadd.f32 %v449, %v447
  %v451 = vadd.f32 %v450, %v448
  %v452 = vrot.slane %v451, 4
  %v453 = vadd.f32 %v451, %v452
  %v454 = vrot.slane %v453, 2
  %v455 = vadd.f32 %v453, %v454
  %v456 = vrot.slane %v455, 1
  %v457 = vadd.f32 %v455, %v456
  %vm458 = vcmask 1040384
  %v459 = vsel %vm458, %v444, %v457
  %460 = vst [vmem:[%s3] sm:$0x3] %v459
  // Predicated region
  $region10: #{_lambda_.13} parent=0 // pred_check
    _
  $region11: #{_lambda_.13} parent=0 // pred_check_branch
    %462 = sbr.rel (0) target = $region13
  $region12: #{_lambda_.13} parent=0 // pred_region
    _
  $region13: #{_lambda_.13} parent=0 // pred_fallthru
    _
  // Predicated region
  $region14: #{_lambda_.13} parent=0 // pred_check
    _
  $region15: #{_lambda_.13} parent=0 // pred_check_branch
    %464 = sbr.rel (0) target = $region17
  $region16: #{_lambda_.13} parent=0 // pred_region
    _
  $region17: #{_lambda_.13} parent=0 // pred_fallthru
    _
  // Predicated region
  $region18: #{_lambda_.13} parent=0 // pred_check
    _
  $region19: #{_lambda_.13} parent=0 // pred_check_branch
    %466 = sbr.rel (0) target = $region21
  $region20: #{_lambda_.13} parent=0 // pred_region
    _
  $region21: #{_lambda_.13} parent=0 // pred_fallthru
    _
  // Predicated region
  $region22: #{_lambda_.13} parent=0 // pred_check
    _
  $region23: #{_lambda_.13} parent=0 // pred_check_branch
    %468 = sbr.rel (0) target = $region25
  $region24: #{_lambda_.13} parent=0 // pred_region
    _
  $region25: #{_lambda_.13} parent=0 // pred_fallthru
    _

// kernel: _lambda_.15
$region0: #{_lambda_.15}
  #allocation0 [shape = 'u32[]', space=smem, size = 0x4, offset = 0x4, fixed_abs, tag = 'smem constant byte address 0x4 - core index']
  #allocation1 [shape = 'u32[144,128]{1,0:T(1,128)}', space=vmem, size = 0x12000, scoped, tag = 'internal scratch']
  %s0 = inlined_call_operand.vmem [shape: bf16[16,512], index: 0, kind: input, shape index: {}]
  %s1 = inlined_call_operand.vmem [shape: bf16[512,128], index: 1, kind: input, shape index: {}]
  %s2 = inlined_call_operand.vmem [shape: f32[1,128], index: 2, kind: input, shape index: {}]
  %s3 = inlined_call_operand.vmem [shape: f32[16,128], index: 3, kind: output, shape index: {}]
  %s4 = sld [smem:[#allocation0]]
  $region22: #{_lambda_.15} parent=0
    _
  %s6 = ssub.s32 1, %s4
  %s7 = scalar_select 0, %s6, %s4
  // Predicated region
  $region2: #{_lambda_.15} parent=0 // pred_check
    _
  $region3: #{_lambda_.15} parent=0 // pred_check_branch
    %9 = sbr.rel (0) target = $region5
  $region4: #{_lambda_.15} parent=0 // pred_region
    _
  $region5: #{_lambda_.15} parent=0 // pred_fallthru
    _
  // Predicated region
  $region6: #{_lambda_.15} parent=0 // pred_check
    _
  $region7: #{_lambda_.15} parent=0 // pred_check_branch
    %11 = sbr.rel (0) target = $region9
  $region8: #{_lambda_.15} parent=0 // pred_region
    _
  $region9: #{_lambda_.15} parent=0 // pred_fallthru
    _
  // Predicated region
  $region10: #{_lambda_.15} parent=0 // pred_check
    _
  $region11: #{_lambda_.15} parent=0 // pred_check_branch
    %13 = sbr.rel (0) target = $region13
  $region12: #{_lambda_.15} parent=0 // pred_region
    _
  $region13: #{_lambda_.15} parent=0 // pred_fallthru
    _
  %v15 = vld [vmem:[%s0] sm:$0xff]
  %v16 = vld [vmem:[%s0 + $0x8] sm:$0xff]
  %v17 = vld [vmem:[%s0 + $0x10] sm:$0xff]
  %v18 = vld [vmem:[%s0 + $0x18] sm:$0xff]
  %v19 = vld [vmem:[%s1] sm:$0xf]
  %v20 = vld [vmem:[%s1 + $0x4] sm:$0xf]
  %v21 = vld [vmem:[%s1 + $0x8] sm:$0xf]
  %v22 = vld [vmem:[%s1 + $0xc] sm:$0xf]
  %v23 = vld [vmem:[%s1 + $0x10] sm:$0xf]
  %v24 = vld [vmem:[%s1 + $0x14] sm:$0xf]
  %v25 = vld [vmem:[%s1 + $0x18] sm:$0xf]
  %v26 = vld [vmem:[%s1 + $0x1c] sm:$0xf]
  %v27 = vld [vmem:[%s1 + $0x20] sm:$0xf]
  %v28 = vld [vmem:[%s1 + $0x24] sm:$0xf]
  %v29 = vld [vmem:[%s1 + $0x28] sm:$0xf]
  %v30 = vld [vmem:[%s1 + $0x2c] sm:$0xf]
  %v31 = vld [vmem:[%s1 + $0x30] sm:$0xf]
  %v32 = vld [vmem:[%s1 + $0x34] sm:$0xf]
  %v33 = vld [vmem:[%s1 + $0x38] sm:$0xf]
  %v34 = vld [vmem:[%s1 + $0x3c] sm:$0xf]
  %v35 = vld [vmem:[%s1 + $0x40] sm:$0xf]
  %v36 = vld [vmem:[%s1 + $0x44] sm:$0xf]
  %v37 = vld [vmem:[%s1 + $0x48] sm:$0xf]
  %v38 = vld [vmem:[%s1 + $0x4c] sm:$0xf]
  %v39 = vld [vmem:[%s1 + $0x50] sm:$0xf]
  %v40 = vld [vmem:[%s1 + $0x54] sm:$0xf]
  %v41 = vld [vmem:[%s1 + $0x58] sm:$0xf]
  %v42 = vld [vmem:[%s1 + $0x5c] sm:$0xf]
  %v43 = vld [vmem:[%s1 + $0x60] sm:$0xf]
  %v44 = vld [vmem:[%s1 + $0x64] sm:$0xf]
  %v45 = vld [vmem:[%s1 + $0x68] sm:$0xf]
  %v46 = vld [vmem:[%s1 + $0x6c] sm:$0xf]
  %v47 = vld [vmem:[%s1 + $0x70] sm:$0xf]
  %v48 = vld [vmem:[%s1 + $0x74] sm:$0xf]
  %v49 = vld [vmem:[%s1 + $0x78] sm:$0xf]
  %v50 = vld [vmem:[%s1 + $0x7c] sm:$0xf]
  %v51 = vld [vmem:[%s1 + $0x80] sm:$0xf]
  %v52 = vld [vmem:[%s1 + $0x84] sm:$0xf]
  %v53 = vld [vmem:[%s1 + $0x88] sm:$0xf]
  %v54 = vld [vmem:[%s1 + $0x8c] sm:$0xf]
  %v55 = vld [vmem:[%s1 + $0x90] sm:$0xf]
  %v56 = vld [vmem:[%s1 + $0x94] sm:$0xf]
  %v57 = vld [vmem:[%s1 + $0x98] sm:$0xf]
  %v58 = vld [vmem:[%s1 + $0x9c] sm:$0xf]
  %v59 = vld [vmem:[%s1 + $0xa0] sm:$0xf]
  %v60 = vld [vmem:[%s1 + $0xa4] sm:$0xf]
  %v61 = vld [vmem:[%s1 + $0xa8] sm:$0xf]
  %v62 = vld [vmem:[%s1 + $0xac] sm:$0xf]
  %v63 = vld [vmem:[%s1 + $0xb0] sm:$0xf]
  %v64 = vld [vmem:[%s1 + $0xb4] sm:$0xf]
  %v65 = vld [vmem:[%s1 + $0xb8] sm:$0xf]
  %v66 = vld [vmem:[%s1 + $0xbc] sm:$0xf]
  %v67 = vld [vmem:[%s1 + $0xc0] sm:$0xf]
  %v68 = vld [vmem:[%s1 + $0xc4] sm:$0xf]
  %v69 = vld [vmem:[%s1 + $0xc8] sm:$0xf]
  %v70 = vld [vmem:[%s1 + $0xcc] sm:$0xf]
  %v71 = vld [vmem:[%s1 + $0xd0] sm:$0xf]
  %v72 = vld [vmem:[%s1 + $0xd4] sm:$0xf]
  %v73 = vld [vmem:[%s1 + $0xd8] sm:$0xf]
  %v74 = vld [vmem:[%s1 + $0xdc] sm:$0xf]
  %v75 = vld [vmem:[%s1 + $0xe0] sm:$0xf]
  %v76 = vld [vmem:[%s1 + $0xe4] sm:$0xf]
  %v77 = vld [vmem:[%s1 + $0xe8] sm:$0xf]
  %v78 = vld [vmem:[%s1 + $0xec] sm:$0xf]
  %v79 = vld [vmem:[%s1 + $0xf0] sm:$0xf]
  %v80 = vld [vmem:[%s1 + $0xf4] sm:$0xf]
  %v81 = vld [vmem:[%s1 + $0xf8] sm:$0xf]
  %v82 = vld [vmem:[%s1 + $0xfc] sm:$0xf]
  %v83 = vld [vmem:[%s2] sm:$0x1]
  %v85 = vlaneseq
  %v86 = vshrl.u32 %v85, 7
  %v87 = vsub.s32 0, %v86
  %v88 = vrot.slane %v83, %v87
  %v94 = vunpack.c.l.b16 %v15
  %v95 = vunpack.c.h.b16 %v15
  %v96 = vunpack.c.l.b16 %v16
  %v97 = vunpack.c.h.b16 %v16
  %v98 = vunpack.c.l.b16 %v17
  %v99 = vunpack.c.h.b16 %v17
  %v100 = vunpack.c.l.b16 %v18
  %v101 = vunpack.c.h.b16 %v18
  %v102 = vpack.c.b16 %v98, %v94
  %v103 = vpack.c.b16 %v99, %v95
  %v104 = vpack.c.b16 %v100, %v96
  %v105 = vpack.c.b16 %v101, %v97
  %v174 = vunpack.c.l.b16 %v19
  %v175 = vunpack.c.l.b16 %v20
  %v176 = vunpack.c.l.b16 %v21
  %v177 = vunpack.c.l.b16 %v22
  %v178 = vunpack.c.l.b16 %v23
  %v179 = vunpack.c.l.b16 %v24
  %v180 = vunpack.c.l.b16 %v25
  %v181 = vunpack.c.l.b16 %v26
  %v182 = vunpack.c.l.b16 %v27
  %v183 = vunpack.c.l.b16 %v28
  %v184 = vunpack.c.l.b16 %v29
  %v185 = vunpack.c.l.b16 %v30
  %v186 = vunpack.c.l.b16 %v31
  %v187 = vunpack.c.l.b16 %v32
  %v188 = vunpack.c.l.b16 %v33
  %v189 = vunpack.c.l.b16 %v34
  %v190 = vunpack.c.l.b16 %v35
  %v191 = vunpack.c.l.b16 %v36
  %v192 = vunpack.c.l.b16 %v37
  %v193 = vunpack.c.l.b16 %v38
  %v194 = vunpack.c.l.b16 %v39
  %v195 = vunpack.c.l.b16 %v40
  %v196 = vunpack.c.l.b16 %v41
  %v197 = vunpack.c.l.b16 %v42
  %v198 = vunpack.c.l.b16 %v43
  %v199 = vunpack.c.l.b16 %v44
  %v200 = vunpack.c.l.b16 %v45
  %v201 = vunpack.c.l.b16 %v46
  %v202 = vunpack.c.l.b16 %v47
  %v203 = vunpack.c.l.b16 %v48
  %v204 = vunpack.c.l.b16 %v49
  %v205 = vunpack.c.l.b16 %v50
  %v206 = vunpack.c.l.b16 %v51
  %v207 = vunpack.c.l.b16 %v52
  %v208 = vunpack.c.l.b16 %v53
  %v209 = vunpack.c.l.b16 %v54
  %v210 = vunpack.c.l.b16 %v55
  %v211 = vunpack.c.l.b16 %v56
  %v212 = vunpack.c.l.b16 %v57
  %v213 = vunpack.c.l.b16 %v58
  %v214 = vunpack.c.l.b16 %v59
  %v215 = vunpack.c.l.b16 %v60
  %v216 = vunpack.c.l.b16 %v61
  %v217 = vunpack.c.l.b16 %v62
  %v218 = vunpack.c.l.b16 %v63
  %v219 = vunpack.c.l.b16 %v64
  %v220 = vunpack.c.l.b16 %v65
  %v221 = vunpack.c.l.b16 %v66
  %v222 = vunpack.c.l.b16 %v67
  %v223 = vunpack.c.l.b16 %v68
  %v224 = vunpack.c.l.b16 %v69
  %v225 = vunpack.c.l.b16 %v70
  %v226 = vunpack.c.l.b16 %v71
  %v227 = vunpack.c.l.b16 %v72
  %v228 = vunpack.c.l.b16 %v73
  %v229 = vunpack.c.l.b16 %v74
  %v230 = vunpack.c.l.b16 %v75
  %v231 = vunpack.c.l.b16 %v76
  %v232 = vunpack.c.l.b16 %v77
  %v233 = vunpack.c.l.b16 %v78
  %v234 = vunpack.c.l.b16 %v79
  %v235 = vunpack.c.l.b16 %v80
  %v236 = vunpack.c.l.b16 %v81
  %v237 = vunpack.c.l.b16 %v82
  %v238 = vpack.c.b16 %v175, %v174
  %v239 = vpack.c.b16 %v177, %v176
  %v240 = vpack.c.b16 %v179, %v178
  %v241 = vpack.c.b16 %v181, %v180
  %v242 = vpack.c.b16 %v183, %v182
  %v243 = vpack.c.b16 %v185, %v184
  %v244 = vpack.c.b16 %v187, %v186
  %v245 = vpack.c.b16 %v189, %v188
  %v246 = vpack.c.b16 %v191, %v190
  %v247 = vpack.c.b16 %v193, %v192
  %v248 = vpack.c.b16 %v195, %v194
  %v249 = vpack.c.b16 %v197, %v196
  %v250 = vpack.c.b16 %v199, %v198
  %v251 = vpack.c.b16 %v201, %v200
  %v252 = vpack.c.b16 %v203, %v202
  %v253 = vpack.c.b16 %v205, %v204
  %v254 = vpack.c.b16 %v207, %v206
  %v255 = vpack.c.b16 %v209, %v208
  %v256 = vpack.c.b16 %v211, %v210
  %v257 = vpack.c.b16 %v213, %v212
  %v258 = vpack.c.b16 %v215, %v214
  %v259 = vpack.c.b16 %v217, %v216
  %v260 = vpack.c.b16 %v219, %v218
  %v261 = vpack.c.b16 %v221, %v220
  %v262 = vpack.c.b16 %v223, %v222
  %v263 = vpack.c.b16 %v225, %v224
  %v264 = vpack.c.b16 %v227, %v226
  %v265 = vpack.c.b16 %v229, %v228
  %v266 = vpack.c.b16 %v231, %v230
  %v267 = vpack.c.b16 %v233, %v232
  %v268 = vpack.c.b16 %v235, %v234
  %v269 = vpack.c.b16 %v237, %v236
  %302 = vmatprep.subr.bf16.mxu0 0
  %303 = vmatpush1.bf16.msra.mxu0 %v238
  %304 = vmatprep.subr.bf16.mxu0 0
  %305 = vmatpush1.bf16.msra.mxu0 %v239
  %306 = vmatprep.subr.bf16.mxu0 0
  %307 = vmatpush1.bf16.msra.mxu0 %v240
  %308 = vmatprep.subr.bf16.mxu0 0
  %309 = vmatpush1.bf16.msra.mxu0 %v241
  %310 = vmatprep.subr.bf16.mxu0 0
  %311 = vmatpush1.bf16.msra.mxu0 %v242
  %312 = vmatprep.subr.bf16.mxu0 0
  %313 = vmatpush1.bf16.msra.mxu0 %v243
  %314 = vmatprep.subr.bf16.mxu0 0
  %315 = vmatpush1.bf16.msra.mxu0 %v244
  %316 = vmatprep.subr.bf16.mxu0 0
  %317 = vmatpush1.bf16.msra.mxu0 %v245
  %318 = vmatprep.subr.bf16.mxu0 0
  %319 = vmatpush1.bf16.msra.mxu0 %v246
  %320 = vmatprep.subr.bf16.mxu0 0
  %321 = vmatpush1.bf16.msra.mxu0 %v247
  %322 = vmatprep.subr.bf16.mxu0 0
  %323 = vmatpush1.bf16.msra.mxu0 %v248
  %324 = vmatprep.subr.bf16.mxu0 0
  %325 = vmatpush1.bf16.msra.mxu0 %v249
  %326 = vmatprep.subr.bf16.mxu0 0
  %327 = vmatpush1.bf16.msra.mxu0 %v250
  %328 = vmatprep.subr.bf16.mxu0 0
  %329 = vmatpush1.bf16.msra.mxu0 %v251
  %330 = vmatprep.subr.bf16.mxu0 0
  %331 = vmatpush1.bf16.msra.mxu0 %v252
  %332 = vmatprep.subr.bf16.mxu0 0
  %333 = vmatpush1.bf16.msra.mxu0 %v253
  %334 = vmatprep.mubr.bf16.mxu0 %v103
  %335 = vmatmul.mubr.bf16.gmra.mrb[0].mxu0 %v102
  %v336 = vpop.f32.mrb[0].mxu0
  %v337 = vadd.f32 %v88, %v336
  %v338 = vpop.f32.mrb[0].mxu0
  %v339 = vpop.f32.mrb[0].mxu0
  %v340 = vadd.f32 %v88, %v339
  %v341 = vpop.f32.mrb[0].mxu0
  %342 = vdwg.mxu0
  %343 = vmatprep.subr.bf16.mxu0 0
  %344 = vmatpush1.bf16.msra.mxu0 %v254
  %345 = vmatprep.subr.bf16.mxu0 0
  %346 = vmatpush1.bf16.msra.mxu0 %v255
  %347 = vmatprep.subr.bf16.mxu0 0
  %348 = vmatpush1.bf16.msra.mxu0 %v256
  %349 = vmatprep.subr.bf16.mxu0 0
  %350 = vmatpush1.bf16.msra.mxu0 %v257
  %351 = vmatprep.subr.bf16.mxu0 0
  %352 = vmatpush1.bf16.msra.mxu0 %v258
  %353 = vmatprep.subr.bf16.mxu0 0
  %354 = vmatpush1.bf16.msra.mxu0 %v259
  %355 = vmatprep.subr.bf16.mxu0 0
  %356 = vmatpush1.bf16.msra.mxu0 %v260
  %357 = vmatprep.subr.bf16.mxu0 0
  %358 = vmatpush1.bf16.msra.mxu0 %v261
  %359 = vmatprep.subr.bf16.mxu0 0
  %360 = vmatpush1.bf16.msra.mxu0 %v262
  %361 = vmatprep.subr.bf16.mxu0 0
  %362 = vmatpush1.bf16.msra.mxu0 %v263
  %363 = vmatprep.subr.bf16.mxu0 0
  %364 = vmatpush1.bf16.msra.mxu0 %v264
  %365 = vmatprep.subr.bf16.mxu0 0
  %366 = vmatpush1.bf16.msra.mxu0 %v265
  %367 = vmatprep.subr.bf16.mxu0 0
  %368 = vmatpush1.bf16.msra.mxu0 %v266
  %369 = vmatprep.subr.bf16.mxu0 0
  %370 = vmatpush1.bf16.msra.mxu0 %v267
  %371 = vmatprep.subr.bf16.mxu0 0
  %372 = vmatpush1.bf16.msra.mxu0 %v268
  %373 = vmatprep.subr.bf16.mxu0 0
  %374 = vmatpush1.bf16.msra.mxu0 %v269
  %375 = vmatprep.mubr.bf16.mxu0 %v105
  %376 = vmatmul.mubr.bf16.gmra.mrb[0].mxu0 %v104
  %v377 = vpop.f32.mrb[0].mxu0
  %v378 = vadd.f32 %v337, %v377
  %v379 = vpop.f32.mrb[0].mxu0
  %v380 = vpop.f32.mrb[0].mxu0
  %v381 = vadd.f32 %v340, %v380
  %v382 = vpop.f32.mrb[0].mxu0
  %383 = vdwg.mxu0
  %384 = vst [vmem:[%s3] sm:$0xff] %v378
  %385 = vst [vmem:[%s3 + $0x8] sm:$0xff] %v381
  // Predicated region
  $region14: #{_lambda_.15} parent=0 // pred_check
    _
  $region15: #{_lambda_.15} parent=0 // pred_check_branch
    %387 = sbr.rel (0) target = $region17
  $region16: #{_lambda_.15} parent=0 // pred_region
    _
  $region17: #{_lambda_.15} parent=0 // pred_fallthru
    _
  // Predicated region
  $region18: #{_lambda_.15} parent=0 // pred_check
    _
  $region19: #{_lambda_.15} parent=0 // pred_check_branch
    %389 = sbr.rel (0) target = $region21
  $region20: #{_lambda_.15} parent=0 // pred_region
    _
  $region21: #{_lambda_.15} parent=0 // pred_fallthru
    _

</llo_original>
